<compile_context>
chip_gen: v5e
topology: v5e:2x2
jax: 0.10.0
libtpu: 0.0.40
codegen_flags: <defaults>
</compile_context>

<pallas_src>
from functools import partial

import numpy as np
import jax
import jax.numpy as jnp
from jax.experimental import pallas as pl
from jax.experimental.pallas import tpu as pltpu

# ----------------------------------------------------------------------------
# Fixed geometry implied by the module (fc1 expects 16*5*5 features).
# ----------------------------------------------------------------------------
H0, W0, C0 = 32, 32, 3                     # input
K1, C1 = 5, 6                              # conv1: 5x5, 3 -> 6
K2, C2 = 5, 16                             # conv2: 5x5, 6 -> 16
H1, W1 = H0 - K1 + 1, W0 - K1 + 1          # 28, 28  (conv1 out)
H1P, W1P = H1 // 2, W1 // 2                # 14, 14  (pool1 out)
H2, W2 = H1P - K2 + 1, W1P - K2 + 1        # 10, 10  (conv2 out)
H2P, W2P = H2 // 2, W2 // 2                # 5, 5    (pool2 out)

LANES = 128      # lane width of every activation / padded weight
S0 = 40          # per-image sublane slot in the stacked input (32 rows + 8 pad)
S1 = S0 // 2     # 20: per-image slot after conv1 y-pool (rows 0..13 valid)
S2 = S1 // 2     # 10: per-image slot after conv2 y-pool (rows 0..4 valid)


# ----------------------------------------------------------------------------
# Host-side one-time weight packing
# ----------------------------------------------------------------------------
def _pad2(a, rows, cols):
    out = np.zeros((rows, cols), np.float32)
    out[: a.shape[0], : a.shape[1]] = a
    return out


def _banded_conv_weight(w_oihw, w_in):
    """(Co,Ci,kh,kw) -> (kh, 128, 256) merged even|odd banded matrices.

    With the channels-minor input slab A[h, w*Ci+ci] = x[ci, h, w]:
        out[y, x*Co+co] = sum_i (A[y+i, :] @ B_i)[x*Co+co].
    The 2x2 pool's x-halving is folded in by splitting output columns into
    even/odd x; each half is zero-padded to 128 lanes and concatenated so one
    dot per kernel row yields [even | odd] and the x-pool is an aligned
    lane-slice max.  K is zero-padded to 128 rows.
    """
    co, ci, kh, kw = w_oihw.shape
    wo = w_in - kw + 1
    b = np.zeros((kh, w_in * ci, wo * co), np.float32)
    for i in range(kh):
        for x in range(wo):
            for j in range(kw):
                w = x + j
                b[i, w * ci:(w + 1) * ci, x * co:(x + 1) * co] = w_oihw[:, :, i, j].T
    b = b.reshape(kh, w_in * ci, wo, co)
    be = b[:, :, 0::2, :].reshape(kh, w_in * ci, (wo // 2) * co)
    bo = b[:, :, 1::2, :].reshape(kh, w_in * ci, (wo // 2) * co)
    out = np.zeros((kh, LANES, 2 * LANES), np.float32)
    out[:, :w_in * ci, :(wo // 2) * co] = be
    out[:, :w_in * ci, LANES:LANES + (wo // 2) * co] = bo
    return out


def pack_params(params, dtype=jnp.bfloat16):
    """Pre-pack all weights once: merged banded conv mats, padded FC mats."""
    f32 = np.float32
    c1w = np.asarray(params["conv1_w"], f32)
    c2w = np.asarray(params["conv2_w"], f32)
    w1 = _banded_conv_weight(c1w, W0)        # (5, 128, 256)
    w2 = _banded_conv_weight(c2w, W1P)       # (5, 128, 256)
    b1 = _pad2(np.tile(np.asarray(params["conv1_b"], f32), W1 // 2)[None, :], 1, LANES)
    b2 = _pad2(np.tile(np.asarray(params["conv2_b"], f32), W2 // 2)[None, :], 1, LANES)

    fc1w = np.asarray(params["fc1_w"], f32)                 # (l1, 400) cols (C,H,W)
    l1 = fc1w.shape[0]
    assert l1 <= LANES and np.asarray(params["fc2_w"]).shape[0] <= LANES
    # permute so pool2 row h (lanes w*16+c) hits the right weights
    fw1 = fc1w.reshape(l1, C2, H2P, W2P).transpose(2, 3, 1, 0).reshape(H2P, W2P * C2, l1)
    fw1m = np.zeros((H2P, LANES, LANES), f32)
    fw1m[:, :W2P * C2, :l1] = fw1
    fb1 = _pad2(np.asarray(params["fc1_b"], f32)[None, :], 1, LANES)
    fw2 = _pad2(np.asarray(params["fc2_w"], f32).T, LANES, LANES)
    fb2 = _pad2(np.asarray(params["fc2_b"], f32)[None, :], 1, LANES)
    fw3 = _pad2(np.asarray(params["fc3_w"], f32).T, LANES, LANES)
    fb3 = _pad2(np.asarray(params["fc3_b"], f32)[None, :], 1, LANES)

    return (jnp.asarray(w1, dtype), jnp.asarray(b1, jnp.float32),
            jnp.asarray(w2, dtype), jnp.asarray(b2, jnp.float32),
            jnp.asarray(fw1m, dtype), jnp.asarray(fb1, jnp.float32),
            jnp.asarray(fw2, dtype), jnp.asarray(fb2, jnp.float32),
            jnp.asarray(fw3, dtype), jnp.asarray(fb3, jnp.float32))


# ----------------------------------------------------------------------------
# The fused kernel: B_TILE images per grid step, everything VMEM-resident.
# ----------------------------------------------------------------------------
def _net_kernel(x_ref,
                w1_ref, b1_ref, w2_ref, b2_ref,
                fw1_ref, fb1_ref, fw2_ref, fb2_ref, fw3_ref, fb3_ref,
                o_ref, c1s, c2s, p2s):
    bt = o_ref.shape[0]                 # images per grid step (static)
    m0 = bt * S0 - 8                    # conv1 output rows (stacked, incl. garbage)
    m1 = bt * S1 - 8                    # conv2 output rows
    cdt = w1_ref.dtype                  # MXU compute dtype (bf16 fast path / f32 check)
    dot = lambda a, b: jnp.dot(a.astype(cdt), b, preferred_element_type=jnp.float32)

    # ---- conv1: banded matmuls, x-pool folded into merged even|odd weight ----
    acc = dot(x_ref[pl.ds(0, m0), :], w1_ref[0])
    for i in range(1, K1):
        acc = acc + dot(x_ref[pl.ds(i, m0), :], w1_ref[i])
    c1s[...] = jnp.maximum(jnp.maximum(acc[:, :LANES], acc[:, LANES:])
                           + b1_ref[...], 0.0)

    # ---- 2x2 pool, y half: stride-2 sublane reads + VPU max (off the MXU) ----
    p1 = jnp.maximum(c1s[pl.ds(0, m0 // 2, stride=2), :],
                     c1s[pl.ds(1, m0 // 2, stride=2), :])   # per-image slot S1 rows

    # ---- conv2 ---------------------------------------------------------------
    acc = dot(p1[0:m1, :], w2_ref[0])
    for i in range(1, K2):
        acc = acc + dot(p1[i:i + m1, :], w2_ref[i])
    c2s[...] = jnp.maximum(jnp.maximum(acc[:, :LANES], acc[:, LANES:])
                           + b2_ref[...], 0.0)

    p2s[...] = jnp.maximum(c2s[pl.ds(0, m1 // 2, stride=2), :],
                           c2s[pl.ds(1, m1 // 2, stride=2), :])  # slot S2 rows

    # ---- fc1: 5 batched row-group matmuls (M = bt), flatten order pre-packed --
    h = dot(p2s[pl.ds(0, bt, stride=S2), :], fw1_ref[0])
    for r in range(1, H2P):
        h = h + dot(p2s[pl.ds(r, bt, stride=S2), :], fw1_ref[r])
    h = jnp.maximum(h + fb1_ref[...], 0.0)

    # ---- fc2 + relu, fc3 (lane-dense 128-wide output block) ------------------
    h = jnp.maximum(dot(h, fw2_ref[...]) + fb2_ref[...], 0.0)
    o_ref[...] = (dot(h, fw3_ref[...]) + fb3_ref[...]).astype(o_ref.dtype)


@partial(jax.jit, static_argnames=("b_tile",))
def net_forward(packed, x_nchw, b_tile=8):
    assert b_tile % 8 == 0, "b_tile must be a multiple of 8"
    n = x_nchw.shape[0]
    n_pad = ((n + b_tile - 1) // b_tile) * b_tile

    # Layout glue only (could be hoisted upstream of the hot path): NCHW ->
    # channels-minor (H, W*C) slabs, pad lanes 96->128 and rows 32->S0, and
    # stack all images along the sublane axis for tile-aligned 2-D blocks.
    x = jnp.transpose(x_nchw, (0, 2, 3, 1)).reshape(n, H0, W0 * C0)
    x = jnp.pad(x, ((0, n_pad - n), (0, S0 - H0), (0, LANES - W0 * C0)))
    x = x.reshape(n_pad * S0, LANES)

    m0 = b_tile * S0 - 8
    m1 = b_tile * S1 - 8

    def wspec(a):
        return pl.BlockSpec(a.shape, lambda i: (0,) * a.ndim)

    out = pl.pallas_call(
        _net_kernel,
        out_shape=jax.ShapeDtypeStruct((n_pad, LANES), jnp.float32),
        grid=(n_pad // b_tile,),
        in_specs=[pl.BlockSpec((b_tile * S0, LANES), lambda i: (i, 0))]
                + [wspec(a) for a in packed],
        out_specs=pl.BlockSpec((b_tile, LANES), lambda i: (i, 0)),
        scratch_shapes=[pltpu.VMEM((m0, LANES), jnp.float32),
                        pltpu.VMEM((m1, LANES), jnp.float32),
                        pltpu.VMEM((m1 // 2, LANES), jnp.float32)],
        compiler_params=pltpu.CompilerParams(
            dimension_semantics=("parallel",)),
    )(x, *packed)
    return out[:n, :10]


# ----------------------------------------------------------------------------
# Pure-JAX reference (correctness check only)
# ----------------------------------------------------------------------------
def net_forward_ref(params, x):
    def conv(x, w, b):
        y = jax.lax.conv_general_dilated(
            x, w, window_strides=(1, 1), padding="VALID",
            dimension_numbers=("NCHW", "OIHW", "NCHW"))
        return y + b.reshape(1, -1, 1, 1)

    def pool(x):
        return jax.lax.reduce_window(
            x, -jnp.inf, jax.lax.max, (1, 1, 2, 2), (1, 1, 2, 2), "VALID")

    x = pool(jax.nn.relu(conv(x, params["conv1_w"], params["conv1_b"])))
    x = pool(jax.nn.relu(conv(x, params["conv2_w"], params["conv2_b"])))
    x = x.reshape(x.shape[0], C2 * H2P * W2P)
    x = jax.nn.relu(x @ params["fc1_w"].T + params["fc1_b"])
    x = jax.nn.relu(x @ params["fc2_w"].T + params["fc2_b"])
    return x @ params["fc3_w"].T + params["fc3_b"]


# ----------------------------------------------------------------------------
# Deterministic parameter init (PyTorch-style uniform(-1/sqrt(fan_in), +))
# ----------------------------------------------------------------------------
def init_params(key, l1=120, l2=84):
    def uni(key, shape, fan_in):
        bound = 1.0 / jnp.sqrt(fan_in)
        return jax.random.uniform(key, shape, jnp.float32, -bound, bound)

    keys = jax.random.split(key, 10)
    return {
        "conv1_w": uni(keys[0], (C1, C0, K1, K1), C0 * K1 * K1),
        "conv1_b": uni(keys[1], (C1,), C0 * K1 * K1),
        "conv2_w": uni(keys[2], (C2, C1, K2, K2), C1 * K2 * K2),
        "conv2_b": uni(keys[3], (C2,), C1 * K2 * K2),
        "fc1_w": uni(keys[4], (l1, C2 * H2P * W2P), C2 * H2P * W2P),
        "fc1_b": uni(keys[5], (l1,), C2 * H2P * W2P),
        "fc2_w": uni(keys[6], (l2, l1), l1),
        "fc2_b": uni(keys[7], (l2,), l1),
        "fc3_w": uni(keys[8], (10, l2), l2),
        "fc3_b": uni(keys[9], (10,), l2),
    }


if __name__ == "__main__":
    key = jax.random.PRNGKey(0)
    pkey, xkey = jax.random.split(key)
    params = init_params(pkey)
    # batch=16 with b_tile=8 -> grid of 2 (even, feeds both v7x TensorCores)
    x = jax.random.normal(xkey, (16, C0, H0, W0), jnp.float32)   # NCHW input

    ref = net_forward_ref(params, x)

    # Structural check with f32 weights (tight tolerance).
    out32 = jax.block_until_ready(net_forward(pack_params(params, jnp.float32), x))
    assert out32.shape == (16, 10), out32.shape
    err32 = float(jnp.max(jnp.abs(out32 - ref)))
    assert jnp.allclose(out32, ref, atol=2e-3, rtol=2e-3), err32

    # Fast path: bf16 weights/activations on the MXU (loose tolerance vs f32 ref).
    out16 = jax.block_until_ready(net_forward(pack_params(params, jnp.bfloat16), x))
    err16 = float(jnp.max(jnp.abs(out16 - ref)))
    assert jnp.allclose(out16, ref, atol=1e-1, rtol=1e-1), err16

    print("KERNEL_OK")
</pallas_src>

<mosaic_0001>
module attributes {stable_mosaic.version = 11 : i64} {
  func.func @_net_kernel(%arg0: i32, %arg1: memref<320x128xf32, #tpu.memory_space<vmem>>, %arg2: memref<5x128x256xf32, #tpu.memory_space<vmem>>, %arg3: memref<1x128xf32, #tpu.memory_space<vmem>>, %arg4: memref<5x128x256xf32, #tpu.memory_space<vmem>>, %arg5: memref<1x128xf32, #tpu.memory_space<vmem>>, %arg6: memref<5x128x128xf32, #tpu.memory_space<vmem>>, %arg7: memref<1x128xf32, #tpu.memory_space<vmem>>, %arg8: memref<128x128xf32, #tpu.memory_space<vmem>>, %arg9: memref<1x128xf32, #tpu.memory_space<vmem>>, %arg10: memref<128x128xf32, #tpu.memory_space<vmem>>, %arg11: memref<1x128xf32, #tpu.memory_space<vmem>>, %arg12: memref<8x128xf32, #tpu.memory_space<vmem>>, %arg13: memref<312x128xf32, #tpu.memory_space<vmem>>, %arg14: memref<152x128xf32, #tpu.memory_space<vmem>>, %arg15: memref<76x128xf32, #tpu.memory_space<vmem>>) attributes {dimension_semantics = [#tpu.dimension_semantics<parallel>], iteration_bounds = array<i64: 2>, scalar_prefetch = 0 : i64, scratch_operands = 3 : i64, tpu.core_type = #tpu.core_type<tc>, window_params = [{transform_indices = @transform_0, window_bounds = array<i64: 320, 128>}, {pipeline_mode = #tpu.pipeline_mode<synchronous>, transform_indices = @transform_1, window_bounds = array<i64: 5, 128, 256>}, {pipeline_mode = #tpu.pipeline_mode<synchronous>, transform_indices = @transform_2, window_bounds = array<i64: 1, 128>}, {pipeline_mode = #tpu.pipeline_mode<synchronous>, transform_indices = @transform_3, window_bounds = array<i64: 5, 128, 256>}, {pipeline_mode = #tpu.pipeline_mode<synchronous>, transform_indices = @transform_4, window_bounds = array<i64: 1, 128>}, {pipeline_mode = #tpu.pipeline_mode<synchronous>, transform_indices = @transform_5, window_bounds = array<i64: 5, 128, 128>}, {pipeline_mode = #tpu.pipeline_mode<synchronous>, transform_indices = @transform_6, window_bounds = array<i64: 1, 128>}, {pipeline_mode = #tpu.pipeline_mode<synchronous>, transform_indices = @transform_7, window_bounds = array<i64: 128, 128>}, {pipeline_mode = #tpu.pipeline_mode<synchronous>, transform_indices = @transform_8, window_bounds = array<i64: 1, 128>}, {pipeline_mode = #tpu.pipeline_mode<synchronous>, transform_indices = @transform_9, window_bounds = array<i64: 128, 128>}, {pipeline_mode = #tpu.pipeline_mode<synchronous>, transform_indices = @transform_10, window_bounds = array<i64: 1, 128>}, {transform_indices = @transform_11, window_bounds = array<i64: 8, 128>}]} {
    %c0 = arith.constant 0 : index
    %c0_0 = arith.constant 0 : index
    %0 = vector.load %arg1[%c0, %c0_0] : memref<320x128xf32, #tpu.memory_space<vmem>>, vector<312x128xf32>
    %c0_1 = arith.constant 0 : index
    %c0_2 = arith.constant 0 : index
    %c0_3 = arith.constant 0 : index
    %1 = vector.load %arg2[%c0_1, %c0_2, %c0_3] : memref<5x128x256xf32, #tpu.memory_space<vmem>>, vector<1x128x256xf32>
    %2 = vector.shape_cast %1 : vector<1x128x256xf32> to vector<128x256xf32>
    %cst = arith.constant dense<0.000000e+00> : vector<312x256xf32>
    %3 = tpu.matmul %0, %2, %cst {dimension_numbers = #tpu.dot_dimension_numbers<[1], [0], [0], [1], [0, 0, 1, 1], [], []>} : vector<312x128xf32>, vector<128x256xf32>, vector<312x256xf32> -> vector<312x256xf32>
    %c1 = arith.constant 1 : index
    %c0_4 = arith.constant 0 : index
    %4 = vector.load %arg1[%c1, %c0_4] : memref<320x128xf32, #tpu.memory_space<vmem>>, vector<312x128xf32>
    %c1_5 = arith.constant 1 : index
    %c0_6 = arith.constant 0 : index
    %c0_7 = arith.constant 0 : index
    %5 = vector.load %arg2[%c1_5, %c0_6, %c0_7] : memref<5x128x256xf32, #tpu.memory_space<vmem>>, vector<1x128x256xf32>
    %6 = vector.shape_cast %5 : vector<1x128x256xf32> to vector<128x256xf32>
    %cst_8 = arith.constant dense<0.000000e+00> : vector<312x256xf32>
    %7 = tpu.matmul %4, %6, %cst_8 {dimension_numbers = #tpu.dot_dimension_numbers<[1], [0], [0], [1], [0, 0, 1, 1], [], []>} : vector<312x128xf32>, vector<128x256xf32>, vector<312x256xf32> -> vector<312x256xf32>
    %8 = arith.addf %3, %7 : vector<312x256xf32>
    %c2 = arith.constant 2 : index
    %c0_9 = arith.constant 0 : index
    %9 = vector.load %arg1[%c2, %c0_9] : memref<320x128xf32, #tpu.memory_space<vmem>>, vector<312x128xf32>
    %c2_10 = arith.constant 2 : index
    %c0_11 = arith.constant 0 : index
    %c0_12 = arith.constant 0 : index
    %10 = vector.load %arg2[%c2_10, %c0_11, %c0_12] : memref<5x128x256xf32, #tpu.memory_space<vmem>>, vector<1x128x256xf32>
    %11 = vector.shape_cast %10 : vector<1x128x256xf32> to vector<128x256xf32>
    %cst_13 = arith.constant dense<0.000000e+00> : vector<312x256xf32>
    %12 = tpu.matmul %9, %11, %cst_13 {dimension_numbers = #tpu.dot_dimension_numbers<[1], [0], [0], [1], [0, 0, 1, 1], [], []>} : vector<312x128xf32>, vector<128x256xf32>, vector<312x256xf32> -> vector<312x256xf32>
    %13 = arith.addf %8, %12 : vector<312x256xf32>
    %c3 = arith.constant 3 : index
    %c0_14 = arith.constant 0 : index
    %14 = vector.load %arg1[%c3, %c0_14] : memref<320x128xf32, #tpu.memory_space<vmem>>, vector<312x128xf32>
    %c3_15 = arith.constant 3 : index
    %c0_16 = arith.constant 0 : index
    %c0_17 = arith.constant 0 : index
    %15 = vector.load %arg2[%c3_15, %c0_16, %c0_17] : memref<5x128x256xf32, #tpu.memory_space<vmem>>, vector<1x128x256xf32>
    %16 = vector.shape_cast %15 : vector<1x128x256xf32> to vector<128x256xf32>
    %cst_18 = arith.constant dense<0.000000e+00> : vector<312x256xf32>
    %17 = tpu.matmul %14, %16, %cst_18 {dimension_numbers = #tpu.dot_dimension_numbers<[1], [0], [0], [1], [0, 0, 1, 1], [], []>} : vector<312x128xf32>, vector<128x256xf32>, vector<312x256xf32> -> vector<312x256xf32>
    %18 = arith.addf %13, %17 : vector<312x256xf32>
    %c4 = arith.constant 4 : index
    %c0_19 = arith.constant 0 : index
    %19 = vector.load %arg1[%c4, %c0_19] : memref<320x128xf32, #tpu.memory_space<vmem>>, vector<312x128xf32>
    %c4_20 = arith.constant 4 : index
    %c0_21 = arith.constant 0 : index
    %c0_22 = arith.constant 0 : index
    %20 = vector.load %arg2[%c4_20, %c0_21, %c0_22] : memref<5x128x256xf32, #tpu.memory_space<vmem>>, vector<1x128x256xf32>
    %21 = vector.shape_cast %20 : vector<1x128x256xf32> to vector<128x256xf32>
    %cst_23 = arith.constant dense<0.000000e+00> : vector<312x256xf32>
    %22 = tpu.matmul %19, %21, %cst_23 {dimension_numbers = #tpu.dot_dimension_numbers<[1], [0], [0], [1], [0, 0, 1, 1], [], []>} : vector<312x128xf32>, vector<128x256xf32>, vector<312x256xf32> -> vector<312x256xf32>
    %23 = arith.addf %18, %22 : vector<312x256xf32>
    %24 = vector.extract_strided_slice %23 {offsets = [0, 0], sizes = [312, 128], strides = [1, 1]} : vector<312x256xf32> to vector<312x128xf32>
    %25 = vector.extract_strided_slice %23 {offsets = [0, 128], sizes = [312, 128], strides = [1, 1]} : vector<312x256xf32> to vector<312x128xf32>
    %26 = arith.maximumf %24, %25 : vector<312x128xf32>
    %c0_24 = arith.constant 0 : index
    %c0_25 = arith.constant 0 : index
    %27 = vector.load %arg3[%c0_24, %c0_25] : memref<1x128xf32, #tpu.memory_space<vmem>>, vector<1x128xf32>
    %28 = vector.broadcast %27 : vector<1x128xf32> to vector<312x128xf32>
    %29 = arith.addf %26, %28 : vector<312x128xf32>
    %cst_26 = arith.constant 0.000000e+00 : f32
    %30 = vector.broadcast %cst_26 : f32 to vector<312x128xf32>
    %31 = arith.maximumf %29, %30 : vector<312x128xf32>
    %c0_27 = arith.constant 0 : index
    %c0_28 = arith.constant 0 : index
    %32 = vector.load %arg13[%c0_27, %c0_28] : memref<312x128xf32, #tpu.memory_space<vmem>>, vector<312x128xf32>
    tpu.vector_store %arg13[%c0_27, %c0_28], %31 {strides = array<i32>} : memref<312x128xf32, #tpu.memory_space<vmem>>, vector<312x128xf32>,
    %c0_29 = arith.constant 0 : index
    %c0_30 = arith.constant 0 : index
    %33 = tpu.strided_load %arg13[%c0_29, %c0_30] {strides = array<i32: 2, 1>} : memref<312x128xf32, #tpu.memory_space<vmem>>, vector<156x128xf32>
    %c1_31 = arith.constant 1 : index
    %c0_32 = arith.constant 0 : index
    %34 = tpu.strided_load %arg13[%c1_31, %c0_32] {strides = array<i32: 2, 1>} : memref<312x128xf32, #tpu.memory_space<vmem>>, vector<156x128xf32>
    %35 = arith.maximumf %33, %34 : vector<156x128xf32>
    %36 = vector.extract_strided_slice %35 {offsets = [0, 0], sizes = [152, 128], strides = [1, 1]} : vector<156x128xf32> to vector<152x128xf32>
    %c0_33 = arith.constant 0 : index
    %c0_34 = arith.constant 0 : index
    %c0_35 = arith.constant 0 : index
    %37 = vector.load %arg4[%c0_33, %c0_34, %c0_35] : memref<5x128x256xf32, #tpu.memory_space<vmem>>, vector<1x128x256xf32>
    %38 = vector.shape_cast %37 : vector<1x128x256xf32> to vector<128x256xf32>
    %cst_36 = arith.constant dense<0.000000e+00> : vector<152x256xf32>
    %39 = tpu.matmul %36, %38, %cst_36 {dimension_numbers = #tpu.dot_dimension_numbers<[1], [0], [0], [1], [0, 0, 1, 1], [], []>} : vector<152x128xf32>, vector<128x256xf32>, vector<152x256xf32> -> vector<152x256xf32>
    %40 = vector.extract_strided_slice %35 {offsets = [1, 0], sizes = [152, 128], strides = [1, 1]} : vector<156x128xf32> to vector<152x128xf32>
    %c1_37 = arith.constant 1 : index
    %c0_38 = arith.constant 0 : index
    %c0_39 = arith.constant 0 : index
    %41 = vector.load %arg4[%c1_37, %c0_38, %c0_39] : memref<5x128x256xf32, #tpu.memory_space<vmem>>, vector<1x128x256xf32>
    %42 = vector.shape_cast %41 : vector<1x128x256xf32> to vector<128x256xf32>
    %cst_40 = arith.constant dense<0.000000e+00> : vector<152x256xf32>
    %43 = tpu.matmul %40, %42, %cst_40 {dimension_numbers = #tpu.dot_dimension_numbers<[1], [0], [0], [1], [0, 0, 1, 1], [], []>} : vector<152x128xf32>, vector<128x256xf32>, vector<152x256xf32> -> vector<152x256xf32>
    %44 = arith.addf %39, %43 : vector<152x256xf32>
    %45 = vector.extract_strided_slice %35 {offsets = [2, 0], sizes = [152, 128], strides = [1, 1]} : vector<156x128xf32> to vector<152x128xf32>
    %c2_41 = arith.constant 2 : index
    %c0_42 = arith.constant 0 : index
    %c0_43 = arith.constant 0 : index
    %46 = vector.load %arg4[%c2_41, %c0_42, %c0_43] : memref<5x128x256xf32, #tpu.memory_space<vmem>>, vector<1x128x256xf32>
    %47 = vector.shape_cast %46 : vector<1x128x256xf32> to vector<128x256xf32>
    %cst_44 = arith.constant dense<0.000000e+00> : vector<152x256xf32>
    %48 = tpu.matmul %45, %47, %cst_44 {dimension_numbers = #tpu.dot_dimension_numbers<[1], [0], [0], [1], [0, 0, 1, 1], [], []>} : vector<152x128xf32>, vector<128x256xf32>, vector<152x256xf32> -> vector<152x256xf32>
    %49 = arith.addf %44, %48 : vector<152x256xf32>
    %50 = vector.extract_strided_slice %35 {offsets = [3, 0], sizes = [152, 128], strides = [1, 1]} : vector<156x128xf32> to vector<152x128xf32>
    %c3_45 = arith.constant 3 : index
    %c0_46 = arith.constant 0 : index
    %c0_47 = arith.constant 0 : index
    %51 = vector.load %arg4[%c3_45, %c0_46, %c0_47] : memref<5x128x256xf32, #tpu.memory_space<vmem>>, vector<1x128x256xf32>
    %52 = vector.shape_cast %51 : vector<1x128x256xf32> to vector<128x256xf32>
    %cst_48 = arith.constant dense<0.000000e+00> : vector<152x256xf32>
    %53 = tpu.matmul %50, %52, %cst_48 {dimension_numbers = #tpu.dot_dimension_numbers<[1], [0], [0], [1], [0, 0, 1, 1], [], []>} : vector<152x128xf32>, vector<128x256xf32>, vector<152x256xf32> -> vector<152x256xf32>
    %54 = arith.addf %49, %53 : vector<152x256xf32>
    %55 = vector.extract_strided_slice %35 {offsets = [4, 0], sizes = [152, 128], strides = [1, 1]} : vector<156x128xf32> to vector<152x128xf32>
    %c4_49 = arith.constant 4 : index
    %c0_50 = arith.constant 0 : index
    %c0_51 = arith.constant 0 : index
    %56 = vector.load %arg4[%c4_49, %c0_50, %c0_51] : memref<5x128x256xf32, #tpu.memory_space<vmem>>, vector<1x128x256xf32>
    %57 = vector.shape_cast %56 : vector<1x128x256xf32> to vector<128x256xf32>
    %cst_52 = arith.constant dense<0.000000e+00> : vector<152x256xf32>
    %58 = tpu.matmul %55, %57, %cst_52 {dimension_numbers = #tpu.dot_dimension_numbers<[1], [0], [0], [1], [0, 0, 1, 1], [], []>} : vector<152x128xf32>, vector<128x256xf32>, vector<152x256xf32> -> vector<152x256xf32>
    %59 = arith.addf %54, %58 : vector<152x256xf32>
    %60 = vector.extract_strided_slice %59 {offsets = [0, 0], sizes = [152, 128], strides = [1, 1]} : vector<152x256xf32> to vector<152x128xf32>
    %61 = vector.extract_strided_slice %59 {offsets = [0, 128], sizes = [152, 128], strides = [1, 1]} : vector<152x256xf32> to vector<152x128xf32>
    %62 = arith.maximumf %60, %61 : vector<152x128xf32>
    %c0_53 = arith.constant 0 : index
    %c0_54 = arith.constant 0 : index
    %63 = vector.load %arg5[%c0_53, %c0_54] : memref<1x128xf32, #tpu.memory_space<vmem>>, vector<1x128xf32>
    %64 = vector.broadcast %63 : vector<1x128xf32> to vector<152x128xf32>
    %65 = arith.addf %62, %64 : vector<152x128xf32>
    %cst_55 = arith.constant 0.000000e+00 : f32
    %66 = vector.broadcast %cst_55 : f32 to vector<152x128xf32>
    %67 = arith.maximumf %65, %66 : vector<152x128xf32>
    %c0_56 = arith.constant 0 : index
    %c0_57 = arith.constant 0 : index
    %68 = vector.load %arg14[%c0_56, %c0_57] : memref<152x128xf32, #tpu.memory_space<vmem>>, vector<152x128xf32>
    tpu.vector_store %arg14[%c0_56, %c0_57], %67 {strides = array<i32>} : memref<152x128xf32, #tpu.memory_space<vmem>>, vector<152x128xf32>,
    %c0_58 = arith.constant 0 : index
    %c0_59 = arith.constant 0 : index
    %69 = tpu.strided_load %arg14[%c0_58, %c0_59] {strides = array<i32: 2, 1>} : memref<152x128xf32, #tpu.memory_space<vmem>>, vector<76x128xf32>
    %c1_60 = arith.constant 1 : index
    %c0_61 = arith.constant 0 : index
    %70 = tpu.strided_load %arg14[%c1_60, %c0_61] {strides = array<i32: 2, 1>} : memref<152x128xf32, #tpu.memory_space<vmem>>, vector<76x128xf32>
    %71 = arith.maximumf %69, %70 : vector<76x128xf32>
    %c0_62 = arith.constant 0 : index
    %c0_63 = arith.constant 0 : index
    %72 = vector.load %arg15[%c0_62, %c0_63] : memref<76x128xf32, #tpu.memory_space<vmem>>, vector<76x128xf32>
    tpu.vector_store %arg15[%c0_62, %c0_63], %71 {strides = array<i32>} : memref<76x128xf32, #tpu.memory_space<vmem>>, vector<76x128xf32>,
    %c0_64 = arith.constant 0 : index
    %c0_65 = arith.constant 0 : index
    %73 = tpu.strided_load %arg15[%c0_64, %c0_65] {strides = array<i32: 10, 1>} : memref<76x128xf32, #tpu.memory_space<vmem>>, vector<8x128xf32>
    %c0_66 = arith.constant 0 : index
    %c0_67 = arith.constant 0 : index
    %c0_68 = arith.constant 0 : index
    %74 = vector.load %arg6[%c0_66, %c0_67, %c0_68] : memref<5x128x128xf32, #tpu.memory_space<vmem>>, vector<1x128x128xf32>
    %75 = vector.shape_cast %74 : vector<1x128x128xf32> to vector<128x128xf32>
    %cst_69 = arith.constant dense<0.000000e+00> : vector<8x128xf32>
    %76 = tpu.matmul %73, %75, %cst_69 {dimension_numbers = #tpu.dot_dimension_numbers<[1], [0], [0], [1], [0, 0, 1, 1], [], []>} : vector<8x128xf32>, vector<128x128xf32>, vector<8x128xf32> -> vector<8x128xf32>
    %c1_70 = arith.constant 1 : index
    %c0_71 = arith.constant 0 : index
    %77 = tpu.strided_load %arg15[%c1_70, %c0_71] {strides = array<i32: 10, 1>} : memref<76x128xf32, #tpu.memory_space<vmem>>, vector<8x128xf32>
    %c1_72 = arith.constant 1 : index
    %c0_73 = arith.constant 0 : index
    %c0_74 = arith.constant 0 : index
    %78 = vector.load %arg6[%c1_72, %c0_73, %c0_74] : memref<5x128x128xf32, #tpu.memory_space<vmem>>, vector<1x128x128xf32>
    %79 = vector.shape_cast %78 : vector<1x128x128xf32> to vector<128x128xf32>
    %cst_75 = arith.constant dense<0.000000e+00> : vector<8x128xf32>
    %80 = tpu.matmul %77, %79, %cst_75 {dimension_numbers = #tpu.dot_dimension_numbers<[1], [0], [0], [1], [0, 0, 1, 1], [], []>} : vector<8x128xf32>, vector<128x128xf32>, vector<8x128xf32> -> vector<8x128xf32>
    %81 = arith.addf %76, %80 : vector<8x128xf32>
    %c2_76 = arith.constant 2 : index
    %c0_77 = arith.constant 0 : index
    %82 = tpu.strided_load %arg15[%c2_76, %c0_77] {strides = array<i32: 10, 1>} : memref<76x128xf32, #tpu.memory_space<vmem>>, vector<8x128xf32>
    %c2_78 = arith.constant 2 : index
    %c0_79 = arith.constant 0 : index
    %c0_80 = arith.constant 0 : index
    %83 = vector.load %arg6[%c2_78, %c0_79, %c0_80] : memref<5x128x128xf32, #tpu.memory_space<vmem>>, vector<1x128x128xf32>
    %84 = vector.shape_cast %83 : vector<1x128x128xf32> to vector<128x128xf32>
    %cst_81 = arith.constant dense<0.000000e+00> : vector<8x128xf32>
    %85 = tpu.matmul %82, %84, %cst_81 {dimension_numbers = #tpu.dot_dimension_numbers<[1], [0], [0], [1], [0, 0, 1, 1], [], []>} : vector<8x128xf32>, vector<128x128xf32>, vector<8x128xf32> -> vector<8x128xf32>
    %86 = arith.addf %81, %85 : vector<8x128xf32>
    %c3_82 = arith.constant 3 : index
    %c0_83 = arith.constant 0 : index
    %87 = tpu.strided_load %arg15[%c3_82, %c0_83] {strides = array<i32: 10, 1>} : memref<76x128xf32, #tpu.memory_space<vmem>>, vector<8x128xf32>
    %c3_84 = arith.constant 3 : index
    %c0_85 = arith.constant 0 : index
    %c0_86 = arith.constant 0 : index
    %88 = vector.load %arg6[%c3_84, %c0_85, %c0_86] : memref<5x128x128xf32, #tpu.memory_space<vmem>>, vector<1x128x128xf32>
    %89 = vector.shape_cast %88 : vector<1x128x128xf32> to vector<128x128xf32>
    %cst_87 = arith.constant dense<0.000000e+00> : vector<8x128xf32>
    %90 = tpu.matmul %87, %89, %cst_87 {dimension_numbers = #tpu.dot_dimension_numbers<[1], [0], [0], [1], [0, 0, 1, 1], [], []>} : vector<8x128xf32>, vector<128x128xf32>, vector<8x128xf32> -> vector<8x128xf32>
    %91 = arith.addf %86, %90 : vector<8x128xf32>
    %c4_88 = arith.constant 4 : index
    %c0_89 = arith.constant 0 : index
    %92 = tpu.strided_load %arg15[%c4_88, %c0_89] {strides = array<i32: 10, 1>} : memref<76x128xf32, #tpu.memory_space<vmem>>, vector<8x128xf32>
    %c4_90 = arith.constant 4 : index
    %c0_91 = arith.constant 0 : index
    %c0_92 = arith.constant 0 : index
    %93 = vector.load %arg6[%c4_90, %c0_91, %c0_92] : memref<5x128x128xf32, #tpu.memory_space<vmem>>, vector<1x128x128xf32>
    %94 = vector.shape_cast %93 : vector<1x128x128xf32> to vector<128x128xf32>
    %cst_93 = arith.constant dense<0.000000e+00> : vector<8x128xf32>
    %95 = tpu.matmul %92, %94, %cst_93 {dimension_numbers = #tpu.dot_dimension_numbers<[1], [0], [0], [1], [0, 0, 1, 1], [], []>} : vector<8x128xf32>, vector<128x128xf32>, vector<8x128xf32> -> vector<8x128xf32>
    %96 = arith.addf %91, %95 : vector<8x128xf32>
    %c0_94 = arith.constant 0 : index
    %c0_95 = arith.constant 0 : index
    %97 = vector.load %arg7[%c0_94, %c0_95] : memref<1x128xf32, #tpu.memory_space<vmem>>, vector<1x128xf32>
    %98 = vector.broadcast %97 : vector<1x128xf32> to vector<8x128xf32>
    %99 = arith.addf %96, %98 : vector<8x128xf32>
    %cst_96 = arith.constant 0.000000e+00 : f32
    %100 = vector.broadcast %cst_96 : f32 to vector<8x128xf32>
    %101 = arith.maximumf %99, %100 : vector<8x128xf32>
    %c0_97 = arith.constant 0 : index
    %c0_98 = arith.constant 0 : index
    %102 = vector.load %arg8[%c0_97, %c0_98] : memref<128x128xf32, #tpu.memory_space<vmem>>, vector<128x128xf32>
    %cst_99 = arith.constant dense<0.000000e+00> : vector<8x128xf32>
    %103 = tpu.matmul %101, %102, %cst_99 {dimension_numbers = #tpu.dot_dimension_numbers<[1], [0], [0], [1], [0, 0, 1, 1], [], []>} : vector<8x128xf32>, vector<128x128xf32>, vector<8x128xf32> -> vector<8x128xf32>
    %c0_100 = arith.constant 0 : index
    %c0_101 = arith.constant 0 : index
    %104 = vector.load %arg9[%c0_100, %c0_101] : memref<1x128xf32, #tpu.memory_space<vmem>>, vector<1x128xf32>
    %105 = vector.broadcast %104 : vector<1x128xf32> to vector<8x128xf32>
    %106 = arith.addf %103, %105 : vector<8x128xf32>
    %cst_102 = arith.constant 0.000000e+00 : f32
    %107 = vector.broadcast %cst_102 : f32 to vector<8x128xf32>
    %108 = arith.maximumf %106, %107 : vector<8x128xf32>
    %c0_103 = arith.constant 0 : index
    %c0_104 = arith.constant 0 : index
    %109 = vector.load %arg10[%c0_103, %c0_104] : memref<128x128xf32, #tpu.memory_space<vmem>>, vector<128x128xf32>
    %cst_105 = arith.constant dense<0.000000e+00> : vector<8x128xf32>
    %110 = tpu.matmul %108, %109, %cst_105 {dimension_numbers = #tpu.dot_dimension_numbers<[1], [0], [0], [1], [0, 0, 1, 1], [], []>} : vector<8x128xf32>, vector<128x128xf32>, vector<8x128xf32> -> vector<8x128xf32>
    %c0_106 = arith.constant 0 : index
    %c0_107 = arith.constant 0 : index
    %111 = vector.load %arg11[%c0_106, %c0_107] : memref<1x128xf32, #tpu.memory_space<vmem>>, vector<1x128xf32>
    %112 = vector.broadcast %111 : vector<1x128xf32> to vector<8x128xf32>
    %113 = arith.addf %110, %112 : vector<8x128xf32>
    %c0_108 = arith.constant 0 : index
    %c0_109 = arith.constant 0 : index
    %114 = vector.load %arg12[%c0_108, %c0_109] : memref<8x128xf32, #tpu.memory_space<vmem>>, vector<8x128xf32>
    tpu.vector_store %arg12[%c0_108, %c0_109], %113 {strides = array<i32>} : memref<8x128xf32, #tpu.memory_space<vmem>>, vector<8x128xf32>,
    return
  }
  func.func @transform_0(%arg0: i32) -> (i32, i32) {
    %c0_i32 = arith.constant 0 : i32
    %c0_i32_0 = arith.constant 0 : i32
    return %arg0, %c0_i32 : i32, i32
  }
  func.func @transform_1(%arg0: i32) -> (i32, i32, i32) {
    %c0_i32 = arith.constant 0 : i32
    %c0_i32_0 = arith.constant 0 : i32
    %c0_i32_1 = arith.constant 0 : i32
    %c0_i32_2 = arith.constant 0 : i32
    return %c0_i32, %c0_i32_0, %c0_i32_1 : i32, i32, i32
  }
  func.func @transform_2(%arg0: i32) -> (i32, i32) {
    %c0_i32 = arith.constant 0 : i32
    %c0_i32_0 = arith.constant 0 : i32
    %c0_i32_1 = arith.constant 0 : i32
    return %c0_i32, %c0_i32_0 : i32, i32
  }
  func.func @transform_3(%arg0: i32) -> (i32, i32, i32) {
    %c0_i32 = arith.constant 0 : i32
    %c0_i32_0 = arith.constant 0 : i32
    %c0_i32_1 = arith.constant 0 : i32
    %c0_i32_2 = arith.constant 0 : i32
    return %c0_i32, %c0_i32_0, %c0_i32_1 : i32, i32, i32
  }
  func.func @transform_4(%arg0: i32) -> (i32, i32) {
    %c0_i32 = arith.constant 0 : i32
    %c0_i32_0 = arith.constant 0 : i32
    %c0_i32_1 = arith.constant 0 : i32
    return %c0_i32, %c0_i32_0 : i32, i32
  }
  func.func @transform_5(%arg0: i32) -> (i32, i32, i32) {
    %c0_i32 = arith.constant 0 : i32
    %c0_i32_0 = arith.constant 0 : i32
    %c0_i32_1 = arith.constant 0 : i32
    %c0_i32_2 = arith.constant 0 : i32
    return %c0_i32, %c0_i32_0, %c0_i32_1 : i32, i32, i32
  }
  func.func @transform_6(%arg0: i32) -> (i32, i32) {
    %c0_i32 = arith.constant 0 : i32
    %c0_i32_0 = arith.constant 0 : i32
    %c0_i32_1 = arith.constant 0 : i32
    return %c0_i32, %c0_i32_0 : i32, i32
  }
  func.func @transform_7(%arg0: i32) -> (i32, i32) {
    %c0_i32 = arith.constant 0 : i32
    %c0_i32_0 = arith.constant 0 : i32
    %c0_i32_1 = arith.constant 0 : i32
    return %c0_i32, %c0_i32_0 : i32, i32
  }
  func.func @transform_8(%arg0: i32) -> (i32, i32) {
    %c0_i32 = arith.constant 0 : i32
    %c0_i32_0 = arith.constant 0 : i32
    %c0_i32_1 = arith.constant 0 : i32
    return %c0_i32, %c0_i32_0 : i32, i32
  }
  func.func @transform_9(%arg0: i32) -> (i32, i32) {
    %c0_i32 = arith.constant 0 : i32
    %c0_i32_0 = arith.constant 0 : i32
    %c0_i32_1 = arith.constant 0 : i32
    return %c0_i32, %c0_i32_0 : i32, i32
  }
  func.func @transform_10(%arg0: i32) -> (i32, i32) {
    %c0_i32 = arith.constant 0 : i32
    %c0_i32_0 = arith.constant 0 : i32
    %c0_i32_1 = arith.constant 0 : i32
    return %c0_i32, %c0_i32_0 : i32, i32
  }
  func.func @transform_11(%arg0: i32) -> (i32, i32) {
    %c0_i32 = arith.constant 0 : i32
    %c0_i32_0 = arith.constant 0 : i32
    return %arg0, %c0_i32 : i32, i32
  }
}

</mosaic_0001>

<llo_original>
// kernel: net_forward.1
$region0: #{net_forward.1}
  #allocation0 [shape = 'u32[]', space=smem, size = 0x4, offset = 0x4, fixed_abs, tag = 'smem constant byte address 0x4 - core index']
  #allocation1 [shape = 'u32[72,128]{1,0:T(1,128)}', space=vmem, size = 0x9000, scoped, tag = 'internal scratch']
  #allocation2 [shape = 'f32[312,128]{1,0:T(8,128)}', space=vmem, size = 0x27000, scoped, tag = 'scratch operand']
  #allocation3 [shape = 'f32[152,128]{1,0:T(8,128)}', space=vmem, size = 0x13000, scoped, tag = 'scratch operand']
  #allocation4 [shape = 'f32[76,128]{1,0:T(8,128)}', space=vmem, size = 0xa000, scoped, tag = 'scratch operand']
  %s0 = inlined_call_operand.vmem [shape: f32[640,128], index: 0, kind: input, shape index: {}]
  %s1 = inlined_call_operand.vmem [shape: f32[5,128,256], index: 1, kind: input, shape index: {}]
  %s2 = inlined_call_operand.vmem [shape: f32[1,128], index: 2, kind: input, shape index: {}]
  %s3 = inlined_call_operand.vmem [shape: f32[5,128,256], index: 3, kind: input, shape index: {}]
  %s4 = inlined_call_operand.vmem [shape: f32[1,128], index: 4, kind: input, shape index: {}]
  %s5 = inlined_call_operand.vmem [shape: f32[5,128,128], index: 5, kind: input, shape index: {}]
  %s6 = inlined_call_operand.vmem [shape: f32[1,128], index: 6, kind: input, shape index: {}]
  %s7 = inlined_call_operand.vmem [shape: f32[128,128], index: 7, kind: input, shape index: {}]
  %s8 = inlined_call_operand.vmem [shape: f32[1,128], index: 8, kind: input, shape index: {}]
  %s9 = inlined_call_operand.vmem [shape: f32[128,128], index: 9, kind: input, shape index: {}]
  %s10 = inlined_call_operand.vmem [shape: f32[1,128], index: 10, kind: input, shape index: {}]
  %s11 = inlined_call_operand.hbm [shape: f32[16,128], index: 11, kind: output, shape index: {}]
  %s12 = sld [smem:[#allocation0]]
  $region77: #{net_forward.1} parent=0
    _
  %s14 = ssub.s32 1, %s12
  %s15 = scalar_select 0, %s14, %s12
  $region1: #{net_forward.1} parent=0
    #allocation5 [shape = 'u8[8192]{0}', space=vmem, size = 0x2000, scoped, tag = 'output window, operand 0']
    #allocation6 [shape = 's32[2]{0}', space=sflag, size = 0x8, scoped, tag = 'scoped memory for net_forward.1']
    %16 = vsyncpa [#allocation6], 0
    %s17 = scalar_lea.sflag [#allocation6], 1
    %18 = vsyncpa %s17, 0
    loop: start=0, step=1, limit=4
    $region2: #{net_forward.1} parent=1 // loop_pre_header
      _
    $region3: #{net_forward.1} parent=1 // loop_header
      %s20 = sphi 0, %s24
      %p21 = scmp.ge.s32.totalorder %s20, 4
      %s30 = sphi 0, %s32
      %s33 = sphi 0, %s30
      %s34 = sphi 0, %s33
      %s50 = sphi 0, %s34
      %s54 = sphi 0, %s54
      %s56 = sphi 0, %s54
      %s57 = sphi 0, %s56
      %s71 = sphi 0, %s57
      %s75 = sphi 0, %s75
      %s77 = sphi 0, %s75
      %s78 = sphi 0, %s77
      %s92 = sphi 0, %s78
      %s96 = sphi 0, %s96
      %s98 = sphi 0, %s96
      %s99 = sphi 0, %s98
      %s113 = sphi 0, %s99
      %s117 = sphi 0, %s117
      %s119 = sphi 0, %s117
      %s120 = sphi 0, %s119
      %s134 = sphi 0, %s120
      %s138 = sphi 0, %s138
      %s140 = sphi 0, %s138
      %s141 = sphi 0, %s140
      %s155 = sphi 0, %s141
      %s159 = sphi 0, %s159
      %s161 = sphi 0, %s159
      %s162 = sphi 0, %s161
      %s176 = sphi 0, %s162
      %s180 = sphi 0, %s180
      %s182 = sphi 0, %s180
      %s183 = sphi 0, %s182
      %s197 = sphi 0, %s183
      %s201 = sphi 0, %s201
      %s203 = sphi 0, %s201
      %s204 = sphi 0, %s203
      %s218 = sphi 0, %s204
      %s222 = sphi 0, %s222
      %s224 = sphi 0, %s222
      %s225 = sphi 0, %s224
      %s239 = sphi 0, %s225
      %s243 = sphi 0, %s243
      %s245 = sphi 0, %s243
      %s246 = sphi 0, %s245
      %s260 = sphi 0, %s246
      %s266 = sphi 0, %s268
      %s269 = sphi 0, %s266
      %s270 = sphi 0, %s269
      %s286 = sphi 0, %s270
    $region4: #{net_forward.1} parent=1 // loop_header_branch
      %23 = sbr.rel (%p21) target = $region8
    $region5: #{net_forward.1} parent=1 // loop_body
      %s25 = ssub.s32 %s20, 1
      %s26 = ssub.s32 %s20, 2
      %s27 = sadd.s32 %s20, 1
      %s28 = ssub.s32 %s20, %s27
      %p29 = scmp.eq.s32.totalorder %s28, 0
      %s31 = sadd.s32 %s30, 1
      %s32 = scalar_select %p29, %s30, %s31
      %p35 = pneg %p29
      %p36 = scmp.eq.s32.totalorder %s20, 1
      %p37 = por %p35, %p36
      %p38 = scmp.ne.s32.totalorder %s30, %s33
      %p39 = scmp.eq.s32.totalorder %s20, 0
      %p40 = por %p38, %p39
      %p41 = scmp.ne.s32.totalorder %s30, %s33
      %p42 = scmp.eq.s32.totalorder %s25, 1
      %p43 = por %p41, %p42
      %p44 = scmp.ne.s32.totalorder %s33, %s34
      %p45 = scmp.eq.s32.totalorder %s25, 0
      %p46 = por %p44, %p45
      %p47 = scmp.ne.s32.totalorder %s33, %s34
      %p48 = scmp.eq.s32.totalorder %s26, 1
      %p49 = por %p47, %p48
      %p51 = scmp.ne.s32.totalorder %s34, %s50
      %p52 = scmp.eq.s32.totalorder %s26, 0
      %p53 = por %p51, %p52
      %s55 = sadd.s32 %s54, 1
      %p58 = scmp.eq.s32.totalorder %s20, 1
      %p59 = scmp.ne.s32.totalorder %s54, %s56
      %p60 = scmp.eq.s32.totalorder %s20, 0
      %p61 = por %p59, %p60
      %p62 = scmp.ne.s32.totalorder %s54, %s56
      %p63 = scmp.eq.s32.totalorder %s25, 1
      %p64 = por %p62, %p63
      %p65 = scmp.ne.s32.totalorder %s56, %s57
      %p66 = scmp.eq.s32.totalorder %s25, 0
      %p67 = por %p65, %p66
      %p68 = scmp.ne.s32.totalorder %s56, %s57
      %p69 = scmp.eq.s32.totalorder %s26, 1
      %p70 = por %p68, %p69
      %p72 = scmp.ne.s32.totalorder %s57, %s71
      %p73 = scmp.eq.s32.totalorder %s26, 0
      %p74 = por %p72, %p73
      %s76 = sadd.s32 %s75, 1
      %p79 = scmp.eq.s32.totalorder %s20, 1
      %p80 = scmp.ne.s32.totalorder %s75, %s77
      %p81 = scmp.eq.s32.totalorder %s20, 0
      %p82 = por %p80, %p81
      %p83 = scmp.ne.s32.totalorder %s75, %s77
      %p84 = scmp.eq.s32.totalorder %s25, 1
      %p85 = por %p83, %p84
      %p86 = scmp.ne.s32.totalorder %s77, %s78
      %p87 = scmp.eq.s32.totalorder %s25, 0
      %p88 = por %p86, %p87
      %p89 = scmp.ne.s32.totalorder %s77, %s78
      %p90 = scmp.eq.s32.totalorder %s26, 1
      %p91 = por %p89, %p90
      %p93 = scmp.ne.s32.totalorder %s78, %s92
      %p94 = scmp.eq.s32.totalorder %s26, 0
      %p95 = por %p93, %p94
      %s97 = sadd.s32 %s96, 1
      %p100 = scmp.eq.s32.totalorder %s20, 1
      %p101 = scmp.ne.s32.totalorder %s96, %s98
      %p102 = scmp.eq.s32.totalorder %s20, 0
      %p103 = por %p101, %p102
      %p104 = scmp.ne.s32.totalorder %s96, %s98
      %p105 = scmp.eq.s32.totalorder %s25, 1
      %p106 = por %p104, %p105
      %p107 = scmp.ne.s32.totalorder %s98, %s99
      %p108 = scmp.eq.s32.totalorder %s25, 0
      %p109 = por %p107, %p108
      %p110 = scmp.ne.s32.totalorder %s98, %s99
      %p111 = scmp.eq.s32.totalorder %s26, 1
      %p112 = por %p110, %p111
      %p114 = scmp.ne.s32.totalorder %s99, %s113
      %p115 = scmp.eq.s32.totalorder %s26, 0
      %p116 = por %p114, %p115
      %s118 = sadd.s32 %s117, 1
      %p121 = scmp.eq.s32.totalorder %s20, 1
      %p122 = scmp.ne.s32.totalorder %s117, %s119
      %p123 = scmp.eq.s32.totalorder %s20, 0
      %p124 = por %p122, %p123
      %p125 = scmp.ne.s32.totalorder %s117, %s119
      %p126 = scmp.eq.s32.totalorder %s25, 1
      %p127 = por %p125, %p126
      %p128 = scmp.ne.s32.totalorder %s119, %s120
      %p129 = scmp.eq.s32.totalorder %s25, 0
      %p130 = por %p128, %p129
      %p131 = scmp.ne.s32.totalorder %s119, %s120
      %p132 = scmp.eq.s32.totalorder %s26, 1
      %p133 = por %p131, %p132
      %p135 = scmp.ne.s32.totalorder %s120, %s134
      %p136 = scmp.eq.s32.totalorder %s26, 0
      %p137 = por %p135, %p136
      %s139 = sadd.s32 %s138, 1
      %p142 = scmp.eq.s32.totalorder %s20, 1
      %p143 = scmp.ne.s32.totalorder %s138, %s140
      %p144 = scmp.eq.s32.totalorder %s20, 0
      %p145 = por %p143, %p144
      %p146 = scmp.ne.s32.totalorder %s138, %s140
      %p147 = scmp.eq.s32.totalorder %s25, 1
      %p148 = por %p146, %p147
      %p149 = scmp.ne.s32.totalorder %s140, %s141
      %p150 = scmp.eq.s32.totalorder %s25, 0
      %p151 = por %p149, %p150
      %p152 = scmp.ne.s32.totalorder %s140, %s141
      %p153 = scmp.eq.s32.totalorder %s26, 1
      %p154 = por %p152, %p153
      %p156 = scmp.ne.s32.totalorder %s141, %s155
      %p157 = scmp.eq.s32.totalorder %s26, 0
      %p158 = por %p156, %p157
      %s160 = sadd.s32 %s159, 1
      %p163 = scmp.eq.s32.totalorder %s20, 1
      %p164 = scmp.ne.s32.totalorder %s159, %s161
      %p165 = scmp.eq.s32.totalorder %s20, 0
      %p166 = por %p164, %p165
      %p167 = scmp.ne.s32.totalorder %s159, %s161
      %p168 = scmp.eq.s32.totalorder %s25, 1
      %p169 = por %p167, %p168
      %p170 = scmp.ne.s32.totalorder %s161, %s162
      %p171 = scmp.eq.s32.totalorder %s25, 0
      %p172 = por %p170, %p171
      %p173 = scmp.ne.s32.totalorder %s161, %s162
      %p174 = scmp.eq.s32.totalorder %s26, 1
      %p175 = por %p173, %p174
      %p177 = scmp.ne.s32.totalorder %s162, %s176
      %p178 = scmp.eq.s32.totalorder %s26, 0
      %p179 = por %p177, %p178
      %s181 = sadd.s32 %s180, 1
      %p184 = scmp.eq.s32.totalorder %s20, 1
      %p185 = scmp.ne.s32.totalorder %s180, %s182
      %p186 = scmp.eq.s32.totalorder %s20, 0
      %p187 = por %p185, %p186
      %p188 = scmp.ne.s32.totalorder %s180, %s182
      %p189 = scmp.eq.s32.totalorder %s25, 1
      %p190 = por %p188, %p189
      %p191 = scmp.ne.s32.totalorder %s182, %s183
      %p192 = scmp.eq.s32.totalorder %s25, 0
      %p193 = por %p191, %p192
      %p194 = scmp.ne.s32.totalorder %s182, %s183
      %p195 = scmp.eq.s32.totalorder %s26, 1
      %p196 = por %p194, %p195
      %p198 = scmp.ne.s32.totalorder %s183, %s197
      %p199 = scmp.eq.s32.totalorder %s26, 0
      %p200 = por %p198, %p199
      %s202 = sadd.s32 %s201, 1
      %p205 = scmp.eq.s32.totalorder %s20, 1
      %p206 = scmp.ne.s32.totalorder %s201, %s203
      %p207 = scmp.eq.s32.totalorder %s20, 0
      %p208 = por %p206, %p207
      %p209 = scmp.ne.s32.totalorder %s201, %s203
      %p210 = scmp.eq.s32.totalorder %s25, 1
      %p211 = por %p209, %p210
      %p212 = scmp.ne.s32.totalorder %s203, %s204
      %p213 = scmp.eq.s32.totalorder %s25, 0
      %p214 = por %p212, %p213
      %p215 = scmp.ne.s32.totalorder %s203, %s204
      %p216 = scmp.eq.s32.totalorder %s26, 1
      %p217 = por %p215, %p216
      %p219 = scmp.ne.s32.totalorder %s204, %s218
      %p220 = scmp.eq.s32.totalorder %s26, 0
      %p221 = por %p219, %p220
      %s223 = sadd.s32 %s222, 1
      %p226 = scmp.eq.s32.totalorder %s20, 1
      %p227 = scmp.ne.s32.totalorder %s222, %s224
      %p228 = scmp.eq.s32.totalorder %s20, 0
      %p229 = por %p227, %p228
      %p230 = scmp.ne.s32.totalorder %s222, %s224
      %p231 = scmp.eq.s32.totalorder %s25, 1
      %p232 = por %p230, %p231
      %p233 = scmp.ne.s32.totalorder %s224, %s225
      %p234 = scmp.eq.s32.totalorder %s25, 0
      %p235 = por %p233, %p234
      %p236 = scmp.ne.s32.totalorder %s224, %s225
      %p237 = scmp.eq.s32.totalorder %s26, 1
      %p238 = por %p236, %p237
      %p240 = scmp.ne.s32.totalorder %s225, %s239
      %p241 = scmp.eq.s32.totalorder %s26, 0
      %p242 = por %p240, %p241
      %s244 = sadd.s32 %s243, 1
      %p247 = scmp.eq.s32.totalorder %s20, 1
      %p248 = scmp.ne.s32.totalorder %s243, %s245
      %p249 = scmp.eq.s32.totalorder %s20, 0
      %p250 = por %p248, %p249
      %p251 = scmp.ne.s32.totalorder %s243, %s245
      %p252 = scmp.eq.s32.totalorder %s25, 1
      %p253 = por %p251, %p252
      %p254 = scmp.ne.s32.totalorder %s245, %s246
      %p255 = scmp.eq.s32.totalorder %s25, 0
      %p256 = por %p254, %p255
      %p257 = scmp.ne.s32.totalorder %s245, %s246
      %p258 = scmp.eq.s32.totalorder %s26, 1
      %p259 = por %p257, %p258
      %p261 = scmp.ne.s32.totalorder %s246, %s260
      %p262 = scmp.eq.s32.totalorder %s26, 0
      %p263 = por %p261, %p262
      %s264 = ssub.s32 %s20, %s27
      %p265 = scmp.eq.s32.totalorder %s264, 0
      %s267 = sadd.s32 %s266, 1
      %s268 = scalar_select %p265, %s266, %s267
      %p271 = pneg %p265
      %p272 = scmp.eq.s32.totalorder %s20, 1
      %p273 = por %p271, %p272
      %p274 = scmp.ne.s32.totalorder %s266, %s269
      %p275 = scmp.eq.s32.totalorder %s20, 0
      %p276 = por %p274, %p275
      %p277 = scmp.ne.s32.totalorder %s266, %s269
      %p278 = scmp.eq.s32.totalorder %s25, 1
      %p279 = por %p277, %p278
      %p280 = scmp.ne.s32.totalorder %s269, %s270
      %p281 = scmp.eq.s32.totalorder %s25, 0
      %p282 = por %p280, %p281
      %p283 = scmp.ne.s32.totalorder %s269, %s270
      %p284 = scmp.eq.s32.totalorder %s26, 1
      %p285 = por %p283, %p284
      %p287 = scmp.ne.s32.totalorder %s270, %s286
      %p288 = scmp.eq.s32.totalorder %s26, 0
      %p289 = por %p287, %p288
      %p290 = scmp.le.s32.totalorder 1, %s20
      %p291 = scmp.lt.s32.totalorder %s20, 3
      %p292 = pnand %p290, %p291
      %p293 = pneg %p292
      // Predicated region
      $region9: #{net_forward.1} parent=5 // pred_check
        _
      $region10: #{net_forward.1} parent=5 // pred_check_branch
        %295 = sbr.rel (%p292) target = $region12
      $region11: #{net_forward.1} parent=5 // pred_region
        %s296 = ssub.s32 %s20, 1
        // Predicated region
        $region13: #{net_forward.1} parent=11 // pred_check
          %p297 = pneg %p67
        $region14: #{net_forward.1} parent=11 // pred_check_branch
          %299 = sbr.rel (%p297) target = $region16
        $region15: #{net_forward.1} parent=11 // pred_region
          _
        $region16: #{net_forward.1} parent=11 // pred_fallthru
          _
        // Predicated region
        $region17: #{net_forward.1} parent=11 // pred_check
          %p300 = pneg %p88
        $region18: #{net_forward.1} parent=11 // pred_check_branch
          %302 = sbr.rel (%p300) target = $region20
        $region19: #{net_forward.1} parent=11 // pred_region
          _
        $region20: #{net_forward.1} parent=11 // pred_fallthru
          _
        // Predicated region
        $region21: #{net_forward.1} parent=11 // pred_check
          %p303 = pneg %p109
        $region22: #{net_forward.1} parent=11 // pred_check_branch
          %305 = sbr.rel (%p303) target = $region24
        $region23: #{net_forward.1} parent=11 // pred_region
          _
        $region24: #{net_forward.1} parent=11 // pred_fallthru
          _
        // Predicated region
        $region25: #{net_forward.1} parent=11 // pred_check
          %p306 = pneg %p130
        $region26: #{net_forward.1} parent=11 // pred_check_branch
          %308 = sbr.rel (%p306) target = $region28
        $region27: #{net_forward.1} parent=11 // pred_region
          _
        $region28: #{net_forward.1} parent=11 // pred_fallthru
          _
        // Predicated region
        $region29: #{net_forward.1} parent=11 // pred_check
          %p309 = pneg %p151
        $region30: #{net_forward.1} parent=11 // pred_check_branch
          %311 = sbr.rel (%p309) target = $region32
        $region31: #{net_forward.1} parent=11 // pred_region
          _
        $region32: #{net_forward.1} parent=11 // pred_fallthru
          _
        // Predicated region
        $region33: #{net_forward.1} parent=11 // pred_check
          %p312 = pneg %p172
        $region34: #{net_forward.1} parent=11 // pred_check_branch
          %314 = sbr.rel (%p312) target = $region36
        $region35: #{net_forward.1} parent=11 // pred_region
          _
        $region36: #{net_forward.1} parent=11 // pred_fallthru
          _
        // Predicated region
        $region37: #{net_forward.1} parent=11 // pred_check
          %p315 = pneg %p193
        $region38: #{net_forward.1} parent=11 // pred_check_branch
          %317 = sbr.rel (%p315) target = $region40
        $region39: #{net_forward.1} parent=11 // pred_region
          _
        $region40: #{net_forward.1} parent=11 // pred_fallthru
          _
        // Predicated region
        $region41: #{net_forward.1} parent=11 // pred_check
          %p318 = pneg %p214
        $region42: #{net_forward.1} parent=11 // pred_check_branch
          %320 = sbr.rel (%p318) target = $region44
        $region43: #{net_forward.1} parent=11 // pred_region
          _
        $region44: #{net_forward.1} parent=11 // pred_fallthru
          _
        // Predicated region
        $region45: #{net_forward.1} parent=11 // pred_check
          %p321 = pneg %p235
        $region46: #{net_forward.1} parent=11 // pred_check_branch
          %323 = sbr.rel (%p321) target = $region48
        $region47: #{net_forward.1} parent=11 // pred_region
          _
        $region48: #{net_forward.1} parent=11 // pred_fallthru
          _
        // Predicated region
        $region49: #{net_forward.1} parent=11 // pred_check
          %p324 = pneg %p256
        $region50: #{net_forward.1} parent=11 // pred_check_branch
          %326 = sbr.rel (%p324) target = $region52
        $region51: #{net_forward.1} parent=11 // pred_region
          _
        $region52: #{net_forward.1} parent=11 // pred_fallthru
          _
      $region12: #{net_forward.1} parent=5 // pred_fallthru
        _
      %p327 = scmp.lt.s32.totalorder %s20, 2
      // Predicated region
      $region53: #{net_forward.1} parent=5 // pred_check
        %p328 = pneg %p327
      $region54: #{net_forward.1} parent=5 // pred_check_branch
        %330 = sbr.rel (%p328) target = $region56
      $region55: #{net_forward.1} parent=5 // pred_region
        // Predicated region
        $region57: #{net_forward.1} parent=55 // pred_check
          %p331 = pneg %p40
        $region58: #{net_forward.1} parent=55 // pred_check_branch
          %333 = sbr.rel (%p331) target = $region60
        $region59: #{net_forward.1} parent=55 // pred_region
          %s334 = smul.u32 40, %s20
          %p335 = scmp.lt.s32.totalorder %s334, 79
          %s336 = scalar_select %p335, %s334, 79
          %s337 = smul.addr %s336, 8
          %s338 = scalar_lea.vmem %s0, %s337
          %s339 = smul.u32 40, %s20
        $region60: #{net_forward.1} parent=55 // pred_fallthru
          _
      $region56: #{net_forward.1} parent=5 // pred_fallthru
        _
      %p340 = scmp.le.s32.totalorder 1, %s20
      %p341 = scmp.lt.s32.totalorder %s20, 3
      %p342 = pnand %p340, %p341
      %p343 = pneg %p342
      // Predicated region
      $region61: #{net_forward.1} parent=5 // pred_check
        _
      $region62: #{net_forward.1} parent=5 // pred_check_branch
        %345 = sbr.rel (%p342) target = $region64
      $region63: #{net_forward.1} parent=5 // pred_region
        %s346 = ssub.s32 %s20, 1
        %s347 = smul.u32 40, %s25
        %p348 = scmp.lt.s32.totalorder %s347, 79
        %s349 = scalar_select %p348, %s347, 79
        %s350 = smul.addr %s349, 8
        %s351 = scalar_lea.vmem %s0, %s350
        %p352 = pneg %p46
        %p353 = pneg %p43
        %p354 = pneg %p67
        %p355 = pneg %p64
        %p356 = pneg %p88
        %p357 = pneg %p85
        %p358 = pneg %p109
        %p359 = pneg %p106
        %p360 = pneg %p130
        %p361 = pneg %p127
        %p362 = pneg %p151
        %p363 = pneg %p148
        %p364 = pneg %p172
        %p365 = pneg %p169
        %p366 = pneg %p193
        %p367 = pneg %p190
        %p368 = pneg %p214
        %p369 = pneg %p211
        %p370 = pneg %p235
        %p371 = pneg %p232
        %p372 = pneg %p256
        %p373 = pneg %p253
        %p374 = pneg %p282
        %p375 = pneg %p279
        %s376 = sand.u32 %s269, 1
        %s377 = scalar_lea.sflag [#allocation6], %s376
        %s378 = sand.u32 %s269, 1
        %s379 = smul.addr %s378, 8
        %s380 = scalar_lea.vmem [#allocation5], %s379
        %s381 = smul.u32 40, %s25
        %p382 = scmp.lt.s32.totalorder %s381, 79
        %s383 = scalar_select %p382, %s381, 79
        %s384 = smul.addr %s383, 8
        %s385 = scalar_lea.vmem %s0, %s384
        %s386 = smul.u32 40, %s25
        %v387 = vld [vmem:[%s385] sm:$0xff]
        %v388 = vld [vmem:[%s385 + $0x8] sm:$0xff]
        %v389 = vld [vmem:[%s385 + $0x10] sm:$0xff]
        %v390 = vld [vmem:[%s385 + $0x18] sm:$0xff]
        %v391 = vld [vmem:[%s385 + $0x20] sm:$0xff]
        %v392 = vld [vmem:[%s385 + $0x28] sm:$0xff]
        %v393 = vld [vmem:[%s385 + $0x30] sm:$0xff]
        %v394 = vld [vmem:[%s385 + $0x38] sm:$0xff]
        %v395 = vld [vmem:[%s385 + $0x40] sm:$0xff]
        %v396 = vld [vmem:[%s385 + $0x48] sm:$0xff]
        %v397 = vld [vmem:[%s385 + $0x50] sm:$0xff]
        %v398 = vld [vmem:[%s385 + $0x58] sm:$0xff]
        %v399 = vld [vmem:[%s385 + $0x60] sm:$0xff]
        %v400 = vld [vmem:[%s385 + $0x68] sm:$0xff]
        %v401 = vld [vmem:[%s385 + $0x70] sm:$0xff]
        %v402 = vld [vmem:[%s385 + $0x78] sm:$0xff]
        %v403 = vld [vmem:[%s385 + $0x80] sm:$0xff]
        %v404 = vld [vmem:[%s385 + $0x88] sm:$0xff]
        %v405 = vld [vmem:[%s385 + $0x90] sm:$0xff]
        %v406 = vld [vmem:[%s385 + $0x98] sm:$0xff]
        %v407 = vld [vmem:[%s385 + $0xa0] sm:$0xff]
        %v408 = vld [vmem:[%s385 + $0xa8] sm:$0xff]
        %v409 = vld [vmem:[%s385 + $0xb0] sm:$0xff]
        %v410 = vld [vmem:[%s385 + $0xb8] sm:$0xff]
        %v411 = vld [vmem:[%s385 + $0xc0] sm:$0xff]
        %v412 = vld [vmem:[%s385 + $0xc8] sm:$0xff]
        %v413 = vld [vmem:[%s385 + $0xd0] sm:$0xff]
        %v414 = vld [vmem:[%s385 + $0xd8] sm:$0xff]
        %v415 = vld [vmem:[%s385 + $0xe0] sm:$0xff]
        %v416 = vld [vmem:[%s385 + $0xe8] sm:$0xff]
        %v417 = vld [vmem:[%s385 + $0xf0] sm:$0xff]
        %v418 = vld [vmem:[%s385 + $0xf8] sm:$0xff]
        %v419 = vld [vmem:[%s385 + $0x100] sm:$0xff]
        %v420 = vld [vmem:[%s385 + $0x108] sm:$0xff]
        %v421 = vld [vmem:[%s385 + $0x110] sm:$0xff]
        %v422 = vld [vmem:[%s385 + $0x118] sm:$0xff]
        %v423 = vld [vmem:[%s385 + $0x120] sm:$0xff]
        %v424 = vld [vmem:[%s385 + $0x128] sm:$0xff]
        %v425 = vld [vmem:[%s385 + $0x130] sm:$0xff]
        %v426 = vld [vmem:[%s1] sm:$0xff]
        %v427 = vld [vmem:[%s1 + $0x8] sm:$0xff]
        %v428 = vld [vmem:[%s1 + $0x10] sm:$0xff]
        %v429 = vld [vmem:[%s1 + $0x18] sm:$0xff]
        %v430 = vld [vmem:[%s1 + $0x20] sm:$0xff]
        %v431 = vld [vmem:[%s1 + $0x28] sm:$0xff]
        %v432 = vld [vmem:[%s1 + $0x30] sm:$0xff]
        %v433 = vld [vmem:[%s1 + $0x38] sm:$0xff]
        %v434 = vld [vmem:[%s1 + $0x40] sm:$0xff]
        %v435 = vld [vmem:[%s1 + $0x48] sm:$0xff]
        %v436 = vld [vmem:[%s1 + $0x50] sm:$0xff]
        %v437 = vld [vmem:[%s1 + $0x58] sm:$0xff]
        %v438 = vld [vmem:[%s1 + $0x60] sm:$0xff]
        %v439 = vld [vmem:[%s1 + $0x68] sm:$0xff]
        %v440 = vld [vmem:[%s1 + $0x70] sm:$0xff]
        %v441 = vld [vmem:[%s1 + $0x78] sm:$0xff]
        %v442 = vld [vmem:[%s1 + $0x80] sm:$0xff]
        %v443 = vld [vmem:[%s1 + $0x88] sm:$0xff]
        %v444 = vld [vmem:[%s1 + $0x90] sm:$0xff]
        %v445 = vld [vmem:[%s1 + $0x98] sm:$0xff]
        %v446 = vld [vmem:[%s1 + $0xa0] sm:$0xff]
        %v447 = vld [vmem:[%s1 + $0xa8] sm:$0xff]
        %v448 = vld [vmem:[%s1 + $0xb0] sm:$0xff]
        %v449 = vld [vmem:[%s1 + $0xb8] sm:$0xff]
        %v450 = vld [vmem:[%s1 + $0xc0] sm:$0xff]
        %v451 = vld [vmem:[%s1 + $0xc8] sm:$0xff]
        %v452 = vld [vmem:[%s1 + $0xd0] sm:$0xff]
        %v453 = vld [vmem:[%s1 + $0xd8] sm:$0xff]
        %v454 = vld [vmem:[%s1 + $0xe0] sm:$0xff]
        %v455 = vld [vmem:[%s1 + $0xe8] sm:$0xff]
        %v456 = vld [vmem:[%s1 + $0xf0] sm:$0xff]
        %v457 = vld [vmem:[%s1 + $0xf8] sm:$0xff]
        %v458 = vld [vmem:[%s385 + $0x1] sm:$0xff]
        %v459 = vld [vmem:[%s385 + $0x9] sm:$0xff]
        %v460 = vld [vmem:[%s385 + $0x11] sm:$0xff]
        %v461 = vld [vmem:[%s385 + $0x19] sm:$0xff]
        %v462 = vld [vmem:[%s385 + $0x21] sm:$0xff]
        %v463 = vld [vmem:[%s385 + $0x29] sm:$0xff]
        %v464 = vld [vmem:[%s385 + $0x31] sm:$0xff]
        %v465 = vld [vmem:[%s385 + $0x39] sm:$0xff]
        %v466 = vld [vmem:[%s385 + $0x41] sm:$0xff]
        %v467 = vld [vmem:[%s385 + $0x49] sm:$0xff]
        %v468 = vld [vmem:[%s385 + $0x51] sm:$0xff]
        %v469 = vld [vmem:[%s385 + $0x59] sm:$0xff]
        %v470 = vld [vmem:[%s385 + $0x61] sm:$0xff]
        %v471 = vld [vmem:[%s385 + $0x69] sm:$0xff]
        %v472 = vld [vmem:[%s385 + $0x71] sm:$0xff]
        %v473 = vld [vmem:[%s385 + $0x79] sm:$0xff]
        %v474 = vld [vmem:[%s385 + $0x81] sm:$0xff]
        %v475 = vld [vmem:[%s385 + $0x89] sm:$0xff]
        %v476 = vld [vmem:[%s385 + $0x91] sm:$0xff]
        %v477 = vld [vmem:[%s385 + $0x99] sm:$0xff]
        %v478 = vld [vmem:[%s385 + $0xa1] sm:$0xff]
        %v479 = vld [vmem:[%s385 + $0xa9] sm:$0xff]
        %v480 = vld [vmem:[%s385 + $0xb1] sm:$0xff]
        %v481 = vld [vmem:[%s385 + $0xb9] sm:$0xff]
        %v482 = vld [vmem:[%s385 + $0xc1] sm:$0xff]
        %v483 = vld [vmem:[%s385 + $0xc9] sm:$0xff]
        %v484 = vld [vmem:[%s385 + $0xd1] sm:$0xff]
        %v485 = vld [vmem:[%s385 + $0xd9] sm:$0xff]
        %v486 = vld [vmem:[%s385 + $0xe1] sm:$0xff]
        %v487 = vld [vmem:[%s385 + $0xe9] sm:$0xff]
        %v488 = vld [vmem:[%s385 + $0xf1] sm:$0xff]
        %v489 = vld [vmem:[%s385 + $0xf9] sm:$0xff]
        %v490 = vld [vmem:[%s385 + $0x101] sm:$0xff]
        %v491 = vld [vmem:[%s385 + $0x109] sm:$0xff]
        %v492 = vld [vmem:[%s385 + $0x111] sm:$0xff]
        %v493 = vld [vmem:[%s385 + $0x119] sm:$0xff]
        %v494 = vld [vmem:[%s385 + $0x121] sm:$0xff]
        %v495 = vld [vmem:[%s385 + $0x129] sm:$0xff]
        %v496 = vld [vmem:[%s385 + $0x131] sm:$0xff]
        %s497 = scalar_lea.vmem %s1, 256
        %v498 = vld [vmem:[%s497] sm:$0xff]
        %v499 = vld [vmem:[%s497 + $0x8] sm:$0xff]
        %v500 = vld [vmem:[%s497 + $0x10] sm:$0xff]
        %v501 = vld [vmem:[%s497 + $0x18] sm:$0xff]
        %v502 = vld [vmem:[%s497 + $0x20] sm:$0xff]
        %v503 = vld [vmem:[%s497 + $0x28] sm:$0xff]
        %v504 = vld [vmem:[%s497 + $0x30] sm:$0xff]
        %v505 = vld [vmem:[%s497 + $0x38] sm:$0xff]
        %v506 = vld [vmem:[%s497 + $0x40] sm:$0xff]
        %v507 = vld [vmem:[%s497 + $0x48] sm:$0xff]
        %v508 = vld [vmem:[%s497 + $0x50] sm:$0xff]
        %v509 = vld [vmem:[%s497 + $0x58] sm:$0xff]
        %v510 = vld [vmem:[%s497 + $0x60] sm:$0xff]
        %v511 = vld [vmem:[%s497 + $0x68] sm:$0xff]
        %v512 = vld [vmem:[%s497 + $0x70] sm:$0xff]
        %v513 = vld [vmem:[%s497 + $0x78] sm:$0xff]
        %v514 = vld [vmem:[%s497 + $0x80] sm:$0xff]
        %v515 = vld [vmem:[%s497 + $0x88] sm:$0xff]
        %v516 = vld [vmem:[%s497 + $0x90] sm:$0xff]
        %v517 = vld [vmem:[%s497 + $0x98] sm:$0xff]
        %v518 = vld [vmem:[%s497 + $0xa0] sm:$0xff]
        %v519 = vld [vmem:[%s497 + $0xa8] sm:$0xff]
        %v520 = vld [vmem:[%s497 + $0xb0] sm:$0xff]
        %v521 = vld [vmem:[%s497 + $0xb8] sm:$0xff]
        %v522 = vld [vmem:[%s497 + $0xc0] sm:$0xff]
        %v523 = vld [vmem:[%s497 + $0xc8] sm:$0xff]
        %v524 = vld [vmem:[%s497 + $0xd0] sm:$0xff]
        %v525 = vld [vmem:[%s497 + $0xd8] sm:$0xff]
        %v526 = vld [vmem:[%s497 + $0xe0] sm:$0xff]
        %v527 = vld [vmem:[%s497 + $0xe8] sm:$0xff]
        %v528 = vld [vmem:[%s497 + $0xf0] sm:$0xff]
        %v529 = vld [vmem:[%s497 + $0xf8] sm:$0xff]
        %530 = vmatpush.msra.mxu0 %v528
        %531 = vmatpush.msra.mxu0 %v526
        %532 = vmatpush.msra.mxu0 %v524
        %533 = vmatpush.msra.mxu0 %v522
        %534 = vmatpush.msra.mxu0 %v520
        %535 = vmatpush.msra.mxu0 %v518
        %536 = vmatpush.msra.mxu0 %v516
        %537 = vmatpush.msra.mxu0 %v514
        %538 = vmatpush.msra.mxu0 %v512
        %539 = vmatpush.msra.mxu0 %v510
        %540 = vmatpush.msra.mxu0 %v508
        %541 = vmatpush.msra.mxu0 %v506
        %542 = vmatpush.msra.mxu0 %v504
        %543 = vmatpush.msra.mxu0 %v502
        %544 = vmatpush.msra.mxu0 %v500
        %545 = vmatpush.msra.mxu0 %v498
        %546 = vmatmul.f32.gmra.mxu0 %v458
        %v547 = vpop.f32.mrf.mxu0
        %v548 = vadd.f32 0.0, %v547
        %549 = vmatmul.f32.gmra.mxu0 %v459
        %v550 = vpop.f32.mrf.mxu0
        %v551 = vadd.f32 0.0, %v550
        %552 = vmatmul.f32.gmra.mxu0 %v460
        %v553 = vpop.f32.mrf.mxu0
        %v554 = vadd.f32 0.0, %v553
        %555 = vmatmul.f32.gmra.mxu0 %v461
        %v556 = vpop.f32.mrf.mxu0
        %v557 = vadd.f32 0.0, %v556
        %558 = vmatmul.f32.gmra.mxu0 %v462
        %v559 = vpop.f32.mrf.mxu0
        %v560 = vadd.f32 0.0, %v559
        %561 = vmatmul.f32.gmra.mxu0 %v463
        %v562 = vpop.f32.mrf.mxu0
        %v563 = vadd.f32 0.0, %v562
        %564 = vmatmul.f32.gmra.mxu0 %v464
        %v565 = vpop.f32.mrf.mxu0
        %v566 = vadd.f32 0.0, %v565
        %567 = vmatmul.f32.gmra.mxu0 %v465
        %v568 = vpop.f32.mrf.mxu0
        %v569 = vadd.f32 0.0, %v568
        %570 = vmatmul.f32.gmra.mxu0 %v466
        %v571 = vpop.f32.mrf.mxu0
        %v572 = vadd.f32 0.0, %v571
        %573 = vmatmul.f32.gmra.mxu0 %v467
        %v574 = vpop.f32.mrf.mxu0
        %v575 = vadd.f32 0.0, %v574
        %576 = vmatmul.f32.gmra.mxu0 %v468
        %v577 = vpop.f32.mrf.mxu0
        %v578 = vadd.f32 0.0, %v577
        %579 = vmatmul.f32.gmra.mxu0 %v469
        %v580 = vpop.f32.mrf.mxu0
        %v581 = vadd.f32 0.0, %v580
        %582 = vmatmul.f32.gmra.mxu0 %v470
        %v583 = vpop.f32.mrf.mxu0
        %v584 = vadd.f32 0.0, %v583
        %585 = vmatmul.f32.gmra.mxu0 %v471
        %v586 = vpop.f32.mrf.mxu0
        %v587 = vadd.f32 0.0, %v586
        %588 = vmatmul.f32.gmra.mxu0 %v472
        %v589 = vpop.f32.mrf.mxu0
        %v590 = vadd.f32 0.0, %v589
        %591 = vmatmul.f32.gmra.mxu0 %v473
        %v592 = vpop.f32.mrf.mxu0
        %v593 = vadd.f32 0.0, %v592
        %594 = vmatmul.f32.gmra.mxu0 %v474
        %v595 = vpop.f32.mrf.mxu0
        %v596 = vadd.f32 0.0, %v595
        %597 = vmatmul.f32.gmra.mxu0 %v475
        %v598 = vpop.f32.mrf.mxu0
        %v599 = vadd.f32 0.0, %v598
        %600 = vmatmul.f32.gmra.mxu0 %v476
        %v601 = vpop.f32.mrf.mxu0
        %v602 = vadd.f32 0.0, %v601
        %603 = vmatmul.f32.gmra.mxu0 %v477
        %v604 = vpop.f32.mrf.mxu0
        %v605 = vadd.f32 0.0, %v604
        %606 = vmatmul.f32.gmra.mxu0 %v478
        %v607 = vpop.f32.mrf.mxu0
        %v608 = vadd.f32 0.0, %v607
        %609 = vmatmul.f32.gmra.mxu0 %v479
        %v610 = vpop.f32.mrf.mxu0
        %v611 = vadd.f32 0.0, %v610
        %612 = vmatmul.f32.gmra.mxu0 %v480
        %v613 = vpop.f32.mrf.mxu0
        %v614 = vadd.f32 0.0, %v613
        %615 = vmatmul.f32.gmra.mxu0 %v481
        %v616 = vpop.f32.mrf.mxu0
        %v617 = vadd.f32 0.0, %v616
        %618 = vmatmul.f32.gmra.mxu0 %v482
        %v619 = vpop.f32.mrf.mxu0
        %v620 = vadd.f32 0.0, %v619
        %621 = vmatmul.f32.gmra.mxu0 %v483
        %v622 = vpop.f32.mrf.mxu0
        %v623 = vadd.f32 0.0, %v622
        %624 = vmatmul.f32.gmra.mxu0 %v484
        %v625 = vpop.f32.mrf.mxu0
        %v626 = vadd.f32 0.0, %v625
        %627 = vmatmul.f32.gmra.mxu0 %v485
        %v628 = vpop.f32.mrf.mxu0
        %v629 = vadd.f32 0.0, %v628
        %630 = vmatmul.f32.gmra.mxu0 %v486
        %v631 = vpop.f32.mrf.mxu0
        %v632 = vadd.f32 0.0, %v631
        %633 = vmatmul.f32.gmra.mxu0 %v487
        %v634 = vpop.f32.mrf.mxu0
        %v635 = vadd.f32 0.0, %v634
        %636 = vmatmul.f32.gmra.mxu0 %v488
        %v637 = vpop.f32.mrf.mxu0
        %v638 = vadd.f32 0.0, %v637
        %639 = vmatmul.f32.gmra.mxu0 %v489
        %v640 = vpop.f32.mrf.mxu0
        %v641 = vadd.f32 0.0, %v640
        %642 = vmatmul.f32.gmra.mxu0 %v490
        %v643 = vpop.f32.mrf.mxu0
        %v644 = vadd.f32 0.0, %v643
        %645 = vmatmul.f32.gmra.mxu0 %v491
        %v646 = vpop.f32.mrf.mxu0
        %v647 = vadd.f32 0.0, %v646
        %648 = vmatmul.f32.gmra.mxu0 %v492
        %v649 = vpop.f32.mrf.mxu0
        %v650 = vadd.f32 0.0, %v649
        %651 = vmatmul.f32.gmra.mxu0 %v493
        %v652 = vpop.f32.mrf.mxu0
        %v653 = vadd.f32 0.0, %v652
        %654 = vmatmul.f32.gmra.mxu0 %v494
        %v655 = vpop.f32.mrf.mxu0
        %v656 = vadd.f32 0.0, %v655
        %657 = vmatmul.f32.gmra.mxu0 %v495
        %v658 = vpop.f32.mrf.mxu0
        %v659 = vadd.f32 0.0, %v658
        %660 = vmatmul.f32.gmra.mxu0 %v496
        %v661 = vpop.f32.mrf.mxu0
        %v662 = vadd.f32 0.0, %v661
        %663 = vdwg.mxu0
        %664 = vmatpush.msra.mxu0 %v529
        %665 = vmatpush.msra.mxu0 %v527
        %666 = vmatpush.msra.mxu0 %v525
        %667 = vmatpush.msra.mxu0 %v523
        %668 = vmatpush.msra.mxu0 %v521
        %669 = vmatpush.msra.mxu0 %v519
        %670 = vmatpush.msra.mxu0 %v517
        %671 = vmatpush.msra.mxu0 %v515
        %672 = vmatpush.msra.mxu0 %v513
        %673 = vmatpush.msra.mxu0 %v511
        %674 = vmatpush.msra.mxu0 %v509
        %675 = vmatpush.msra.mxu0 %v507
        %676 = vmatpush.msra.mxu0 %v505
        %677 = vmatpush.msra.mxu0 %v503
        %678 = vmatpush.msra.mxu0 %v501
        %679 = vmatpush.msra.mxu0 %v499
        %680 = vmatmul.f32.gmra.mxu0 %v458
        %v681 = vpop.f32.mrf.mxu0
        %v682 = vadd.f32 0.0, %v681
        %683 = vmatmul.f32.gmra.mxu0 %v459
        %v684 = vpop.f32.mrf.mxu0
        %v685 = vadd.f32 0.0, %v684
        %686 = vmatmul.f32.gmra.mxu0 %v460
        %v687 = vpop.f32.mrf.mxu0
        %v688 = vadd.f32 0.0, %v687
        %689 = vmatmul.f32.gmra.mxu0 %v461
        %v690 = vpop.f32.mrf.mxu0
        %v691 = vadd.f32 0.0, %v690
        %692 = vmatmul.f32.gmra.mxu0 %v462
        %v693 = vpop.f32.mrf.mxu0
        %v694 = vadd.f32 0.0, %v693
        %695 = vmatmul.f32.gmra.mxu0 %v463
        %v696 = vpop.f32.mrf.mxu0
        %v697 = vadd.f32 0.0, %v696
        %698 = vmatmul.f32.gmra.mxu0 %v464
        %v699 = vpop.f32.mrf.mxu0
        %v700 = vadd.f32 0.0, %v699
        %701 = vmatmul.f32.gmra.mxu0 %v465
        %v702 = vpop.f32.mrf.mxu0
        %v703 = vadd.f32 0.0, %v702
        %704 = vmatmul.f32.gmra.mxu0 %v466
        %v705 = vpop.f32.mrf.mxu0
        %v706 = vadd.f32 0.0, %v705
        %707 = vmatmul.f32.gmra.mxu0 %v467
        %v708 = vpop.f32.mrf.mxu0
        %v709 = vadd.f32 0.0, %v708
        %710 = vmatmul.f32.gmra.mxu0 %v468
        %v711 = vpop.f32.mrf.mxu0
        %v712 = vadd.f32 0.0, %v711
        %713 = vmatmul.f32.gmra.mxu0 %v469
        %v714 = vpop.f32.mrf.mxu0
        %v715 = vadd.f32 0.0, %v714
        %716 = vmatmul.f32.gmra.mxu0 %v470
        %v717 = vpop.f32.mrf.mxu0
        %v718 = vadd.f32 0.0, %v717
        %719 = vmatmul.f32.gmra.mxu0 %v471
        %v720 = vpop.f32.mrf.mxu0
        %v721 = vadd.f32 0.0, %v720
        %722 = vmatmul.f32.gmra.mxu0 %v472
        %v723 = vpop.f32.mrf.mxu0
        %v724 = vadd.f32 0.0, %v723
        %725 = vmatmul.f32.gmra.mxu0 %v473
        %v726 = vpop.f32.mrf.mxu0
        %v727 = vadd.f32 0.0, %v726
        %728 = vmatmul.f32.gmra.mxu0 %v474
        %v729 = vpop.f32.mrf.mxu0
        %v730 = vadd.f32 0.0, %v729
        %731 = vmatmul.f32.gmra.mxu0 %v475
        %v732 = vpop.f32.mrf.mxu0
        %v733 = vadd.f32 0.0, %v732
        %734 = vmatmul.f32.gmra.mxu0 %v476
        %v735 = vpop.f32.mrf.mxu0
        %v736 = vadd.f32 0.0, %v735
        %737 = vmatmul.f32.gmra.mxu0 %v477
        %v738 = vpop.f32.mrf.mxu0
        %v739 = vadd.f32 0.0, %v738
        %740 = vmatmul.f32.gmra.mxu0 %v478
        %v741 = vpop.f32.mrf.mxu0
        %v742 = vadd.f32 0.0, %v741
        %743 = vmatmul.f32.gmra.mxu0 %v479
        %v744 = vpop.f32.mrf.mxu0
        %v745 = vadd.f32 0.0, %v744
        %746 = vmatmul.f32.gmra.mxu0 %v480
        %v747 = vpop.f32.mrf.mxu0
        %v748 = vadd.f32 0.0, %v747
        %749 = vmatmul.f32.gmra.mxu0 %v481
        %v750 = vpop.f32.mrf.mxu0
        %v751 = vadd.f32 0.0, %v750
        %752 = vmatmul.f32.gmra.mxu0 %v482
        %v753 = vpop.f32.mrf.mxu0
        %v754 = vadd.f32 0.0, %v753
        %755 = vmatmul.f32.gmra.mxu0 %v483
        %v756 = vpop.f32.mrf.mxu0
        %v757 = vadd.f32 0.0, %v756
        %758 = vmatmul.f32.gmra.mxu0 %v484
        %v759 = vpop.f32.mrf.mxu0
        %v760 = vadd.f32 0.0, %v759
        %761 = vmatmul.f32.gmra.mxu0 %v485
        %v762 = vpop.f32.mrf.mxu0
        %v763 = vadd.f32 0.0, %v762
        %764 = vmatmul.f32.gmra.mxu0 %v486
        %v765 = vpop.f32.mrf.mxu0
        %v766 = vadd.f32 0.0, %v765
        %767 = vmatmul.f32.gmra.mxu0 %v487
        %v768 = vpop.f32.mrf.mxu0
        %v769 = vadd.f32 0.0, %v768
        %770 = vmatmul.f32.gmra.mxu0 %v488
        %v771 = vpop.f32.mrf.mxu0
        %v772 = vadd.f32 0.0, %v771
        %773 = vmatmul.f32.gmra.mxu0 %v489
        %v774 = vpop.f32.mrf.mxu0
        %v775 = vadd.f32 0.0, %v774
        %776 = vmatmul.f32.gmra.mxu0 %v490
        %v777 = vpop.f32.mrf.mxu0
        %v778 = vadd.f32 0.0, %v777
        %779 = vmatmul.f32.gmra.mxu0 %v491
        %v780 = vpop.f32.mrf.mxu0
        %v781 = vadd.f32 0.0, %v780
        %782 = vmatmul.f32.gmra.mxu0 %v492
        %v783 = vpop.f32.mrf.mxu0
        %v784 = vadd.f32 0.0, %v783
        %785 = vmatmul.f32.gmra.mxu0 %v493
        %v786 = vpop.f32.mrf.mxu0
        %v787 = vadd.f32 0.0, %v786
        %788 = vmatmul.f32.gmra.mxu0 %v494
        %v789 = vpop.f32.mrf.mxu0
        %v790 = vadd.f32 0.0, %v789
        %791 = vmatmul.f32.gmra.mxu0 %v495
        %v792 = vpop.f32.mrf.mxu0
        %v793 = vadd.f32 0.0, %v792
        %794 = vmatmul.f32.gmra.mxu0 %v496
        %v795 = vpop.f32.mrf.mxu0
        %v796 = vadd.f32 0.0, %v795
        %797 = vdwg.mxu0
        %798 = vmatpush.msra.mxu0 %v456
        %799 = vmatpush.msra.mxu0 %v454
        %800 = vmatpush.msra.mxu0 %v452
        %801 = vmatpush.msra.mxu0 %v450
        %802 = vmatpush.msra.mxu0 %v448
        %803 = vmatpush.msra.mxu0 %v446
        %804 = vmatpush.msra.mxu0 %v444
        %805 = vmatpush.msra.mxu0 %v442
        %806 = vmatpush.msra.mxu0 %v440
        %807 = vmatpush.msra.mxu0 %v438
        %808 = vmatpush.msra.mxu0 %v436
        %809 = vmatpush.msra.mxu0 %v434
        %810 = vmatpush.msra.mxu0 %v432
        %811 = vmatpush.msra.mxu0 %v430
        %812 = vmatpush.msra.mxu0 %v428
        %813 = vmatpush.msra.mxu0 %v426
        %814 = vmatmul.f32.gmra.mxu0 %v387
        %v815 = vpop.f32.mrf.mxu0
        %v816 = vadd.f32 %v548, %v815
        %817 = vmatmul.f32.gmra.mxu0 %v388
        %v818 = vpop.f32.mrf.mxu0
        %v819 = vadd.f32 %v551, %v818
        %820 = vmatmul.f32.gmra.mxu0 %v389
        %v821 = vpop.f32.mrf.mxu0
        %v822 = vadd.f32 %v554, %v821
        %823 = vmatmul.f32.gmra.mxu0 %v390
        %v824 = vpop.f32.mrf.mxu0
        %v825 = vadd.f32 %v557, %v824
        %826 = vmatmul.f32.gmra.mxu0 %v391
        %v827 = vpop.f32.mrf.mxu0
        %v828 = vadd.f32 %v560, %v827
        %829 = vmatmul.f32.gmra.mxu0 %v392
        %v830 = vpop.f32.mrf.mxu0
        %v831 = vadd.f32 %v563, %v830
        %832 = vmatmul.f32.gmra.mxu0 %v393
        %v833 = vpop.f32.mrf.mxu0
        %v834 = vadd.f32 %v566, %v833
        %835 = vmatmul.f32.gmra.mxu0 %v394
        %v836 = vpop.f32.mrf.mxu0
        %v837 = vadd.f32 %v569, %v836
        %838 = vmatmul.f32.gmra.mxu0 %v395
        %v839 = vpop.f32.mrf.mxu0
        %v840 = vadd.f32 %v572, %v839
        %841 = vmatmul.f32.gmra.mxu0 %v396
        %v842 = vpop.f32.mrf.mxu0
        %v843 = vadd.f32 %v575, %v842
        %844 = vmatmul.f32.gmra.mxu0 %v397
        %v845 = vpop.f32.mrf.mxu0
        %v846 = vadd.f32 %v578, %v845
        %847 = vmatmul.f32.gmra.mxu0 %v398
        %v848 = vpop.f32.mrf.mxu0
        %v849 = vadd.f32 %v581, %v848
        %850 = vmatmul.f32.gmra.mxu0 %v399
        %v851 = vpop.f32.mrf.mxu0
        %v852 = vadd.f32 %v584, %v851
        %853 = vmatmul.f32.gmra.mxu0 %v400
        %v854 = vpop.f32.mrf.mxu0
        %v855 = vadd.f32 %v587, %v854
        %856 = vmatmul.f32.gmra.mxu0 %v401
        %v857 = vpop.f32.mrf.mxu0
        %v858 = vadd.f32 %v590, %v857
        %859 = vmatmul.f32.gmra.mxu0 %v402
        %v860 = vpop.f32.mrf.mxu0
        %v861 = vadd.f32 %v593, %v860
        %862 = vmatmul.f32.gmra.mxu0 %v403
        %v863 = vpop.f32.mrf.mxu0
        %v864 = vadd.f32 %v596, %v863
        %865 = vmatmul.f32.gmra.mxu0 %v404
        %v866 = vpop.f32.mrf.mxu0
        %v867 = vadd.f32 %v599, %v866
        %868 = vmatmul.f32.gmra.mxu0 %v405
        %v869 = vpop.f32.mrf.mxu0
        %v870 = vadd.f32 %v602, %v869
        %871 = vmatmul.f32.gmra.mxu0 %v406
        %v872 = vpop.f32.mrf.mxu0
        %v873 = vadd.f32 %v605, %v872
        %874 = vmatmul.f32.gmra.mxu0 %v407
        %v875 = vpop.f32.mrf.mxu0
        %v876 = vadd.f32 %v608, %v875
        %877 = vmatmul.f32.gmra.mxu0 %v408
        %v878 = vpop.f32.mrf.mxu0
        %v879 = vadd.f32 %v611, %v878
        %880 = vmatmul.f32.gmra.mxu0 %v409
        %v881 = vpop.f32.mrf.mxu0
        %v882 = vadd.f32 %v614, %v881
        %883 = vmatmul.f32.gmra.mxu0 %v410
        %v884 = vpop.f32.mrf.mxu0
        %v885 = vadd.f32 %v617, %v884
        %886 = vmatmul.f32.gmra.mxu0 %v411
        %v887 = vpop.f32.mrf.mxu0
        %v888 = vadd.f32 %v620, %v887
        %889 = vmatmul.f32.gmra.mxu0 %v412
        %v890 = vpop.f32.mrf.mxu0
        %v891 = vadd.f32 %v623, %v890
        %892 = vmatmul.f32.gmra.mxu0 %v413
        %v893 = vpop.f32.mrf.mxu0
        %v894 = vadd.f32 %v626, %v893
        %895 = vmatmul.f32.gmra.mxu0 %v414
        %v896 = vpop.f32.mrf.mxu0
        %v897 = vadd.f32 %v629, %v896
        %898 = vmatmul.f32.gmra.mxu0 %v415
        %v899 = vpop.f32.mrf.mxu0
        %v900 = vadd.f32 %v632, %v899
        %901 = vmatmul.f32.gmra.mxu0 %v416
        %v902 = vpop.f32.mrf.mxu0
        %v903 = vadd.f32 %v635, %v902
        %904 = vmatmul.f32.gmra.mxu0 %v417
        %v905 = vpop.f32.mrf.mxu0
        %v906 = vadd.f32 %v638, %v905
        %907 = vmatmul.f32.gmra.mxu0 %v418
        %v908 = vpop.f32.mrf.mxu0
        %v909 = vadd.f32 %v641, %v908
        %910 = vmatmul.f32.gmra.mxu0 %v419
        %v911 = vpop.f32.mrf.mxu0
        %v912 = vadd.f32 %v644, %v911
        %913 = vmatmul.f32.gmra.mxu0 %v420
        %v914 = vpop.f32.mrf.mxu0
        %v915 = vadd.f32 %v647, %v914
        %916 = vmatmul.f32.gmra.mxu0 %v421
        %v917 = vpop.f32.mrf.mxu0
        %v918 = vadd.f32 %v650, %v917
        %919 = vmatmul.f32.gmra.mxu0 %v422
        %v920 = vpop.f32.mrf.mxu0
        %v921 = vadd.f32 %v653, %v920
        %922 = vmatmul.f32.gmra.mxu0 %v423
        %v923 = vpop.f32.mrf.mxu0
        %v924 = vadd.f32 %v656, %v923
        %925 = vmatmul.f32.gmra.mxu0 %v424
        %v926 = vpop.f32.mrf.mxu0
        %v927 = vadd.f32 %v659, %v926
        %928 = vmatmul.f32.gmra.mxu0 %v425
        %v929 = vpop.f32.mrf.mxu0
        %v930 = vadd.f32 %v662, %v929
        %931 = vdwg.mxu0
        %932 = vmatpush.msra.mxu0 %v457
        %933 = vmatpush.msra.mxu0 %v455
        %934 = vmatpush.msra.mxu0 %v453
        %935 = vmatpush.msra.mxu0 %v451
        %936 = vmatpush.msra.mxu0 %v449
        %937 = vmatpush.msra.mxu0 %v447
        %938 = vmatpush.msra.mxu0 %v445
        %939 = vmatpush.msra.mxu0 %v443
        %940 = vmatpush.msra.mxu0 %v441
        %941 = vmatpush.msra.mxu0 %v439
        %942 = vmatpush.msra.mxu0 %v437
        %943 = vmatpush.msra.mxu0 %v435
        %944 = vmatpush.msra.mxu0 %v433
        %945 = vmatpush.msra.mxu0 %v431
        %946 = vmatpush.msra.mxu0 %v429
        %947 = vmatpush.msra.mxu0 %v427
        %948 = vmatmul.f32.gmra.mxu0 %v387
        %v949 = vpop.f32.mrf.mxu0
        %v950 = vadd.f32 %v682, %v949
        %951 = vmatmul.f32.gmra.mxu0 %v388
        %v952 = vpop.f32.mrf.mxu0
        %v953 = vadd.f32 %v685, %v952
        %954 = vmatmul.f32.gmra.mxu0 %v389
        %v955 = vpop.f32.mrf.mxu0
        %v956 = vadd.f32 %v688, %v955
        %957 = vmatmul.f32.gmra.mxu0 %v390
        %v958 = vpop.f32.mrf.mxu0
        %v959 = vadd.f32 %v691, %v958
        %960 = vmatmul.f32.gmra.mxu0 %v391
        %v961 = vpop.f32.mrf.mxu0
        %v962 = vadd.f32 %v694, %v961
        %963 = vmatmul.f32.gmra.mxu0 %v392
        %v964 = vpop.f32.mrf.mxu0
        %v965 = vadd.f32 %v697, %v964
        %966 = vmatmul.f32.gmra.mxu0 %v393
        %v967 = vpop.f32.mrf.mxu0
        %v968 = vadd.f32 %v700, %v967
        %969 = vmatmul.f32.gmra.mxu0 %v394
        %v970 = vpop.f32.mrf.mxu0
        %v971 = vadd.f32 %v703, %v970
        %972 = vmatmul.f32.gmra.mxu0 %v395
        %v973 = vpop.f32.mrf.mxu0
        %v974 = vadd.f32 %v706, %v973
        %975 = vmatmul.f32.gmra.mxu0 %v396
        %v976 = vpop.f32.mrf.mxu0
        %v977 = vadd.f32 %v709, %v976
        %978 = vmatmul.f32.gmra.mxu0 %v397
        %v979 = vpop.f32.mrf.mxu0
        %v980 = vadd.f32 %v712, %v979
        %981 = vmatmul.f32.gmra.mxu0 %v398
        %v982 = vpop.f32.mrf.mxu0
        %v983 = vadd.f32 %v715, %v982
        %984 = vmatmul.f32.gmra.mxu0 %v399
        %v985 = vpop.f32.mrf.mxu0
        %v986 = vadd.f32 %v718, %v985
        %987 = vmatmul.f32.gmra.mxu0 %v400
        %v988 = vpop.f32.mrf.mxu0
        %v989 = vadd.f32 %v721, %v988
        %990 = vmatmul.f32.gmra.mxu0 %v401
        %v991 = vpop.f32.mrf.mxu0
        %v992 = vadd.f32 %v724, %v991
        %993 = vmatmul.f32.gmra.mxu0 %v402
        %v994 = vpop.f32.mrf.mxu0
        %v995 = vadd.f32 %v727, %v994
        %996 = vmatmul.f32.gmra.mxu0 %v403
        %v997 = vpop.f32.mrf.mxu0
        %v998 = vadd.f32 %v730, %v997
        %999 = vmatmul.f32.gmra.mxu0 %v404
        %v1000 = vpop.f32.mrf.mxu0
        %v1001 = vadd.f32 %v733, %v1000
        %1002 = vmatmul.f32.gmra.mxu0 %v405
        %v1003 = vpop.f32.mrf.mxu0
        %v1004 = vadd.f32 %v736, %v1003
        %1005 = vmatmul.f32.gmra.mxu0 %v406
        %v1006 = vpop.f32.mrf.mxu0
        %v1007 = vadd.f32 %v739, %v1006
        %1008 = vmatmul.f32.gmra.mxu0 %v407
        %v1009 = vpop.f32.mrf.mxu0
        %v1010 = vadd.f32 %v742, %v1009
        %1011 = vmatmul.f32.gmra.mxu0 %v408
        %v1012 = vpop.f32.mrf.mxu0
        %v1013 = vadd.f32 %v745, %v1012
        %1014 = vmatmul.f32.gmra.mxu0 %v409
        %v1015 = vpop.f32.mrf.mxu0
        %v1016 = vadd.f32 %v748, %v1015
        %1017 = vmatmul.f32.gmra.mxu0 %v410
        %v1018 = vpop.f32.mrf.mxu0
        %v1019 = vadd.f32 %v751, %v1018
        %1020 = vmatmul.f32.gmra.mxu0 %v411
        %v1021 = vpop.f32.mrf.mxu0
        %v1022 = vadd.f32 %v754, %v1021
        %1023 = vmatmul.f32.gmra.mxu0 %v412
        %v1024 = vpop.f32.mrf.mxu0
        %v1025 = vadd.f32 %v757, %v1024
        %1026 = vmatmul.f32.gmra.mxu0 %v413
        %v1027 = vpop.f32.mrf.mxu0
        %v1028 = vadd.f32 %v760, %v1027
        %1029 = vmatmul.f32.gmra.mxu0 %v414
        %v1030 = vpop.f32.mrf.mxu0
        %v1031 = vadd.f32 %v763, %v1030
        %1032 = vmatmul.f32.gmra.mxu0 %v415
        %v1033 = vpop.f32.mrf.mxu0
        %v1034 = vadd.f32 %v766, %v1033
        %1035 = vmatmul.f32.gmra.mxu0 %v416
        %v1036 = vpop.f32.mrf.mxu0
        %v1037 = vadd.f32 %v769, %v1036
        %1038 = vmatmul.f32.gmra.mxu0 %v417
        %v1039 = vpop.f32.mrf.mxu0
        %v1040 = vadd.f32 %v772, %v1039
        %1041 = vmatmul.f32.gmra.mxu0 %v418
        %v1042 = vpop.f32.mrf.mxu0
        %v1043 = vadd.f32 %v775, %v1042
        %1044 = vmatmul.f32.gmra.mxu0 %v419
        %v1045 = vpop.f32.mrf.mxu0
        %v1046 = vadd.f32 %v778, %v1045
        %1047 = vmatmul.f32.gmra.mxu0 %v420
        %v1048 = vpop.f32.mrf.mxu0
        %v1049 = vadd.f32 %v781, %v1048
        %1050 = vmatmul.f32.gmra.mxu0 %v421
        %v1051 = vpop.f32.mrf.mxu0
        %v1052 = vadd.f32 %v784, %v1051
        %1053 = vmatmul.f32.gmra.mxu0 %v422
        %v1054 = vpop.f32.mrf.mxu0
        %v1055 = vadd.f32 %v787, %v1054
        %1056 = vmatmul.f32.gmra.mxu0 %v423
        %v1057 = vpop.f32.mrf.mxu0
        %v1058 = vadd.f32 %v790, %v1057
        %1059 = vmatmul.f32.gmra.mxu0 %v424
        %v1060 = vpop.f32.mrf.mxu0
        %v1061 = vadd.f32 %v793, %v1060
        %1062 = vmatmul.f32.gmra.mxu0 %v425
        %v1063 = vpop.f32.mrf.mxu0
        %v1064 = vadd.f32 %v796, %v1063
        %1065 = vdwg.mxu0
        %v1066 = vld [vmem:[%s385 + $0x2] sm:$0xff]
        %v1067 = vld [vmem:[%s385 + $0xa] sm:$0xff]
        %v1068 = vld [vmem:[%s385 + $0x12] sm:$0xff]
        %v1069 = vld [vmem:[%s385 + $0x1a] sm:$0xff]
        %v1070 = vld [vmem:[%s385 + $0x22] sm:$0xff]
        %v1071 = vld [vmem:[%s385 + $0x2a] sm:$0xff]
        %v1072 = vld [vmem:[%s385 + $0x32] sm:$0xff]
        %v1073 = vld [vmem:[%s385 + $0x3a] sm:$0xff]
        %v1074 = vld [vmem:[%s385 + $0x42] sm:$0xff]
        %v1075 = vld [vmem:[%s385 + $0x4a] sm:$0xff]
        %v1076 = vld [vmem:[%s385 + $0x52] sm:$0xff]
        %v1077 = vld [vmem:[%s385 + $0x5a] sm:$0xff]
        %v1078 = vld [vmem:[%s385 + $0x62] sm:$0xff]
        %v1079 = vld [vmem:[%s385 + $0x6a] sm:$0xff]
        %v1080 = vld [vmem:[%s385 + $0x72] sm:$0xff]
        %v1081 = vld [vmem:[%s385 + $0x7a] sm:$0xff]
        %v1082 = vld [vmem:[%s385 + $0x82] sm:$0xff]
        %v1083 = vld [vmem:[%s385 + $0x8a] sm:$0xff]
        %v1084 = vld [vmem:[%s385 + $0x92] sm:$0xff]
        %v1085 = vld [vmem:[%s385 + $0x9a] sm:$0xff]
        %v1086 = vld [vmem:[%s385 + $0xa2] sm:$0xff]
        %v1087 = vld [vmem:[%s385 + $0xaa] sm:$0xff]
        %v1088 = vld [vmem:[%s385 + $0xb2] sm:$0xff]
        %v1089 = vld [vmem:[%s385 + $0xba] sm:$0xff]
        %v1090 = vld [vmem:[%s385 + $0xc2] sm:$0xff]
        %v1091 = vld [vmem:[%s385 + $0xca] sm:$0xff]
        %v1092 = vld [vmem:[%s385 + $0xd2] sm:$0xff]
        %v1093 = vld [vmem:[%s385 + $0xda] sm:$0xff]
        %v1094 = vld [vmem:[%s385 + $0xe2] sm:$0xff]
        %v1095 = vld [vmem:[%s385 + $0xea] sm:$0xff]
        %v1096 = vld [vmem:[%s385 + $0xf2] sm:$0xff]
        %v1097 = vld [vmem:[%s385 + $0xfa] sm:$0xff]
        %v1098 = vld [vmem:[%s385 + $0x102] sm:$0xff]
        %v1099 = vld [vmem:[%s385 + $0x10a] sm:$0xff]
        %v1100 = vld [vmem:[%s385 + $0x112] sm:$0xff]
        %v1101 = vld [vmem:[%s385 + $0x11a] sm:$0xff]
        %v1102 = vld [vmem:[%s385 + $0x122] sm:$0xff]
        %v1103 = vld [vmem:[%s385 + $0x12a] sm:$0xff]
        %v1104 = vld [vmem:[%s385 + $0x132] sm:$0xff]
        %s1105 = scalar_lea.vmem %s1, 512
        %v1106 = vld [vmem:[%s1105] sm:$0xff]
        %v1107 = vld [vmem:[%s1105 + $0x8] sm:$0xff]
        %v1108 = vld [vmem:[%s1105 + $0x10] sm:$0xff]
        %v1109 = vld [vmem:[%s1105 + $0x18] sm:$0xff]
        %v1110 = vld [vmem:[%s1105 + $0x20] sm:$0xff]
        %v1111 = vld [vmem:[%s1105 + $0x28] sm:$0xff]
        %v1112 = vld [vmem:[%s1105 + $0x30] sm:$0xff]
        %v1113 = vld [vmem:[%s1105 + $0x38] sm:$0xff]
        %v1114 = vld [vmem:[%s1105 + $0x40] sm:$0xff]
        %v1115 = vld [vmem:[%s1105 + $0x48] sm:$0xff]
        %v1116 = vld [vmem:[%s1105 + $0x50] sm:$0xff]
        %v1117 = vld [vmem:[%s1105 + $0x58] sm:$0xff]
        %v1118 = vld [vmem:[%s1105 + $0x60] sm:$0xff]
        %v1119 = vld [vmem:[%s1105 + $0x68] sm:$0xff]
        %v1120 = vld [vmem:[%s1105 + $0x70] sm:$0xff]
        %v1121 = vld [vmem:[%s1105 + $0x78] sm:$0xff]
        %v1122 = vld [vmem:[%s1105 + $0x80] sm:$0xff]
        %v1123 = vld [vmem:[%s1105 + $0x88] sm:$0xff]
        %v1124 = vld [vmem:[%s1105 + $0x90] sm:$0xff]
        %v1125 = vld [vmem:[%s1105 + $0x98] sm:$0xff]
        %v1126 = vld [vmem:[%s1105 + $0xa0] sm:$0xff]
        %v1127 = vld [vmem:[%s1105 + $0xa8] sm:$0xff]
        %v1128 = vld [vmem:[%s1105 + $0xb0] sm:$0xff]
        %v1129 = vld [vmem:[%s1105 + $0xb8] sm:$0xff]
        %v1130 = vld [vmem:[%s1105 + $0xc0] sm:$0xff]
        %v1131 = vld [vmem:[%s1105 + $0xc8] sm:$0xff]
        %v1132 = vld [vmem:[%s1105 + $0xd0] sm:$0xff]
        %v1133 = vld [vmem:[%s1105 + $0xd8] sm:$0xff]
        %v1134 = vld [vmem:[%s1105 + $0xe0] sm:$0xff]
        %v1135 = vld [vmem:[%s1105 + $0xe8] sm:$0xff]
        %v1136 = vld [vmem:[%s1105 + $0xf0] sm:$0xff]
        %v1137 = vld [vmem:[%s1105 + $0xf8] sm:$0xff]
        %1138 = vmatpush.msra.mxu0 %v1136
        %1139 = vmatpush.msra.mxu0 %v1134
        %1140 = vmatpush.msra.mxu0 %v1132
        %1141 = vmatpush.msra.mxu0 %v1130
        %1142 = vmatpush.msra.mxu0 %v1128
        %1143 = vmatpush.msra.mxu0 %v1126
        %1144 = vmatpush.msra.mxu0 %v1124
        %1145 = vmatpush.msra.mxu0 %v1122
        %1146 = vmatpush.msra.mxu0 %v1120
        %1147 = vmatpush.msra.mxu0 %v1118
        %1148 = vmatpush.msra.mxu0 %v1116
        %1149 = vmatpush.msra.mxu0 %v1114
        %1150 = vmatpush.msra.mxu0 %v1112
        %1151 = vmatpush.msra.mxu0 %v1110
        %1152 = vmatpush.msra.mxu0 %v1108
        %1153 = vmatpush.msra.mxu0 %v1106
        %1154 = vmatmul.f32.gmra.mxu0 %v1066
        %v1155 = vpop.f32.mrf.mxu0
        %v1156 = vadd.f32 0.0, %v1155
        %1157 = vmatmul.f32.gmra.mxu0 %v1067
        %v1158 = vpop.f32.mrf.mxu0
        %v1159 = vadd.f32 0.0, %v1158
        %1160 = vmatmul.f32.gmra.mxu0 %v1068
        %v1161 = vpop.f32.mrf.mxu0
        %v1162 = vadd.f32 0.0, %v1161
        %1163 = vmatmul.f32.gmra.mxu0 %v1069
        %v1164 = vpop.f32.mrf.mxu0
        %v1165 = vadd.f32 0.0, %v1164
        %1166 = vmatmul.f32.gmra.mxu0 %v1070
        %v1167 = vpop.f32.mrf.mxu0
        %v1168 = vadd.f32 0.0, %v1167
        %1169 = vmatmul.f32.gmra.mxu0 %v1071
        %v1170 = vpop.f32.mrf.mxu0
        %v1171 = vadd.f32 0.0, %v1170
        %1172 = vmatmul.f32.gmra.mxu0 %v1072
        %v1173 = vpop.f32.mrf.mxu0
        %v1174 = vadd.f32 0.0, %v1173
        %1175 = vmatmul.f32.gmra.mxu0 %v1073
        %v1176 = vpop.f32.mrf.mxu0
        %v1177 = vadd.f32 0.0, %v1176
        %1178 = vmatmul.f32.gmra.mxu0 %v1074
        %v1179 = vpop.f32.mrf.mxu0
        %v1180 = vadd.f32 0.0, %v1179
        %1181 = vmatmul.f32.gmra.mxu0 %v1075
        %v1182 = vpop.f32.mrf.mxu0
        %v1183 = vadd.f32 0.0, %v1182
        %1184 = vmatmul.f32.gmra.mxu0 %v1076
        %v1185 = vpop.f32.mrf.mxu0
        %v1186 = vadd.f32 0.0, %v1185
        %1187 = vmatmul.f32.gmra.mxu0 %v1077
        %v1188 = vpop.f32.mrf.mxu0
        %v1189 = vadd.f32 0.0, %v1188
        %1190 = vmatmul.f32.gmra.mxu0 %v1078
        %v1191 = vpop.f32.mrf.mxu0
        %v1192 = vadd.f32 0.0, %v1191
        %1193 = vmatmul.f32.gmra.mxu0 %v1079
        %v1194 = vpop.f32.mrf.mxu0
        %v1195 = vadd.f32 0.0, %v1194
        %1196 = vmatmul.f32.gmra.mxu0 %v1080
        %v1197 = vpop.f32.mrf.mxu0
        %v1198 = vadd.f32 0.0, %v1197
        %1199 = vmatmul.f32.gmra.mxu0 %v1081
        %v1200 = vpop.f32.mrf.mxu0
        %v1201 = vadd.f32 0.0, %v1200
        %1202 = vmatmul.f32.gmra.mxu0 %v1082
        %v1203 = vpop.f32.mrf.mxu0
        %v1204 = vadd.f32 0.0, %v1203
        %1205 = vmatmul.f32.gmra.mxu0 %v1083
        %v1206 = vpop.f32.mrf.mxu0
        %v1207 = vadd.f32 0.0, %v1206
        %1208 = vmatmul.f32.gmra.mxu0 %v1084
        %v1209 = vpop.f32.mrf.mxu0
        %v1210 = vadd.f32 0.0, %v1209
        %1211 = vmatmul.f32.gmra.mxu0 %v1085
        %v1212 = vpop.f32.mrf.mxu0
        %v1213 = vadd.f32 0.0, %v1212
        %1214 = vmatmul.f32.gmra.mxu0 %v1086
        %v1215 = vpop.f32.mrf.mxu0
        %v1216 = vadd.f32 0.0, %v1215
        %1217 = vmatmul.f32.gmra.mxu0 %v1087
        %v1218 = vpop.f32.mrf.mxu0
        %v1219 = vadd.f32 0.0, %v1218
        %1220 = vmatmul.f32.gmra.mxu0 %v1088
        %v1221 = vpop.f32.mrf.mxu0
        %v1222 = vadd.f32 0.0, %v1221
        %1223 = vmatmul.f32.gmra.mxu0 %v1089
        %v1224 = vpop.f32.mrf.mxu0
        %v1225 = vadd.f32 0.0, %v1224
        %1226 = vmatmul.f32.gmra.mxu0 %v1090
        %v1227 = vpop.f32.mrf.mxu0
        %v1228 = vadd.f32 0.0, %v1227
        %1229 = vmatmul.f32.gmra.mxu0 %v1091
        %v1230 = vpop.f32.mrf.mxu0
        %v1231 = vadd.f32 0.0, %v1230
        %1232 = vmatmul.f32.gmra.mxu0 %v1092
        %v1233 = vpop.f32.mrf.mxu0
        %v1234 = vadd.f32 0.0, %v1233
        %1235 = vmatmul.f32.gmra.mxu0 %v1093
        %v1236 = vpop.f32.mrf.mxu0
        %v1237 = vadd.f32 0.0, %v1236
        %1238 = vmatmul.f32.gmra.mxu0 %v1094
        %v1239 = vpop.f32.mrf.mxu0
        %v1240 = vadd.f32 0.0, %v1239
        %1241 = vmatmul.f32.gmra.mxu0 %v1095
        %v1242 = vpop.f32.mrf.mxu0
        %v1243 = vadd.f32 0.0, %v1242
        %1244 = vmatmul.f32.gmra.mxu0 %v1096
        %v1245 = vpop.f32.mrf.mxu0
        %v1246 = vadd.f32 0.0, %v1245
        %1247 = vmatmul.f32.gmra.mxu0 %v1097
        %v1248 = vpop.f32.mrf.mxu0
        %v1249 = vadd.f32 0.0, %v1248
        %1250 = vmatmul.f32.gmra.mxu0 %v1098
        %v1251 = vpop.f32.mrf.mxu0
        %v1252 = vadd.f32 0.0, %v1251
        %1253 = vmatmul.f32.gmra.mxu0 %v1099
        %v1254 = vpop.f32.mrf.mxu0
        %v1255 = vadd.f32 0.0, %v1254
        %1256 = vmatmul.f32.gmra.mxu0 %v1100
        %v1257 = vpop.f32.mrf.mxu0
        %v1258 = vadd.f32 0.0, %v1257
        %1259 = vmatmul.f32.gmra.mxu0 %v1101
        %v1260 = vpop.f32.mrf.mxu0
        %v1261 = vadd.f32 0.0, %v1260
        %1262 = vmatmul.f32.gmra.mxu0 %v1102
        %v1263 = vpop.f32.mrf.mxu0
        %v1264 = vadd.f32 0.0, %v1263
        %1265 = vmatmul.f32.gmra.mxu0 %v1103
        %v1266 = vpop.f32.mrf.mxu0
        %v1267 = vadd.f32 0.0, %v1266
        %1268 = vmatmul.f32.gmra.mxu0 %v1104
        %v1269 = vpop.f32.mrf.mxu0
        %v1270 = vadd.f32 0.0, %v1269
        %1271 = vdwg.mxu0
        %1272 = vmatpush.msra.mxu0 %v1137
        %1273 = vmatpush.msra.mxu0 %v1135
        %1274 = vmatpush.msra.mxu0 %v1133
        %1275 = vmatpush.msra.mxu0 %v1131
        %1276 = vmatpush.msra.mxu0 %v1129
        %1277 = vmatpush.msra.mxu0 %v1127
        %1278 = vmatpush.msra.mxu0 %v1125
        %1279 = vmatpush.msra.mxu0 %v1123
        %1280 = vmatpush.msra.mxu0 %v1121
        %1281 = vmatpush.msra.mxu0 %v1119
        %1282 = vmatpush.msra.mxu0 %v1117
        %1283 = vmatpush.msra.mxu0 %v1115
        %1284 = vmatpush.msra.mxu0 %v1113
        %1285 = vmatpush.msra.mxu0 %v1111
        %1286 = vmatpush.msra.mxu0 %v1109
        %1287 = vmatpush.msra.mxu0 %v1107
        %1288 = vmatmul.f32.gmra.mxu0 %v1066
        %v1289 = vpop.f32.mrf.mxu0
        %v1290 = vadd.f32 0.0, %v1289
        %1291 = vmatmul.f32.gmra.mxu0 %v1067
        %v1292 = vpop.f32.mrf.mxu0
        %v1293 = vadd.f32 0.0, %v1292
        %1294 = vmatmul.f32.gmra.mxu0 %v1068
        %v1295 = vpop.f32.mrf.mxu0
        %v1296 = vadd.f32 0.0, %v1295
        %1297 = vmatmul.f32.gmra.mxu0 %v1069
        %v1298 = vpop.f32.mrf.mxu0
        %v1299 = vadd.f32 0.0, %v1298
        %1300 = vmatmul.f32.gmra.mxu0 %v1070
        %v1301 = vpop.f32.mrf.mxu0
        %v1302 = vadd.f32 0.0, %v1301
        %1303 = vmatmul.f32.gmra.mxu0 %v1071
        %v1304 = vpop.f32.mrf.mxu0
        %v1305 = vadd.f32 0.0, %v1304
        %1306 = vmatmul.f32.gmra.mxu0 %v1072
        %v1307 = vpop.f32.mrf.mxu0
        %v1308 = vadd.f32 0.0, %v1307
        %1309 = vmatmul.f32.gmra.mxu0 %v1073
        %v1310 = vpop.f32.mrf.mxu0
        %v1311 = vadd.f32 0.0, %v1310
        %1312 = vmatmul.f32.gmra.mxu0 %v1074
        %v1313 = vpop.f32.mrf.mxu0
        %v1314 = vadd.f32 0.0, %v1313
        %1315 = vmatmul.f32.gmra.mxu0 %v1075
        %v1316 = vpop.f32.mrf.mxu0
        %v1317 = vadd.f32 0.0, %v1316
        %1318 = vmatmul.f32.gmra.mxu0 %v1076
        %v1319 = vpop.f32.mrf.mxu0
        %v1320 = vadd.f32 0.0, %v1319
        %1321 = vmatmul.f32.gmra.mxu0 %v1077
        %v1322 = vpop.f32.mrf.mxu0
        %v1323 = vadd.f32 0.0, %v1322
        %1324 = vmatmul.f32.gmra.mxu0 %v1078
        %v1325 = vpop.f32.mrf.mxu0
        %v1326 = vadd.f32 0.0, %v1325
        %1327 = vmatmul.f32.gmra.mxu0 %v1079
        %v1328 = vpop.f32.mrf.mxu0
        %v1329 = vadd.f32 0.0, %v1328
        %1330 = vmatmul.f32.gmra.mxu0 %v1080
        %v1331 = vpop.f32.mrf.mxu0
        %v1332 = vadd.f32 0.0, %v1331
        %1333 = vmatmul.f32.gmra.mxu0 %v1081
        %v1334 = vpop.f32.mrf.mxu0
        %v1335 = vadd.f32 0.0, %v1334
        %1336 = vmatmul.f32.gmra.mxu0 %v1082
        %v1337 = vpop.f32.mrf.mxu0
        %v1338 = vadd.f32 0.0, %v1337
        %1339 = vmatmul.f32.gmra.mxu0 %v1083
        %v1340 = vpop.f32.mrf.mxu0
        %v1341 = vadd.f32 0.0, %v1340
        %1342 = vmatmul.f32.gmra.mxu0 %v1084
        %v1343 = vpop.f32.mrf.mxu0
        %v1344 = vadd.f32 0.0, %v1343
        %1345 = vmatmul.f32.gmra.mxu0 %v1085
        %v1346 = vpop.f32.mrf.mxu0
        %v1347 = vadd.f32 0.0, %v1346
        %1348 = vmatmul.f32.gmra.mxu0 %v1086
        %v1349 = vpop.f32.mrf.mxu0
        %v1350 = vadd.f32 0.0, %v1349
        %1351 = vmatmul.f32.gmra.mxu0 %v1087
        %v1352 = vpop.f32.mrf.mxu0
        %v1353 = vadd.f32 0.0, %v1352
        %1354 = vmatmul.f32.gmra.mxu0 %v1088
        %v1355 = vpop.f32.mrf.mxu0
        %v1356 = vadd.f32 0.0, %v1355
        %1357 = vmatmul.f32.gmra.mxu0 %v1089
        %v1358 = vpop.f32.mrf.mxu0
        %v1359 = vadd.f32 0.0, %v1358
        %1360 = vmatmul.f32.gmra.mxu0 %v1090
        %v1361 = vpop.f32.mrf.mxu0
        %v1362 = vadd.f32 0.0, %v1361
        %1363 = vmatmul.f32.gmra.mxu0 %v1091
        %v1364 = vpop.f32.mrf.mxu0
        %v1365 = vadd.f32 0.0, %v1364
        %1366 = vmatmul.f32.gmra.mxu0 %v1092
        %v1367 = vpop.f32.mrf.mxu0
        %v1368 = vadd.f32 0.0, %v1367
        %1369 = vmatmul.f32.gmra.mxu0 %v1093
        %v1370 = vpop.f32.mrf.mxu0
        %v1371 = vadd.f32 0.0, %v1370
        %1372 = vmatmul.f32.gmra.mxu0 %v1094
        %v1373 = vpop.f32.mrf.mxu0
        %v1374 = vadd.f32 0.0, %v1373
        %1375 = vmatmul.f32.gmra.mxu0 %v1095
        %v1376 = vpop.f32.mrf.mxu0
        %v1377 = vadd.f32 0.0, %v1376
        %1378 = vmatmul.f32.gmra.mxu0 %v1096
        %v1379 = vpop.f32.mrf.mxu0
        %v1380 = vadd.f32 0.0, %v1379
        %1381 = vmatmul.f32.gmra.mxu0 %v1097
        %v1382 = vpop.f32.mrf.mxu0
        %v1383 = vadd.f32 0.0, %v1382
        %1384 = vmatmul.f32.gmra.mxu0 %v1098
        %v1385 = vpop.f32.mrf.mxu0
        %v1386 = vadd.f32 0.0, %v1385
        %1387 = vmatmul.f32.gmra.mxu0 %v1099
        %v1388 = vpop.f32.mrf.mxu0
        %v1389 = vadd.f32 0.0, %v1388
        %1390 = vmatmul.f32.gmra.mxu0 %v1100
        %v1391 = vpop.f32.mrf.mxu0
        %v1392 = vadd.f32 0.0, %v1391
        %1393 = vmatmul.f32.gmra.mxu0 %v1101
        %v1394 = vpop.f32.mrf.mxu0
        %v1395 = vadd.f32 0.0, %v1394
        %1396 = vmatmul.f32.gmra.mxu0 %v1102
        %v1397 = vpop.f32.mrf.mxu0
        %v1398 = vadd.f32 0.0, %v1397
        %1399 = vmatmul.f32.gmra.mxu0 %v1103
        %v1400 = vpop.f32.mrf.mxu0
        %v1401 = vadd.f32 0.0, %v1400
        %1402 = vmatmul.f32.gmra.mxu0 %v1104
        %v1403 = vpop.f32.mrf.mxu0
        %v1404 = vadd.f32 0.0, %v1403
        %1405 = vdwg.mxu0
        %v1406 = vadd.f32 %v816, %v1156
        %v1407 = vadd.f32 %v950, %v1290
        %v1408 = vadd.f32 %v819, %v1159
        %v1409 = vadd.f32 %v953, %v1293
        %v1410 = vadd.f32 %v822, %v1162
        %v1411 = vadd.f32 %v956, %v1296
        %v1412 = vadd.f32 %v825, %v1165
        %v1413 = vadd.f32 %v959, %v1299
        %v1414 = vadd.f32 %v828, %v1168
        %v1415 = vadd.f32 %v962, %v1302
        %v1416 = vadd.f32 %v831, %v1171
        %v1417 = vadd.f32 %v965, %v1305
        %v1418 = vadd.f32 %v834, %v1174
        %v1419 = vadd.f32 %v968, %v1308
        %v1420 = vadd.f32 %v837, %v1177
        %v1421 = vadd.f32 %v971, %v1311
        %v1422 = vadd.f32 %v840, %v1180
        %v1423 = vadd.f32 %v974, %v1314
        %v1424 = vadd.f32 %v843, %v1183
        %v1425 = vadd.f32 %v977, %v1317
        %v1426 = vadd.f32 %v846, %v1186
        %v1427 = vadd.f32 %v980, %v1320
        %v1428 = vadd.f32 %v849, %v1189
        %v1429 = vadd.f32 %v983, %v1323
        %v1430 = vadd.f32 %v852, %v1192
        %v1431 = vadd.f32 %v986, %v1326
        %v1432 = vadd.f32 %v855, %v1195
        %v1433 = vadd.f32 %v989, %v1329
        %v1434 = vadd.f32 %v858, %v1198
        %v1435 = vadd.f32 %v992, %v1332
        %v1436 = vadd.f32 %v861, %v1201
        %v1437 = vadd.f32 %v995, %v1335
        %v1438 = vadd.f32 %v864, %v1204
        %v1439 = vadd.f32 %v998, %v1338
        %v1440 = vadd.f32 %v867, %v1207
        %v1441 = vadd.f32 %v1001, %v1341
        %v1442 = vadd.f32 %v870, %v1210
        %v1443 = vadd.f32 %v1004, %v1344
        %v1444 = vadd.f32 %v873, %v1213
        %v1445 = vadd.f32 %v1007, %v1347
        %v1446 = vadd.f32 %v876, %v1216
        %v1447 = vadd.f32 %v1010, %v1350
        %v1448 = vadd.f32 %v879, %v1219
        %v1449 = vadd.f32 %v1013, %v1353
        %v1450 = vadd.f32 %v882, %v1222
        %v1451 = vadd.f32 %v1016, %v1356
        %v1452 = vadd.f32 %v885, %v1225
        %v1453 = vadd.f32 %v1019, %v1359
        %v1454 = vadd.f32 %v888, %v1228
        %v1455 = vadd.f32 %v1022, %v1362
        %v1456 = vadd.f32 %v891, %v1231
        %v1457 = vadd.f32 %v1025, %v1365
        %v1458 = vadd.f32 %v894, %v1234
        %v1459 = vadd.f32 %v1028, %v1368
        %v1460 = vadd.f32 %v897, %v1237
        %v1461 = vadd.f32 %v1031, %v1371
        %v1462 = vadd.f32 %v900, %v1240
        %v1463 = vadd.f32 %v1034, %v1374
        %v1464 = vadd.f32 %v903, %v1243
        %v1465 = vadd.f32 %v1037, %v1377
        %v1466 = vadd.f32 %v906, %v1246
        %v1467 = vadd.f32 %v1040, %v1380
        %v1468 = vadd.f32 %v909, %v1249
        %v1469 = vadd.f32 %v1043, %v1383
        %v1470 = vadd.f32 %v912, %v1252
        %v1471 = vadd.f32 %v1046, %v1386
        %v1472 = vadd.f32 %v915, %v1255
        %v1473 = vadd.f32 %v1049, %v1389
        %v1474 = vadd.f32 %v918, %v1258
        %v1475 = vadd.f32 %v1052, %v1392
        %v1476 = vadd.f32 %v921, %v1261
        %v1477 = vadd.f32 %v1055, %v1395
        %v1478 = vadd.f32 %v924, %v1264
        %v1479 = vadd.f32 %v1058, %v1398
        %v1480 = vadd.f32 %v927, %v1267
        %v1481 = vadd.f32 %v1061, %v1401
        %v1482 = vadd.f32 %v930, %v1270
        %v1483 = vadd.f32 %v1064, %v1404
        %v1484 = vld [vmem:[%s385 + $0x3] sm:$0xff]
        %v1485 = vld [vmem:[%s385 + $0xb] sm:$0xff]
        %v1486 = vld [vmem:[%s385 + $0x13] sm:$0xff]
        %v1487 = vld [vmem:[%s385 + $0x1b] sm:$0xff]
        %v1488 = vld [vmem:[%s385 + $0x23] sm:$0xff]
        %v1489 = vld [vmem:[%s385 + $0x2b] sm:$0xff]
        %v1490 = vld [vmem:[%s385 + $0x33] sm:$0xff]
        %v1491 = vld [vmem:[%s385 + $0x3b] sm:$0xff]
        %v1492 = vld [vmem:[%s385 + $0x43] sm:$0xff]
        %v1493 = vld [vmem:[%s385 + $0x4b] sm:$0xff]
        %v1494 = vld [vmem:[%s385 + $0x53] sm:$0xff]
        %v1495 = vld [vmem:[%s385 + $0x5b] sm:$0xff]
        %v1496 = vld [vmem:[%s385 + $0x63] sm:$0xff]
        %v1497 = vld [vmem:[%s385 + $0x6b] sm:$0xff]
        %v1498 = vld [vmem:[%s385 + $0x73] sm:$0xff]
        %v1499 = vld [vmem:[%s385 + $0x7b] sm:$0xff]
        %v1500 = vld [vmem:[%s385 + $0x83] sm:$0xff]
        %v1501 = vld [vmem:[%s385 + $0x8b] sm:$0xff]
        %v1502 = vld [vmem:[%s385 + $0x93] sm:$0xff]
        %v1503 = vld [vmem:[%s385 + $0x9b] sm:$0xff]
        %v1504 = vld [vmem:[%s385 + $0xa3] sm:$0xff]
        %v1505 = vld [vmem:[%s385 + $0xab] sm:$0xff]
        %v1506 = vld [vmem:[%s385 + $0xb3] sm:$0xff]
        %v1507 = vld [vmem:[%s385 + $0xbb] sm:$0xff]
        %v1508 = vld [vmem:[%s385 + $0xc3] sm:$0xff]
        %v1509 = vld [vmem:[%s385 + $0xcb] sm:$0xff]
        %v1510 = vld [vmem:[%s385 + $0xd3] sm:$0xff]
        %v1511 = vld [vmem:[%s385 + $0xdb] sm:$0xff]
        %v1512 = vld [vmem:[%s385 + $0xe3] sm:$0xff]
        %v1513 = vld [vmem:[%s385 + $0xeb] sm:$0xff]
        %v1514 = vld [vmem:[%s385 + $0xf3] sm:$0xff]
        %v1515 = vld [vmem:[%s385 + $0xfb] sm:$0xff]
        %v1516 = vld [vmem:[%s385 + $0x103] sm:$0xff]
        %v1517 = vld [vmem:[%s385 + $0x10b] sm:$0xff]
        %v1518 = vld [vmem:[%s385 + $0x113] sm:$0xff]
        %v1519 = vld [vmem:[%s385 + $0x11b] sm:$0xff]
        %v1520 = vld [vmem:[%s385 + $0x123] sm:$0xff]
        %v1521 = vld [vmem:[%s385 + $0x12b] sm:$0xff]
        %v1522 = vld [vmem:[%s385 + $0x133] sm:$0xff]
        %s1523 = scalar_lea.vmem %s1, 768
        %v1524 = vld [vmem:[%s1523] sm:$0xff]
        %v1525 = vld [vmem:[%s1523 + $0x8] sm:$0xff]
        %v1526 = vld [vmem:[%s1523 + $0x10] sm:$0xff]
        %v1527 = vld [vmem:[%s1523 + $0x18] sm:$0xff]
        %v1528 = vld [vmem:[%s1523 + $0x20] sm:$0xff]
        %v1529 = vld [vmem:[%s1523 + $0x28] sm:$0xff]
        %v1530 = vld [vmem:[%s1523 + $0x30] sm:$0xff]
        %v1531 = vld [vmem:[%s1523 + $0x38] sm:$0xff]
        %v1532 = vld [vmem:[%s1523 + $0x40] sm:$0xff]
        %v1533 = vld [vmem:[%s1523 + $0x48] sm:$0xff]
        %v1534 = vld [vmem:[%s1523 + $0x50] sm:$0xff]
        %v1535 = vld [vmem:[%s1523 + $0x58] sm:$0xff]
        %v1536 = vld [vmem:[%s1523 + $0x60] sm:$0xff]
        %v1537 = vld [vmem:[%s1523 + $0x68] sm:$0xff]
        %v1538 = vld [vmem:[%s1523 + $0x70] sm:$0xff]
        %v1539 = vld [vmem:[%s1523 + $0x78] sm:$0xff]
        %v1540 = vld [vmem:[%s1523 + $0x80] sm:$0xff]
        %v1541 = vld [vmem:[%s1523 + $0x88] sm:$0xff]
        %v1542 = vld [vmem:[%s1523 + $0x90] sm:$0xff]
        %v1543 = vld [vmem:[%s1523 + $0x98] sm:$0xff]
        %v1544 = vld [vmem:[%s1523 + $0xa0] sm:$0xff]
        %v1545 = vld [vmem:[%s1523 + $0xa8] sm:$0xff]
        %v1546 = vld [vmem:[%s1523 + $0xb0] sm:$0xff]
        %v1547 = vld [vmem:[%s1523 + $0xb8] sm:$0xff]
        %v1548 = vld [vmem:[%s1523 + $0xc0] sm:$0xff]
        %v1549 = vld [vmem:[%s1523 + $0xc8] sm:$0xff]
        %v1550 = vld [vmem:[%s1523 + $0xd0] sm:$0xff]
        %v1551 = vld [vmem:[%s1523 + $0xd8] sm:$0xff]
        %v1552 = vld [vmem:[%s1523 + $0xe0] sm:$0xff]
        %v1553 = vld [vmem:[%s1523 + $0xe8] sm:$0xff]
        %v1554 = vld [vmem:[%s1523 + $0xf0] sm:$0xff]
        %v1555 = vld [vmem:[%s1523 + $0xf8] sm:$0xff]
        %1556 = vmatpush.msra.mxu0 %v1554
        %1557 = vmatpush.msra.mxu0 %v1552
        %1558 = vmatpush.msra.mxu0 %v1550
        %1559 = vmatpush.msra.mxu0 %v1548
        %1560 = vmatpush.msra.mxu0 %v1546
        %1561 = vmatpush.msra.mxu0 %v1544
        %1562 = vmatpush.msra.mxu0 %v1542
        %1563 = vmatpush.msra.mxu0 %v1540
        %1564 = vmatpush.msra.mxu0 %v1538
        %1565 = vmatpush.msra.mxu0 %v1536
        %1566 = vmatpush.msra.mxu0 %v1534
        %1567 = vmatpush.msra.mxu0 %v1532
        %1568 = vmatpush.msra.mxu0 %v1530
        %1569 = vmatpush.msra.mxu0 %v1528
        %1570 = vmatpush.msra.mxu0 %v1526
        %1571 = vmatpush.msra.mxu0 %v1524
        %1572 = vmatmul.f32.gmra.mxu0 %v1484
        %v1573 = vpop.f32.mrf.mxu0
        %v1574 = vadd.f32 0.0, %v1573
        %1575 = vmatmul.f32.gmra.mxu0 %v1485
        %v1576 = vpop.f32.mrf.mxu0
        %v1577 = vadd.f32 0.0, %v1576
        %1578 = vmatmul.f32.gmra.mxu0 %v1486
        %v1579 = vpop.f32.mrf.mxu0
        %v1580 = vadd.f32 0.0, %v1579
        %1581 = vmatmul.f32.gmra.mxu0 %v1487
        %v1582 = vpop.f32.mrf.mxu0
        %v1583 = vadd.f32 0.0, %v1582
        %1584 = vmatmul.f32.gmra.mxu0 %v1488
        %v1585 = vpop.f32.mrf.mxu0
        %v1586 = vadd.f32 0.0, %v1585
        %1587 = vmatmul.f32.gmra.mxu0 %v1489
        %v1588 = vpop.f32.mrf.mxu0
        %v1589 = vadd.f32 0.0, %v1588
        %1590 = vmatmul.f32.gmra.mxu0 %v1490
        %v1591 = vpop.f32.mrf.mxu0
        %v1592 = vadd.f32 0.0, %v1591
        %1593 = vmatmul.f32.gmra.mxu0 %v1491
        %v1594 = vpop.f32.mrf.mxu0
        %v1595 = vadd.f32 0.0, %v1594
        %1596 = vmatmul.f32.gmra.mxu0 %v1492
        %v1597 = vpop.f32.mrf.mxu0
        %v1598 = vadd.f32 0.0, %v1597
        %1599 = vmatmul.f32.gmra.mxu0 %v1493
        %v1600 = vpop.f32.mrf.mxu0
        %v1601 = vadd.f32 0.0, %v1600
        %1602 = vmatmul.f32.gmra.mxu0 %v1494
        %v1603 = vpop.f32.mrf.mxu0
        %v1604 = vadd.f32 0.0, %v1603
        %1605 = vmatmul.f32.gmra.mxu0 %v1495
        %v1606 = vpop.f32.mrf.mxu0
        %v1607 = vadd.f32 0.0, %v1606
        %1608 = vmatmul.f32.gmra.mxu0 %v1496
        %v1609 = vpop.f32.mrf.mxu0
        %v1610 = vadd.f32 0.0, %v1609
        %1611 = vmatmul.f32.gmra.mxu0 %v1497
        %v1612 = vpop.f32.mrf.mxu0
        %v1613 = vadd.f32 0.0, %v1612
        %1614 = vmatmul.f32.gmra.mxu0 %v1498
        %v1615 = vpop.f32.mrf.mxu0
        %v1616 = vadd.f32 0.0, %v1615
        %1617 = vmatmul.f32.gmra.mxu0 %v1499
        %v1618 = vpop.f32.mrf.mxu0
        %v1619 = vadd.f32 0.0, %v1618
        %1620 = vmatmul.f32.gmra.mxu0 %v1500
        %v1621 = vpop.f32.mrf.mxu0
        %v1622 = vadd.f32 0.0, %v1621
        %1623 = vmatmul.f32.gmra.mxu0 %v1501
        %v1624 = vpop.f32.mrf.mxu0
        %v1625 = vadd.f32 0.0, %v1624
        %1626 = vmatmul.f32.gmra.mxu0 %v1502
        %v1627 = vpop.f32.mrf.mxu0
        %v1628 = vadd.f32 0.0, %v1627
        %1629 = vmatmul.f32.gmra.mxu0 %v1503
        %v1630 = vpop.f32.mrf.mxu0
        %v1631 = vadd.f32 0.0, %v1630
        %1632 = vmatmul.f32.gmra.mxu0 %v1504
        %v1633 = vpop.f32.mrf.mxu0
        %v1634 = vadd.f32 0.0, %v1633
        %1635 = vmatmul.f32.gmra.mxu0 %v1505
        %v1636 = vpop.f32.mrf.mxu0
        %v1637 = vadd.f32 0.0, %v1636
        %1638 = vmatmul.f32.gmra.mxu0 %v1506
        %v1639 = vpop.f32.mrf.mxu0
        %v1640 = vadd.f32 0.0, %v1639
        %1641 = vmatmul.f32.gmra.mxu0 %v1507
        %v1642 = vpop.f32.mrf.mxu0
        %v1643 = vadd.f32 0.0, %v1642
        %1644 = vmatmul.f32.gmra.mxu0 %v1508
        %v1645 = vpop.f32.mrf.mxu0
        %v1646 = vadd.f32 0.0, %v1645
        %1647 = vmatmul.f32.gmra.mxu0 %v1509
        %v1648 = vpop.f32.mrf.mxu0
        %v1649 = vadd.f32 0.0, %v1648
        %1650 = vmatmul.f32.gmra.mxu0 %v1510
        %v1651 = vpop.f32.mrf.mxu0
        %v1652 = vadd.f32 0.0, %v1651
        %1653 = vmatmul.f32.gmra.mxu0 %v1511
        %v1654 = vpop.f32.mrf.mxu0
        %v1655 = vadd.f32 0.0, %v1654
        %1656 = vmatmul.f32.gmra.mxu0 %v1512
        %v1657 = vpop.f32.mrf.mxu0
        %v1658 = vadd.f32 0.0, %v1657
        %1659 = vmatmul.f32.gmra.mxu0 %v1513
        %v1660 = vpop.f32.mrf.mxu0
        %v1661 = vadd.f32 0.0, %v1660
        %1662 = vmatmul.f32.gmra.mxu0 %v1514
        %v1663 = vpop.f32.mrf.mxu0
        %v1664 = vadd.f32 0.0, %v1663
        %1665 = vmatmul.f32.gmra.mxu0 %v1515
        %v1666 = vpop.f32.mrf.mxu0
        %v1667 = vadd.f32 0.0, %v1666
        %1668 = vmatmul.f32.gmra.mxu0 %v1516
        %v1669 = vpop.f32.mrf.mxu0
        %v1670 = vadd.f32 0.0, %v1669
        %1671 = vmatmul.f32.gmra.mxu0 %v1517
        %v1672 = vpop.f32.mrf.mxu0
        %v1673 = vadd.f32 0.0, %v1672
        %1674 = vmatmul.f32.gmra.mxu0 %v1518
        %v1675 = vpop.f32.mrf.mxu0
        %v1676 = vadd.f32 0.0, %v1675
        %1677 = vmatmul.f32.gmra.mxu0 %v1519
        %v1678 = vpop.f32.mrf.mxu0
        %v1679 = vadd.f32 0.0, %v1678
        %1680 = vmatmul.f32.gmra.mxu0 %v1520
        %v1681 = vpop.f32.mrf.mxu0
        %v1682 = vadd.f32 0.0, %v1681
        %1683 = vmatmul.f32.gmra.mxu0 %v1521
        %v1684 = vpop.f32.mrf.mxu0
        %v1685 = vadd.f32 0.0, %v1684
        %1686 = vmatmul.f32.gmra.mxu0 %v1522
        %v1687 = vpop.f32.mrf.mxu0
        %v1688 = vadd.f32 0.0, %v1687
        %1689 = vdwg.mxu0
        %1690 = vmatpush.msra.mxu0 %v1555
        %1691 = vmatpush.msra.mxu0 %v1553
        %1692 = vmatpush.msra.mxu0 %v1551
        %1693 = vmatpush.msra.mxu0 %v1549
        %1694 = vmatpush.msra.mxu0 %v1547
        %1695 = vmatpush.msra.mxu0 %v1545
        %1696 = vmatpush.msra.mxu0 %v1543
        %1697 = vmatpush.msra.mxu0 %v1541
        %1698 = vmatpush.msra.mxu0 %v1539
        %1699 = vmatpush.msra.mxu0 %v1537
        %1700 = vmatpush.msra.mxu0 %v1535
        %1701 = vmatpush.msra.mxu0 %v1533
        %1702 = vmatpush.msra.mxu0 %v1531
        %1703 = vmatpush.msra.mxu0 %v1529
        %1704 = vmatpush.msra.mxu0 %v1527
        %1705 = vmatpush.msra.mxu0 %v1525
        %1706 = vmatmul.f32.gmra.mxu0 %v1484
        %v1707 = vpop.f32.mrf.mxu0
        %v1708 = vadd.f32 0.0, %v1707
        %1709 = vmatmul.f32.gmra.mxu0 %v1485
        %v1710 = vpop.f32.mrf.mxu0
        %v1711 = vadd.f32 0.0, %v1710
        %1712 = vmatmul.f32.gmra.mxu0 %v1486
        %v1713 = vpop.f32.mrf.mxu0
        %v1714 = vadd.f32 0.0, %v1713
        %1715 = vmatmul.f32.gmra.mxu0 %v1487
        %v1716 = vpop.f32.mrf.mxu0
        %v1717 = vadd.f32 0.0, %v1716
        %1718 = vmatmul.f32.gmra.mxu0 %v1488
        %v1719 = vpop.f32.mrf.mxu0
        %v1720 = vadd.f32 0.0, %v1719
        %1721 = vmatmul.f32.gmra.mxu0 %v1489
        %v1722 = vpop.f32.mrf.mxu0
        %v1723 = vadd.f32 0.0, %v1722
        %1724 = vmatmul.f32.gmra.mxu0 %v1490
        %v1725 = vpop.f32.mrf.mxu0
        %v1726 = vadd.f32 0.0, %v1725
        %1727 = vmatmul.f32.gmra.mxu0 %v1491
        %v1728 = vpop.f32.mrf.mxu0
        %v1729 = vadd.f32 0.0, %v1728
        %1730 = vmatmul.f32.gmra.mxu0 %v1492
        %v1731 = vpop.f32.mrf.mxu0
        %v1732 = vadd.f32 0.0, %v1731
        %1733 = vmatmul.f32.gmra.mxu0 %v1493
        %v1734 = vpop.f32.mrf.mxu0
        %v1735 = vadd.f32 0.0, %v1734
        %1736 = vmatmul.f32.gmra.mxu0 %v1494
        %v1737 = vpop.f32.mrf.mxu0
        %v1738 = vadd.f32 0.0, %v1737
        %1739 = vmatmul.f32.gmra.mxu0 %v1495
        %v1740 = vpop.f32.mrf.mxu0
        %v1741 = vadd.f32 0.0, %v1740
        %1742 = vmatmul.f32.gmra.mxu0 %v1496
        %v1743 = vpop.f32.mrf.mxu0
        %v1744 = vadd.f32 0.0, %v1743
        %1745 = vmatmul.f32.gmra.mxu0 %v1497
        %v1746 = vpop.f32.mrf.mxu0
        %v1747 = vadd.f32 0.0, %v1746
        %1748 = vmatmul.f32.gmra.mxu0 %v1498
        %v1749 = vpop.f32.mrf.mxu0
        %v1750 = vadd.f32 0.0, %v1749
        %1751 = vmatmul.f32.gmra.mxu0 %v1499
        %v1752 = vpop.f32.mrf.mxu0
        %v1753 = vadd.f32 0.0, %v1752
        %1754 = vmatmul.f32.gmra.mxu0 %v1500
        %v1755 = vpop.f32.mrf.mxu0
        %v1756 = vadd.f32 0.0, %v1755
        %1757 = vmatmul.f32.gmra.mxu0 %v1501
        %v1758 = vpop.f32.mrf.mxu0
        %v1759 = vadd.f32 0.0, %v1758
        %1760 = vmatmul.f32.gmra.mxu0 %v1502
        %v1761 = vpop.f32.mrf.mxu0
        %v1762 = vadd.f32 0.0, %v1761
        %1763 = vmatmul.f32.gmra.mxu0 %v1503
        %v1764 = vpop.f32.mrf.mxu0
        %v1765 = vadd.f32 0.0, %v1764
        %1766 = vmatmul.f32.gmra.mxu0 %v1504
        %v1767 = vpop.f32.mrf.mxu0
        %v1768 = vadd.f32 0.0, %v1767
        %1769 = vmatmul.f32.gmra.mxu0 %v1505
        %v1770 = vpop.f32.mrf.mxu0
        %v1771 = vadd.f32 0.0, %v1770
        %1772 = vmatmul.f32.gmra.mxu0 %v1506
        %v1773 = vpop.f32.mrf.mxu0
        %v1774 = vadd.f32 0.0, %v1773
        %1775 = vmatmul.f32.gmra.mxu0 %v1507
        %v1776 = vpop.f32.mrf.mxu0
        %v1777 = vadd.f32 0.0, %v1776
        %1778 = vmatmul.f32.gmra.mxu0 %v1508
        %v1779 = vpop.f32.mrf.mxu0
        %v1780 = vadd.f32 0.0, %v1779
        %1781 = vmatmul.f32.gmra.mxu0 %v1509
        %v1782 = vpop.f32.mrf.mxu0
        %v1783 = vadd.f32 0.0, %v1782
        %1784 = vmatmul.f32.gmra.mxu0 %v1510
        %v1785 = vpop.f32.mrf.mxu0
        %v1786 = vadd.f32 0.0, %v1785
        %1787 = vmatmul.f32.gmra.mxu0 %v1511
        %v1788 = vpop.f32.mrf.mxu0
        %v1789 = vadd.f32 0.0, %v1788
        %1790 = vmatmul.f32.gmra.mxu0 %v1512
        %v1791 = vpop.f32.mrf.mxu0
        %v1792 = vadd.f32 0.0, %v1791
        %1793 = vmatmul.f32.gmra.mxu0 %v1513
        %v1794 = vpop.f32.mrf.mxu0
        %v1795 = vadd.f32 0.0, %v1794
        %1796 = vmatmul.f32.gmra.mxu0 %v1514
        %v1797 = vpop.f32.mrf.mxu0
        %v1798 = vadd.f32 0.0, %v1797
        %1799 = vmatmul.f32.gmra.mxu0 %v1515
        %v1800 = vpop.f32.mrf.mxu0
        %v1801 = vadd.f32 0.0, %v1800
        %1802 = vmatmul.f32.gmra.mxu0 %v1516
        %v1803 = vpop.f32.mrf.mxu0
        %v1804 = vadd.f32 0.0, %v1803
        %1805 = vmatmul.f32.gmra.mxu0 %v1517
        %v1806 = vpop.f32.mrf.mxu0
        %v1807 = vadd.f32 0.0, %v1806
        %1808 = vmatmul.f32.gmra.mxu0 %v1518
        %v1809 = vpop.f32.mrf.mxu0
        %v1810 = vadd.f32 0.0, %v1809
        %1811 = vmatmul.f32.gmra.mxu0 %v1519
        %v1812 = vpop.f32.mrf.mxu0
        %v1813 = vadd.f32 0.0, %v1812
        %1814 = vmatmul.f32.gmra.mxu0 %v1520
        %v1815 = vpop.f32.mrf.mxu0
        %v1816 = vadd.f32 0.0, %v1815
        %1817 = vmatmul.f32.gmra.mxu0 %v1521
        %v1818 = vpop.f32.mrf.mxu0
        %v1819 = vadd.f32 0.0, %v1818
        %1820 = vmatmul.f32.gmra.mxu0 %v1522
        %v1821 = vpop.f32.mrf.mxu0
        %v1822 = vadd.f32 0.0, %v1821
        %1823 = vdwg.mxu0
        %v1824 = vadd.f32 %v1406, %v1574
        %v1825 = vadd.f32 %v1407, %v1708
        %v1826 = vadd.f32 %v1408, %v1577
        %v1827 = vadd.f32 %v1409, %v1711
        %v1828 = vadd.f32 %v1410, %v1580
        %v1829 = vadd.f32 %v1411, %v1714
        %v1830 = vadd.f32 %v1412, %v1583
        %v1831 = vadd.f32 %v1413, %v1717
        %v1832 = vadd.f32 %v1414, %v1586
        %v1833 = vadd.f32 %v1415, %v1720
        %v1834 = vadd.f32 %v1416, %v1589
        %v1835 = vadd.f32 %v1417, %v1723
        %v1836 = vadd.f32 %v1418, %v1592
        %v1837 = vadd.f32 %v1419, %v1726
        %v1838 = vadd.f32 %v1420, %v1595
        %v1839 = vadd.f32 %v1421, %v1729
        %v1840 = vadd.f32 %v1422, %v1598
        %v1841 = vadd.f32 %v1423, %v1732
        %v1842 = vadd.f32 %v1424, %v1601
        %v1843 = vadd.f32 %v1425, %v1735
        %v1844 = vadd.f32 %v1426, %v1604
        %v1845 = vadd.f32 %v1427, %v1738
        %v1846 = vadd.f32 %v1428, %v1607
        %v1847 = vadd.f32 %v1429, %v1741
        %v1848 = vadd.f32 %v1430, %v1610
        %v1849 = vadd.f32 %v1431, %v1744
        %v1850 = vadd.f32 %v1432, %v1613
        %v1851 = vadd.f32 %v1433, %v1747
        %v1852 = vadd.f32 %v1434, %v1616
        %v1853 = vadd.f32 %v1435, %v1750
        %v1854 = vadd.f32 %v1436, %v1619
        %v1855 = vadd.f32 %v1437, %v1753
        %v1856 = vadd.f32 %v1438, %v1622
        %v1857 = vadd.f32 %v1439, %v1756
        %v1858 = vadd.f32 %v1440, %v1625
        %v1859 = vadd.f32 %v1441, %v1759
        %v1860 = vadd.f32 %v1442, %v1628
        %v1861 = vadd.f32 %v1443, %v1762
        %v1862 = vadd.f32 %v1444, %v1631
        %v1863 = vadd.f32 %v1445, %v1765
        %v1864 = vadd.f32 %v1446, %v1634
        %v1865 = vadd.f32 %v1447, %v1768
        %v1866 = vadd.f32 %v1448, %v1637
        %v1867 = vadd.f32 %v1449, %v1771
        %v1868 = vadd.f32 %v1450, %v1640
        %v1869 = vadd.f32 %v1451, %v1774
        %v1870 = vadd.f32 %v1452, %v1643
        %v1871 = vadd.f32 %v1453, %v1777
        %v1872 = vadd.f32 %v1454, %v1646
        %v1873 = vadd.f32 %v1455, %v1780
        %v1874 = vadd.f32 %v1456, %v1649
        %v1875 = vadd.f32 %v1457, %v1783
        %v1876 = vadd.f32 %v1458, %v1652
        %v1877 = vadd.f32 %v1459, %v1786
        %v1878 = vadd.f32 %v1460, %v1655
        %v1879 = vadd.f32 %v1461, %v1789
        %v1880 = vadd.f32 %v1462, %v1658
        %v1881 = vadd.f32 %v1463, %v1792
        %v1882 = vadd.f32 %v1464, %v1661
        %v1883 = vadd.f32 %v1465, %v1795
        %v1884 = vadd.f32 %v1466, %v1664
        %v1885 = vadd.f32 %v1467, %v1798
        %v1886 = vadd.f32 %v1468, %v1667
        %v1887 = vadd.f32 %v1469, %v1801
        %v1888 = vadd.f32 %v1470, %v1670
        %v1889 = vadd.f32 %v1471, %v1804
        %v1890 = vadd.f32 %v1472, %v1673
        %v1891 = vadd.f32 %v1473, %v1807
        %v1892 = vadd.f32 %v1474, %v1676
        %v1893 = vadd.f32 %v1475, %v1810
        %v1894 = vadd.f32 %v1476, %v1679
        %v1895 = vadd.f32 %v1477, %v1813
        %v1896 = vadd.f32 %v1478, %v1682
        %v1897 = vadd.f32 %v1479, %v1816
        %v1898 = vadd.f32 %v1480, %v1685
        %v1899 = vadd.f32 %v1481, %v1819
        %v1900 = vadd.f32 %v1482, %v1688
        %v1901 = vadd.f32 %v1483, %v1822
        %v1902 = vld [vmem:[%s385 + $0x4] sm:$0xff]
        %v1903 = vld [vmem:[%s385 + $0xc] sm:$0xff]
        %v1904 = vld [vmem:[%s385 + $0x14] sm:$0xff]
        %v1905 = vld [vmem:[%s385 + $0x1c] sm:$0xff]
        %v1906 = vld [vmem:[%s385 + $0x24] sm:$0xff]
        %v1907 = vld [vmem:[%s385 + $0x2c] sm:$0xff]
        %v1908 = vld [vmem:[%s385 + $0x34] sm:$0xff]
        %v1909 = vld [vmem:[%s385 + $0x3c] sm:$0xff]
        %v1910 = vld [vmem:[%s385 + $0x44] sm:$0xff]
        %v1911 = vld [vmem:[%s385 + $0x4c] sm:$0xff]
        %v1912 = vld [vmem:[%s385 + $0x54] sm:$0xff]
        %v1913 = vld [vmem:[%s385 + $0x5c] sm:$0xff]
        %v1914 = vld [vmem:[%s385 + $0x64] sm:$0xff]
        %v1915 = vld [vmem:[%s385 + $0x6c] sm:$0xff]
        %v1916 = vld [vmem:[%s385 + $0x74] sm:$0xff]
        %v1917 = vld [vmem:[%s385 + $0x7c] sm:$0xff]
        %v1918 = vld [vmem:[%s385 + $0x84] sm:$0xff]
        %v1919 = vld [vmem:[%s385 + $0x8c] sm:$0xff]
        %v1920 = vld [vmem:[%s385 + $0x94] sm:$0xff]
        %v1921 = vld [vmem:[%s385 + $0x9c] sm:$0xff]
        %v1922 = vld [vmem:[%s385 + $0xa4] sm:$0xff]
        %v1923 = vld [vmem:[%s385 + $0xac] sm:$0xff]
        %v1924 = vld [vmem:[%s385 + $0xb4] sm:$0xff]
        %v1925 = vld [vmem:[%s385 + $0xbc] sm:$0xff]
        %v1926 = vld [vmem:[%s385 + $0xc4] sm:$0xff]
        %v1927 = vld [vmem:[%s385 + $0xcc] sm:$0xff]
        %v1928 = vld [vmem:[%s385 + $0xd4] sm:$0xff]
        %v1929 = vld [vmem:[%s385 + $0xdc] sm:$0xff]
        %v1930 = vld [vmem:[%s385 + $0xe4] sm:$0xff]
        %v1931 = vld [vmem:[%s385 + $0xec] sm:$0xff]
        %v1932 = vld [vmem:[%s385 + $0xf4] sm:$0xff]
        %v1933 = vld [vmem:[%s385 + $0xfc] sm:$0xff]
        %v1934 = vld [vmem:[%s385 + $0x104] sm:$0xff]
        %v1935 = vld [vmem:[%s385 + $0x10c] sm:$0xff]
        %v1936 = vld [vmem:[%s385 + $0x114] sm:$0xff]
        %v1937 = vld [vmem:[%s385 + $0x11c] sm:$0xff]
        %v1938 = vld [vmem:[%s385 + $0x124] sm:$0xff]
        %v1939 = vld [vmem:[%s385 + $0x12c] sm:$0xff]
        %v1940 = vld [vmem:[%s385 + $0x134] sm:$0xff]
        %s1941 = scalar_lea.vmem %s1, 1024
        %v1942 = vld [vmem:[%s1941] sm:$0xff]
        %v1943 = vld [vmem:[%s1941 + $0x8] sm:$0xff]
        %v1944 = vld [vmem:[%s1941 + $0x10] sm:$0xff]
        %v1945 = vld [vmem:[%s1941 + $0x18] sm:$0xff]
        %v1946 = vld [vmem:[%s1941 + $0x20] sm:$0xff]
        %v1947 = vld [vmem:[%s1941 + $0x28] sm:$0xff]
        %v1948 = vld [vmem:[%s1941 + $0x30] sm:$0xff]
        %v1949 = vld [vmem:[%s1941 + $0x38] sm:$0xff]
        %v1950 = vld [vmem:[%s1941 + $0x40] sm:$0xff]
        %v1951 = vld [vmem:[%s1941 + $0x48] sm:$0xff]
        %v1952 = vld [vmem:[%s1941 + $0x50] sm:$0xff]
        %v1953 = vld [vmem:[%s1941 + $0x58] sm:$0xff]
        %v1954 = vld [vmem:[%s1941 + $0x60] sm:$0xff]
        %v1955 = vld [vmem:[%s1941 + $0x68] sm:$0xff]
        %v1956 = vld [vmem:[%s1941 + $0x70] sm:$0xff]
        %v1957 = vld [vmem:[%s1941 + $0x78] sm:$0xff]
        %v1958 = vld [vmem:[%s1941 + $0x80] sm:$0xff]
        %v1959 = vld [vmem:[%s1941 + $0x88] sm:$0xff]
        %v1960 = vld [vmem:[%s1941 + $0x90] sm:$0xff]
        %v1961 = vld [vmem:[%s1941 + $0x98] sm:$0xff]
        %v1962 = vld [vmem:[%s1941 + $0xa0] sm:$0xff]
        %v1963 = vld [vmem:[%s1941 + $0xa8] sm:$0xff]
        %v1964 = vld [vmem:[%s1941 + $0xb0] sm:$0xff]
        %v1965 = vld [vmem:[%s1941 + $0xb8] sm:$0xff]
        %v1966 = vld [vmem:[%s1941 + $0xc0] sm:$0xff]
        %v1967 = vld [vmem:[%s1941 + $0xc8] sm:$0xff]
        %v1968 = vld [vmem:[%s1941 + $0xd0] sm:$0xff]
        %v1969 = vld [vmem:[%s1941 + $0xd8] sm:$0xff]
        %v1970 = vld [vmem:[%s1941 + $0xe0] sm:$0xff]
        %v1971 = vld [vmem:[%s1941 + $0xe8] sm:$0xff]
        %v1972 = vld [vmem:[%s1941 + $0xf0] sm:$0xff]
        %v1973 = vld [vmem:[%s1941 + $0xf8] sm:$0xff]
        %1974 = vmatpush.msra.mxu0 %v1972
        %1975 = vmatpush.msra.mxu0 %v1970
        %1976 = vmatpush.msra.mxu0 %v1968
        %1977 = vmatpush.msra.mxu0 %v1966
        %1978 = vmatpush.msra.mxu0 %v1964
        %1979 = vmatpush.msra.mxu0 %v1962
        %1980 = vmatpush.msra.mxu0 %v1960
        %1981 = vmatpush.msra.mxu0 %v1958
        %1982 = vmatpush.msra.mxu0 %v1956
        %1983 = vmatpush.msra.mxu0 %v1954
        %1984 = vmatpush.msra.mxu0 %v1952
        %1985 = vmatpush.msra.mxu0 %v1950
        %1986 = vmatpush.msra.mxu0 %v1948
        %1987 = vmatpush.msra.mxu0 %v1946
        %1988 = vmatpush.msra.mxu0 %v1944
        %1989 = vmatpush.msra.mxu0 %v1942
        %1990 = vmatmul.f32.gmra.mxu0 %v1902
        %v1991 = vpop.f32.mrf.mxu0
        %v1992 = vadd.f32 0.0, %v1991
        %1993 = vmatmul.f32.gmra.mxu0 %v1903
        %v1994 = vpop.f32.mrf.mxu0
        %v1995 = vadd.f32 0.0, %v1994
        %1996 = vmatmul.f32.gmra.mxu0 %v1904
        %v1997 = vpop.f32.mrf.mxu0
        %v1998 = vadd.f32 0.0, %v1997
        %1999 = vmatmul.f32.gmra.mxu0 %v1905
        %v2000 = vpop.f32.mrf.mxu0
        %v2001 = vadd.f32 0.0, %v2000
        %2002 = vmatmul.f32.gmra.mxu0 %v1906
        %v2003 = vpop.f32.mrf.mxu0
        %v2004 = vadd.f32 0.0, %v2003
        %2005 = vmatmul.f32.gmra.mxu0 %v1907
        %v2006 = vpop.f32.mrf.mxu0
        %v2007 = vadd.f32 0.0, %v2006
        %2008 = vmatmul.f32.gmra.mxu0 %v1908
        %v2009 = vpop.f32.mrf.mxu0
        %v2010 = vadd.f32 0.0, %v2009
        %2011 = vmatmul.f32.gmra.mxu0 %v1909
        %v2012 = vpop.f32.mrf.mxu0
        %v2013 = vadd.f32 0.0, %v2012
        %2014 = vmatmul.f32.gmra.mxu0 %v1910
        %v2015 = vpop.f32.mrf.mxu0
        %v2016 = vadd.f32 0.0, %v2015
        %2017 = vmatmul.f32.gmra.mxu0 %v1911
        %v2018 = vpop.f32.mrf.mxu0
        %v2019 = vadd.f32 0.0, %v2018
        %2020 = vmatmul.f32.gmra.mxu0 %v1912
        %v2021 = vpop.f32.mrf.mxu0
        %v2022 = vadd.f32 0.0, %v2021
        %2023 = vmatmul.f32.gmra.mxu0 %v1913
        %v2024 = vpop.f32.mrf.mxu0
        %v2025 = vadd.f32 0.0, %v2024
        %2026 = vmatmul.f32.gmra.mxu0 %v1914
        %v2027 = vpop.f32.mrf.mxu0
        %v2028 = vadd.f32 0.0, %v2027
        %2029 = vmatmul.f32.gmra.mxu0 %v1915
        %v2030 = vpop.f32.mrf.mxu0
        %v2031 = vadd.f32 0.0, %v2030
        %2032 = vmatmul.f32.gmra.mxu0 %v1916
        %v2033 = vpop.f32.mrf.mxu0
        %v2034 = vadd.f32 0.0, %v2033
        %2035 = vmatmul.f32.gmra.mxu0 %v1917
        %v2036 = vpop.f32.mrf.mxu0
        %v2037 = vadd.f32 0.0, %v2036
        %2038 = vmatmul.f32.gmra.mxu0 %v1918
        %v2039 = vpop.f32.mrf.mxu0
        %v2040 = vadd.f32 0.0, %v2039
        %2041 = vmatmul.f32.gmra.mxu0 %v1919
        %v2042 = vpop.f32.mrf.mxu0
        %v2043 = vadd.f32 0.0, %v2042
        %2044 = vmatmul.f32.gmra.mxu0 %v1920
        %v2045 = vpop.f32.mrf.mxu0
        %v2046 = vadd.f32 0.0, %v2045
        %2047 = vmatmul.f32.gmra.mxu0 %v1921
        %v2048 = vpop.f32.mrf.mxu0
        %v2049 = vadd.f32 0.0, %v2048
        %2050 = vmatmul.f32.gmra.mxu0 %v1922
        %v2051 = vpop.f32.mrf.mxu0
        %v2052 = vadd.f32 0.0, %v2051
        %2053 = vmatmul.f32.gmra.mxu0 %v1923
        %v2054 = vpop.f32.mrf.mxu0
        %v2055 = vadd.f32 0.0, %v2054
        %2056 = vmatmul.f32.gmra.mxu0 %v1924
        %v2057 = vpop.f32.mrf.mxu0
        %v2058 = vadd.f32 0.0, %v2057
        %2059 = vmatmul.f32.gmra.mxu0 %v1925
        %v2060 = vpop.f32.mrf.mxu0
        %v2061 = vadd.f32 0.0, %v2060
        %2062 = vmatmul.f32.gmra.mxu0 %v1926
        %v2063 = vpop.f32.mrf.mxu0
        %v2064 = vadd.f32 0.0, %v2063
        %2065 = vmatmul.f32.gmra.mxu0 %v1927
        %v2066 = vpop.f32.mrf.mxu0
        %v2067 = vadd.f32 0.0, %v2066
        %2068 = vmatmul.f32.gmra.mxu0 %v1928
        %v2069 = vpop.f32.mrf.mxu0
        %v2070 = vadd.f32 0.0, %v2069
        %2071 = vmatmul.f32.gmra.mxu0 %v1929
        %v2072 = vpop.f32.mrf.mxu0
        %v2073 = vadd.f32 0.0, %v2072
        %2074 = vmatmul.f32.gmra.mxu0 %v1930
        %v2075 = vpop.f32.mrf.mxu0
        %v2076 = vadd.f32 0.0, %v2075
        %2077 = vmatmul.f32.gmra.mxu0 %v1931
        %v2078 = vpop.f32.mrf.mxu0
        %v2079 = vadd.f32 0.0, %v2078
        %2080 = vmatmul.f32.gmra.mxu0 %v1932
        %v2081 = vpop.f32.mrf.mxu0
        %v2082 = vadd.f32 0.0, %v2081
        %2083 = vmatmul.f32.gmra.mxu0 %v1933
        %v2084 = vpop.f32.mrf.mxu0
        %v2085 = vadd.f32 0.0, %v2084
        %2086 = vmatmul.f32.gmra.mxu0 %v1934
        %v2087 = vpop.f32.mrf.mxu0
        %v2088 = vadd.f32 0.0, %v2087
        %2089 = vmatmul.f32.gmra.mxu0 %v1935
        %v2090 = vpop.f32.mrf.mxu0
        %v2091 = vadd.f32 0.0, %v2090
        %2092 = vmatmul.f32.gmra.mxu0 %v1936
        %v2093 = vpop.f32.mrf.mxu0
        %v2094 = vadd.f32 0.0, %v2093
        %2095 = vmatmul.f32.gmra.mxu0 %v1937
        %v2096 = vpop.f32.mrf.mxu0
        %v2097 = vadd.f32 0.0, %v2096
        %2098 = vmatmul.f32.gmra.mxu0 %v1938
        %v2099 = vpop.f32.mrf.mxu0
        %v2100 = vadd.f32 0.0, %v2099
        %2101 = vmatmul.f32.gmra.mxu0 %v1939
        %v2102 = vpop.f32.mrf.mxu0
        %v2103 = vadd.f32 0.0, %v2102
        %2104 = vmatmul.f32.gmra.mxu0 %v1940
        %v2105 = vpop.f32.mrf.mxu0
        %v2106 = vadd.f32 0.0, %v2105
        %2107 = vdwg.mxu0
        %2108 = vmatpush.msra.mxu0 %v1973
        %2109 = vmatpush.msra.mxu0 %v1971
        %2110 = vmatpush.msra.mxu0 %v1969
        %2111 = vmatpush.msra.mxu0 %v1967
        %2112 = vmatpush.msra.mxu0 %v1965
        %2113 = vmatpush.msra.mxu0 %v1963
        %2114 = vmatpush.msra.mxu0 %v1961
        %2115 = vmatpush.msra.mxu0 %v1959
        %2116 = vmatpush.msra.mxu0 %v1957
        %2117 = vmatpush.msra.mxu0 %v1955
        %2118 = vmatpush.msra.mxu0 %v1953
        %2119 = vmatpush.msra.mxu0 %v1951
        %2120 = vmatpush.msra.mxu0 %v1949
        %2121 = vmatpush.msra.mxu0 %v1947
        %2122 = vmatpush.msra.mxu0 %v1945
        %2123 = vmatpush.msra.mxu0 %v1943
        %2124 = vmatmul.f32.gmra.mxu0 %v1902
        %v2125 = vpop.f32.mrf.mxu0
        %v2126 = vadd.f32 0.0, %v2125
        %2127 = vmatmul.f32.gmra.mxu0 %v1903
        %v2128 = vpop.f32.mrf.mxu0
        %v2129 = vadd.f32 0.0, %v2128
        %2130 = vmatmul.f32.gmra.mxu0 %v1904
        %v2131 = vpop.f32.mrf.mxu0
        %v2132 = vadd.f32 0.0, %v2131
        %2133 = vmatmul.f32.gmra.mxu0 %v1905
        %v2134 = vpop.f32.mrf.mxu0
        %v2135 = vadd.f32 0.0, %v2134
        %2136 = vmatmul.f32.gmra.mxu0 %v1906
        %v2137 = vpop.f32.mrf.mxu0
        %v2138 = vadd.f32 0.0, %v2137
        %2139 = vmatmul.f32.gmra.mxu0 %v1907
        %v2140 = vpop.f32.mrf.mxu0
        %v2141 = vadd.f32 0.0, %v2140
        %2142 = vmatmul.f32.gmra.mxu0 %v1908
        %v2143 = vpop.f32.mrf.mxu0
        %v2144 = vadd.f32 0.0, %v2143
        %2145 = vmatmul.f32.gmra.mxu0 %v1909
        %v2146 = vpop.f32.mrf.mxu0
        %v2147 = vadd.f32 0.0, %v2146
        %2148 = vmatmul.f32.gmra.mxu0 %v1910
        %v2149 = vpop.f32.mrf.mxu0
        %v2150 = vadd.f32 0.0, %v2149
        %2151 = vmatmul.f32.gmra.mxu0 %v1911
        %v2152 = vpop.f32.mrf.mxu0
        %v2153 = vadd.f32 0.0, %v2152
        %2154 = vmatmul.f32.gmra.mxu0 %v1912
        %v2155 = vpop.f32.mrf.mxu0
        %v2156 = vadd.f32 0.0, %v2155
        %2157 = vmatmul.f32.gmra.mxu0 %v1913
        %v2158 = vpop.f32.mrf.mxu0
        %v2159 = vadd.f32 0.0, %v2158
        %2160 = vmatmul.f32.gmra.mxu0 %v1914
        %v2161 = vpop.f32.mrf.mxu0
        %v2162 = vadd.f32 0.0, %v2161
        %2163 = vmatmul.f32.gmra.mxu0 %v1915
        %v2164 = vpop.f32.mrf.mxu0
        %v2165 = vadd.f32 0.0, %v2164
        %2166 = vmatmul.f32.gmra.mxu0 %v1916
        %v2167 = vpop.f32.mrf.mxu0
        %v2168 = vadd.f32 0.0, %v2167
        %2169 = vmatmul.f32.gmra.mxu0 %v1917
        %v2170 = vpop.f32.mrf.mxu0
        %v2171 = vadd.f32 0.0, %v2170
        %2172 = vmatmul.f32.gmra.mxu0 %v1918
        %v2173 = vpop.f32.mrf.mxu0
        %v2174 = vadd.f32 0.0, %v2173
        %2175 = vmatmul.f32.gmra.mxu0 %v1919
        %v2176 = vpop.f32.mrf.mxu0
        %v2177 = vadd.f32 0.0, %v2176
        %2178 = vmatmul.f32.gmra.mxu0 %v1920
        %v2179 = vpop.f32.mrf.mxu0
        %v2180 = vadd.f32 0.0, %v2179
        %2181 = vmatmul.f32.gmra.mxu0 %v1921
        %v2182 = vpop.f32.mrf.mxu0
        %v2183 = vadd.f32 0.0, %v2182
        %2184 = vmatmul.f32.gmra.mxu0 %v1922
        %v2185 = vpop.f32.mrf.mxu0
        %v2186 = vadd.f32 0.0, %v2185
        %2187 = vmatmul.f32.gmra.mxu0 %v1923
        %v2188 = vpop.f32.mrf.mxu0
        %v2189 = vadd.f32 0.0, %v2188
        %2190 = vmatmul.f32.gmra.mxu0 %v1924
        %v2191 = vpop.f32.mrf.mxu0
        %v2192 = vadd.f32 0.0, %v2191
        %2193 = vmatmul.f32.gmra.mxu0 %v1925
        %v2194 = vpop.f32.mrf.mxu0
        %v2195 = vadd.f32 0.0, %v2194
        %2196 = vmatmul.f32.gmra.mxu0 %v1926
        %v2197 = vpop.f32.mrf.mxu0
        %v2198 = vadd.f32 0.0, %v2197
        %2199 = vmatmul.f32.gmra.mxu0 %v1927
        %v2200 = vpop.f32.mrf.mxu0
        %v2201 = vadd.f32 0.0, %v2200
        %2202 = vmatmul.f32.gmra.mxu0 %v1928
        %v2203 = vpop.f32.mrf.mxu0
        %v2204 = vadd.f32 0.0, %v2203
        %2205 = vmatmul.f32.gmra.mxu0 %v1929
        %v2206 = vpop.f32.mrf.mxu0
        %v2207 = vadd.f32 0.0, %v2206
        %2208 = vmatmul.f32.gmra.mxu0 %v1930
        %v2209 = vpop.f32.mrf.mxu0
        %v2210 = vadd.f32 0.0, %v2209
        %2211 = vmatmul.f32.gmra.mxu0 %v1931
        %v2212 = vpop.f32.mrf.mxu0
        %v2213 = vadd.f32 0.0, %v2212
        %2214 = vmatmul.f32.gmra.mxu0 %v1932
        %v2215 = vpop.f32.mrf.mxu0
        %v2216 = vadd.f32 0.0, %v2215
        %2217 = vmatmul.f32.gmra.mxu0 %v1933
        %v2218 = vpop.f32.mrf.mxu0
        %v2219 = vadd.f32 0.0, %v2218
        %2220 = vmatmul.f32.gmra.mxu0 %v1934
        %v2221 = vpop.f32.mrf.mxu0
        %v2222 = vadd.f32 0.0, %v2221
        %2223 = vmatmul.f32.gmra.mxu0 %v1935
        %v2224 = vpop.f32.mrf.mxu0
        %v2225 = vadd.f32 0.0, %v2224
        %2226 = vmatmul.f32.gmra.mxu0 %v1936
        %v2227 = vpop.f32.mrf.mxu0
        %v2228 = vadd.f32 0.0, %v2227
        %2229 = vmatmul.f32.gmra.mxu0 %v1937
        %v2230 = vpop.f32.mrf.mxu0
        %v2231 = vadd.f32 0.0, %v2230
        %2232 = vmatmul.f32.gmra.mxu0 %v1938
        %v2233 = vpop.f32.mrf.mxu0
        %v2234 = vadd.f32 0.0, %v2233
        %2235 = vmatmul.f32.gmra.mxu0 %v1939
        %v2236 = vpop.f32.mrf.mxu0
        %v2237 = vadd.f32 0.0, %v2236
        %2238 = vmatmul.f32.gmra.mxu0 %v1940
        %v2239 = vpop.f32.mrf.mxu0
        %v2240 = vadd.f32 0.0, %v2239
        %2241 = vdwg.mxu0
        %v2242 = vadd.f32 %v1824, %v1992
        %v2243 = vadd.f32 %v1825, %v2126
        %v2244 = vadd.f32 %v1826, %v1995
        %v2245 = vadd.f32 %v1827, %v2129
        %v2246 = vadd.f32 %v1828, %v1998
        %v2247 = vadd.f32 %v1829, %v2132
        %v2248 = vadd.f32 %v1830, %v2001
        %v2249 = vadd.f32 %v1831, %v2135
        %v2250 = vadd.f32 %v1832, %v2004
        %v2251 = vadd.f32 %v1833, %v2138
        %v2252 = vadd.f32 %v1834, %v2007
        %v2253 = vadd.f32 %v1835, %v2141
        %v2254 = vadd.f32 %v1836, %v2010
        %v2255 = vadd.f32 %v1837, %v2144
        %v2256 = vadd.f32 %v1838, %v2013
        %v2257 = vadd.f32 %v1839, %v2147
        %v2258 = vadd.f32 %v1840, %v2016
        %v2259 = vadd.f32 %v1841, %v2150
        %v2260 = vadd.f32 %v1842, %v2019
        %v2261 = vadd.f32 %v1843, %v2153
        %v2262 = vadd.f32 %v1844, %v2022
        %v2263 = vadd.f32 %v1845, %v2156
        %v2264 = vadd.f32 %v1846, %v2025
        %v2265 = vadd.f32 %v1847, %v2159
        %v2266 = vadd.f32 %v1848, %v2028
        %v2267 = vadd.f32 %v1849, %v2162
        %v2268 = vadd.f32 %v1850, %v2031
        %v2269 = vadd.f32 %v1851, %v2165
        %v2270 = vadd.f32 %v1852, %v2034
        %v2271 = vadd.f32 %v1853, %v2168
        %v2272 = vadd.f32 %v1854, %v2037
        %v2273 = vadd.f32 %v1855, %v2171
        %v2274 = vadd.f32 %v1856, %v2040
        %v2275 = vadd.f32 %v1857, %v2174
        %v2276 = vadd.f32 %v1858, %v2043
        %v2277 = vadd.f32 %v1859, %v2177
        %v2278 = vadd.f32 %v1860, %v2046
        %v2279 = vadd.f32 %v1861, %v2180
        %v2280 = vadd.f32 %v1862, %v2049
        %v2281 = vadd.f32 %v1863, %v2183
        %v2282 = vadd.f32 %v1864, %v2052
        %v2283 = vadd.f32 %v1865, %v2186
        %v2284 = vadd.f32 %v1866, %v2055
        %v2285 = vadd.f32 %v1867, %v2189
        %v2286 = vadd.f32 %v1868, %v2058
        %v2287 = vadd.f32 %v1869, %v2192
        %v2288 = vadd.f32 %v1870, %v2061
        %v2289 = vadd.f32 %v1871, %v2195
        %v2290 = vadd.f32 %v1872, %v2064
        %v2291 = vadd.f32 %v1873, %v2198
        %v2292 = vadd.f32 %v1874, %v2067
        %v2293 = vadd.f32 %v1875, %v2201
        %v2294 = vadd.f32 %v1876, %v2070
        %v2295 = vadd.f32 %v1877, %v2204
        %v2296 = vadd.f32 %v1878, %v2073
        %v2297 = vadd.f32 %v1879, %v2207
        %v2298 = vadd.f32 %v1880, %v2076
        %v2299 = vadd.f32 %v1881, %v2210
        %v2300 = vadd.f32 %v1882, %v2079
        %v2301 = vadd.f32 %v1883, %v2213
        %v2302 = vadd.f32 %v1884, %v2082
        %v2303 = vadd.f32 %v1885, %v2216
        %v2304 = vadd.f32 %v1886, %v2085
        %v2305 = vadd.f32 %v1887, %v2219
        %v2306 = vadd.f32 %v1888, %v2088
        %v2307 = vadd.f32 %v1889, %v2222
        %v2308 = vadd.f32 %v1890, %v2091
        %v2309 = vadd.f32 %v1891, %v2225
        %v2310 = vadd.f32 %v1892, %v2094
        %v2311 = vadd.f32 %v1893, %v2228
        %v2312 = vadd.f32 %v1894, %v2097
        %v2313 = vadd.f32 %v1895, %v2231
        %v2314 = vadd.f32 %v1896, %v2100
        %v2315 = vadd.f32 %v1897, %v2234
        %v2316 = vadd.f32 %v1898, %v2103
        %v2317 = vadd.f32 %v1899, %v2237
        %v2318 = vadd.f32 %v1900, %v2106
        %v2319 = vadd.f32 %v1901, %v2240
        %v2320 = vmax.f32 %v2242, %v2243
        %v2321 = vmax.f32 %v2244, %v2245
        %v2322 = vmax.f32 %v2246, %v2247
        %v2323 = vmax.f32 %v2248, %v2249
        %v2324 = vmax.f32 %v2250, %v2251
        %v2325 = vmax.f32 %v2252, %v2253
        %v2326 = vmax.f32 %v2254, %v2255
        %v2327 = vmax.f32 %v2256, %v2257
        %v2328 = vmax.f32 %v2258, %v2259
        %v2329 = vmax.f32 %v2260, %v2261
        %v2330 = vmax.f32 %v2262, %v2263
        %v2331 = vmax.f32 %v2264, %v2265
        %v2332 = vmax.f32 %v2266, %v2267
        %v2333 = vmax.f32 %v2268, %v2269
        %v2334 = vmax.f32 %v2270, %v2271
        %v2335 = vmax.f32 %v2272, %v2273
        %v2336 = vmax.f32 %v2274, %v2275
        %v2337 = vmax.f32 %v2276, %v2277
        %v2338 = vmax.f32 %v2278, %v2279
        %v2339 = vmax.f32 %v2280, %v2281
        %v2340 = vmax.f32 %v2282, %v2283
        %v2341 = vmax.f32 %v2284, %v2285
        %v2342 = vmax.f32 %v2286, %v2287
        %v2343 = vmax.f32 %v2288, %v2289
        %v2344 = vmax.f32 %v2290, %v2291
        %v2345 = vmax.f32 %v2292, %v2293
        %v2346 = vmax.f32 %v2294, %v2295
        %v2347 = vmax.f32 %v2296, %v2297
        %v2348 = vmax.f32 %v2298, %v2299
        %v2349 = vmax.f32 %v2300, %v2301
        %v2350 = vmax.f32 %v2302, %v2303
        %v2351 = vmax.f32 %v2304, %v2305
        %v2352 = vmax.f32 %v2306, %v2307
        %v2353 = vmax.f32 %v2308, %v2309
        %v2354 = vmax.f32 %v2310, %v2311
        %v2355 = vmax.f32 %v2312, %v2313
        %v2356 = vmax.f32 %v2314, %v2315
        %v2357 = vmax.f32 %v2316, %v2317
        %v2358 = vmax.f32 %v2318, %v2319
        %v2359 = vld [vmem:[%s2] sm:$0x1]
        %v2361 = vperm.slane %v2359, 0
        %v2363 = vadd.f32 %v2320, %v2361
        %v2364 = vadd.f32 %v2321, %v2361
        %v2365 = vadd.f32 %v2322, %v2361
        %v2366 = vadd.f32 %v2323, %v2361
        %v2367 = vadd.f32 %v2324, %v2361
        %v2368 = vadd.f32 %v2325, %v2361
        %v2369 = vadd.f32 %v2326, %v2361
        %v2370 = vadd.f32 %v2327, %v2361
        %v2371 = vadd.f32 %v2328, %v2361
        %v2372 = vadd.f32 %v2329, %v2361
        %v2373 = vadd.f32 %v2330, %v2361
        %v2374 = vadd.f32 %v2331, %v2361
        %v2375 = vadd.f32 %v2332, %v2361
        %v2376 = vadd.f32 %v2333, %v2361
        %v2377 = vadd.f32 %v2334, %v2361
        %v2378 = vadd.f32 %v2335, %v2361
        %v2379 = vadd.f32 %v2336, %v2361
        %v2380 = vadd.f32 %v2337, %v2361
        %v2381 = vadd.f32 %v2338, %v2361
        %v2382 = vadd.f32 %v2339, %v2361
        %v2383 = vadd.f32 %v2340, %v2361
        %v2384 = vadd.f32 %v2341, %v2361
        %v2385 = vadd.f32 %v2342, %v2361
        %v2386 = vadd.f32 %v2343, %v2361
        %v2387 = vadd.f32 %v2344, %v2361
        %v2388 = vadd.f32 %v2345, %v2361
        %v2389 = vadd.f32 %v2346, %v2361
        %v2390 = vadd.f32 %v2347, %v2361
        %v2391 = vadd.f32 %v2348, %v2361
        %v2392 = vadd.f32 %v2349, %v2361
        %v2393 = vadd.f32 %v2350, %v2361
        %v2394 = vadd.f32 %v2351, %v2361
        %v2395 = vadd.f32 %v2352, %v2361
        %v2396 = vadd.f32 %v2353, %v2361
        %v2397 = vadd.f32 %v2354, %v2361
        %v2398 = vadd.f32 %v2355, %v2361
        %v2399 = vadd.f32 %v2356, %v2361
        %v2400 = vadd.f32 %v2357, %v2361
        %v2401 = vadd.f32 %v2358, %v2361
        %v2402 = vmax.f32 %v2363, 0.0
        %v2403 = vmax.f32 %v2364, 0.0
        %v2404 = vmax.f32 %v2365, 0.0
        %v2405 = vmax.f32 %v2366, 0.0
        %v2406 = vmax.f32 %v2367, 0.0
        %v2407 = vmax.f32 %v2368, 0.0
        %v2408 = vmax.f32 %v2369, 0.0
        %v2409 = vmax.f32 %v2370, 0.0
        %v2410 = vmax.f32 %v2371, 0.0
        %v2411 = vmax.f32 %v2372, 0.0
        %v2412 = vmax.f32 %v2373, 0.0
        %v2413 = vmax.f32 %v2374, 0.0
        %v2414 = vmax.f32 %v2375, 0.0
        %v2415 = vmax.f32 %v2376, 0.0
        %v2416 = vmax.f32 %v2377, 0.0
        %v2417 = vmax.f32 %v2378, 0.0
        %v2418 = vmax.f32 %v2379, 0.0
        %v2419 = vmax.f32 %v2380, 0.0
        %v2420 = vmax.f32 %v2381, 0.0
        %v2421 = vmax.f32 %v2382, 0.0
        %v2422 = vmax.f32 %v2383, 0.0
        %v2423 = vmax.f32 %v2384, 0.0
        %v2424 = vmax.f32 %v2385, 0.0
        %v2425 = vmax.f32 %v2386, 0.0
        %v2426 = vmax.f32 %v2387, 0.0
        %v2427 = vmax.f32 %v2388, 0.0
        %v2428 = vmax.f32 %v2389, 0.0
        %v2429 = vmax.f32 %v2390, 0.0
        %v2430 = vmax.f32 %v2391, 0.0
        %v2431 = vmax.f32 %v2392, 0.0
        %v2432 = vmax.f32 %v2393, 0.0
        %v2433 = vmax.f32 %v2394, 0.0
        %v2434 = vmax.f32 %v2395, 0.0
        %v2435 = vmax.f32 %v2396, 0.0
        %v2436 = vmax.f32 %v2397, 0.0
        %v2437 = vmax.f32 %v2398, 0.0
        %v2438 = vmax.f32 %v2399, 0.0
        %v2439 = vmax.f32 %v2400, 0.0
        %v2440 = vmax.f32 %v2401, 0.0
        %2441 = vst [vmem:[#allocation2] sm:$0xff] %v2402
        %2442 = vst [vmem:[#allocation2 + $0x8] sm:$0xff] %v2403
        %2443 = vst [vmem:[#allocation2 + $0x10] sm:$0xff] %v2404
        %2444 = vst [vmem:[#allocation2 + $0x18] sm:$0xff] %v2405
        %2445 = vst [vmem:[#allocation2 + $0x20] sm:$0xff] %v2406
        %2446 = vst [vmem:[#allocation2 + $0x28] sm:$0xff] %v2407
        %2447 = vst [vmem:[#allocation2 + $0x30] sm:$0xff] %v2408
        %2448 = vst [vmem:[#allocation2 + $0x38] sm:$0xff] %v2409
        %2449 = vst [vmem:[#allocation2 + $0x40] sm:$0xff] %v2410
        %2450 = vst [vmem:[#allocation2 + $0x48] sm:$0xff] %v2411
        %2451 = vst [vmem:[#allocation2 + $0x50] sm:$0xff] %v2412
        %2452 = vst [vmem:[#allocation2 + $0x58] sm:$0xff] %v2413
        %2453 = vst [vmem:[#allocation2 + $0x60] sm:$0xff] %v2414
        %2454 = vst [vmem:[#allocation2 + $0x68] sm:$0xff] %v2415
        %2455 = vst [vmem:[#allocation2 + $0x70] sm:$0xff] %v2416
        %2456 = vst [vmem:[#allocation2 + $0x78] sm:$0xff] %v2417
        %2457 = vst [vmem:[#allocation2 + $0x80] sm:$0xff] %v2418
        %2458 = vst [vmem:[#allocation2 + $0x88] sm:$0xff] %v2419
        %2459 = vst [vmem:[#allocation2 + $0x90] sm:$0xff] %v2420
        %2460 = vst [vmem:[#allocation2 + $0x98] sm:$0xff] %v2421
        %2461 = vst [vmem:[#allocation2 + $0xa0] sm:$0xff] %v2422
        %2462 = vst [vmem:[#allocation2 + $0xa8] sm:$0xff] %v2423
        %2463 = vst [vmem:[#allocation2 + $0xb0] sm:$0xff] %v2424
        %2464 = vst [vmem:[#allocation2 + $0xb8] sm:$0xff] %v2425
        %2465 = vst [vmem:[#allocation2 + $0xc0] sm:$0xff] %v2426
        %2466 = vst [vmem:[#allocation2 + $0xc8] sm:$0xff] %v2427
        %2467 = vst [vmem:[#allocation2 + $0xd0] sm:$0xff] %v2428
        %2468 = vst [vmem:[#allocation2 + $0xd8] sm:$0xff] %v2429
        %2469 = vst [vmem:[#allocation2 + $0xe0] sm:$0xff] %v2430
        %2470 = vst [vmem:[#allocation2 + $0xe8] sm:$0xff] %v2431
        %2471 = vst [vmem:[#allocation2 + $0xf0] sm:$0xff] %v2432
        %2472 = vst [vmem:[#allocation2 + $0xf8] sm:$0xff] %v2433
        %2473 = vst [vmem:[#allocation2 + $0x100] sm:$0xff] %v2434
        %2474 = vst [vmem:[#allocation2 + $0x108] sm:$0xff] %v2435
        %2475 = vst [vmem:[#allocation2 + $0x110] sm:$0xff] %v2436
        %2476 = vst [vmem:[#allocation2 + $0x118] sm:$0xff] %v2437
        %2477 = vst [vmem:[#allocation2 + $0x120] sm:$0xff] %v2438
        %2478 = vst [vmem:[#allocation2 + $0x128] sm:$0xff] %v2439
        %2479 = vst [vmem:[#allocation2 + $0x130] sm:$0xff] %v2440
        %v2480 = vld [vmem:[#allocation2] ss:$2 sm:$0xff]
        %s2481 = scalar_lea.vmem [#allocation2], 16
        %v2482 = vld [vmem:[%s2481] ss:$2 sm:$0xff]
        %s2483 = scalar_lea.vmem [#allocation2], 32
        %v2484 = vld [vmem:[%s2483] ss:$2 sm:$0xff]
        %s2485 = scalar_lea.vmem [#allocation2], 48
        %v2486 = vld [vmem:[%s2485] ss:$2 sm:$0xff]
        %s2487 = scalar_lea.vmem [#allocation2], 64
        %v2488 = vld [vmem:[%s2487] ss:$2 sm:$0xff]
        %s2489 = scalar_lea.vmem [#allocation2], 80
        %v2490 = vld [vmem:[%s2489] ss:$2 sm:$0xff]
        %s2491 = scalar_lea.vmem [#allocation2], 96
        %v2492 = vld [vmem:[%s2491] ss:$2 sm:$0xff]
        %s2493 = scalar_lea.vmem [#allocation2], 112
        %v2494 = vld [vmem:[%s2493] ss:$2 sm:$0xff]
        %s2495 = scalar_lea.vmem [#allocation2], 128
        %v2496 = vld [vmem:[%s2495] ss:$2 sm:$0xff]
        %s2497 = scalar_lea.vmem [#allocation2], 144
        %v2498 = vld [vmem:[%s2497] ss:$2 sm:$0xff]
        %s2499 = scalar_lea.vmem [#allocation2], 160
        %v2500 = vld [vmem:[%s2499] ss:$2 sm:$0xff]
        %s2501 = scalar_lea.vmem [#allocation2], 176
        %v2502 = vld [vmem:[%s2501] ss:$2 sm:$0xff]
        %s2503 = scalar_lea.vmem [#allocation2], 192
        %v2504 = vld [vmem:[%s2503] ss:$2 sm:$0xff]
        %s2505 = scalar_lea.vmem [#allocation2], 208
        %v2506 = vld [vmem:[%s2505] ss:$2 sm:$0xff]
        %s2507 = scalar_lea.vmem [#allocation2], 224
        %v2508 = vld [vmem:[%s2507] ss:$2 sm:$0xff]
        %s2509 = scalar_lea.vmem [#allocation2], 240
        %v2510 = vld [vmem:[%s2509] ss:$2 sm:$0xff]
        %s2511 = scalar_lea.vmem [#allocation2], 256
        %v2512 = vld [vmem:[%s2511] ss:$2 sm:$0xff]
        %s2513 = scalar_lea.vmem [#allocation2], 272
        %v2514 = vld [vmem:[%s2513] ss:$2 sm:$0xff]
        %s2515 = scalar_lea.vmem [#allocation2], 288
        %v2516 = vld [vmem:[%s2515] ss:$2 sm:$0xff]
        %s2517 = scalar_lea.vmem [#allocation2], 304
        %v2518 = vld [vmem:[%s2517] ss:$2 sm:$0xf]
        %s2519 = scalar_lea.vmem [#allocation2], 1
        %v2520 = vld [vmem:[%s2519] ss:$2 sm:$0xff]
        %s2521 = scalar_lea.vmem [#allocation2], 17
        %v2522 = vld [vmem:[%s2521] ss:$2 sm:$0xff]
        %s2523 = scalar_lea.vmem [#allocation2], 33
        %v2524 = vld [vmem:[%s2523] ss:$2 sm:$0xff]
        %s2525 = scalar_lea.vmem [#allocation2], 49
        %v2526 = vld [vmem:[%s2525] ss:$2 sm:$0xff]
        %s2527 = scalar_lea.vmem [#allocation2], 65
        %v2528 = vld [vmem:[%s2527] ss:$2 sm:$0xff]
        %s2529 = scalar_lea.vmem [#allocation2], 81
        %v2530 = vld [vmem:[%s2529] ss:$2 sm:$0xff]
        %s2531 = scalar_lea.vmem [#allocation2], 97
        %v2532 = vld [vmem:[%s2531] ss:$2 sm:$0xff]
        %s2533 = scalar_lea.vmem [#allocation2], 113
        %v2534 = vld [vmem:[%s2533] ss:$2 sm:$0xff]
        %s2535 = scalar_lea.vmem [#allocation2], 129
        %v2536 = vld [vmem:[%s2535] ss:$2 sm:$0xff]
        %s2537 = scalar_lea.vmem [#allocation2], 145
        %v2538 = vld [vmem:[%s2537] ss:$2 sm:$0xff]
        %s2539 = scalar_lea.vmem [#allocation2], 161
        %v2540 = vld [vmem:[%s2539] ss:$2 sm:$0xff]
        %s2541 = scalar_lea.vmem [#allocation2], 177
        %v2542 = vld [vmem:[%s2541] ss:$2 sm:$0xff]
        %s2543 = scalar_lea.vmem [#allocation2], 193
        %v2544 = vld [vmem:[%s2543] ss:$2 sm:$0xff]
        %s2545 = scalar_lea.vmem [#allocation2], 209
        %v2546 = vld [vmem:[%s2545] ss:$2 sm:$0xff]
        %s2547 = scalar_lea.vmem [#allocation2], 225
        %v2548 = vld [vmem:[%s2547] ss:$2 sm:$0xff]
        %s2549 = scalar_lea.vmem [#allocation2], 241
        %v2550 = vld [vmem:[%s2549] ss:$2 sm:$0xff]
        %s2551 = scalar_lea.vmem [#allocation2], 257
        %v2552 = vld [vmem:[%s2551] ss:$2 sm:$0xff]
        %s2553 = scalar_lea.vmem [#allocation2], 273
        %v2554 = vld [vmem:[%s2553] ss:$2 sm:$0xff]
        %s2555 = scalar_lea.vmem [#allocation2], 289
        %v2556 = vld [vmem:[%s2555] ss:$2 sm:$0xff]
        %s2557 = scalar_lea.vmem [#allocation2], 305
        %v2558 = vld [vmem:[%s2557] ss:$2 sm:$0xf]
        %v2559 = vmax.f32 %v2480, %v2520
        %v2560 = vmax.f32 %v2482, %v2522
        %v2561 = vmax.f32 %v2484, %v2524
        %v2562 = vmax.f32 %v2486, %v2526
        %v2563 = vmax.f32 %v2488, %v2528
        %v2564 = vmax.f32 %v2490, %v2530
        %v2565 = vmax.f32 %v2492, %v2532
        %v2566 = vmax.f32 %v2494, %v2534
        %v2567 = vmax.f32 %v2496, %v2536
        %v2568 = vmax.f32 %v2498, %v2538
        %v2569 = vmax.f32 %v2500, %v2540
        %v2570 = vmax.f32 %v2502, %v2542
        %v2571 = vmax.f32 %v2504, %v2544
        %v2572 = vmax.f32 %v2506, %v2546
        %v2573 = vmax.f32 %v2508, %v2548
        %v2574 = vmax.f32 %v2510, %v2550
        %v2575 = vmax.f32 %v2512, %v2552
        %v2576 = vmax.f32 %v2514, %v2554
        %v2577 = vmax.f32 %v2516, %v2556
        %v2578 = vmax.f32 %v2518, %v2558
        %v2579 = vld [vmem:[%s3] sm:$0xff]
        %v2580 = vld [vmem:[%s3 + $0x8] sm:$0xff]
        %v2581 = vld [vmem:[%s3 + $0x10] sm:$0xff]
        %v2582 = vld [vmem:[%s3 + $0x18] sm:$0xff]
        %v2583 = vld [vmem:[%s3 + $0x20] sm:$0xff]
        %v2584 = vld [vmem:[%s3 + $0x28] sm:$0xff]
        %v2585 = vld [vmem:[%s3 + $0x30] sm:$0xff]
        %v2586 = vld [vmem:[%s3 + $0x38] sm:$0xff]
        %v2587 = vld [vmem:[%s3 + $0x40] sm:$0xff]
        %v2588 = vld [vmem:[%s3 + $0x48] sm:$0xff]
        %v2589 = vld [vmem:[%s3 + $0x50] sm:$0xff]
        %v2590 = vld [vmem:[%s3 + $0x58] sm:$0xff]
        %v2591 = vld [vmem:[%s3 + $0x60] sm:$0xff]
        %v2592 = vld [vmem:[%s3 + $0x68] sm:$0xff]
        %v2593 = vld [vmem:[%s3 + $0x70] sm:$0xff]
        %v2594 = vld [vmem:[%s3 + $0x78] sm:$0xff]
        %v2595 = vld [vmem:[%s3 + $0x80] sm:$0xff]
        %v2596 = vld [vmem:[%s3 + $0x88] sm:$0xff]
        %v2597 = vld [vmem:[%s3 + $0x90] sm:$0xff]
        %v2598 = vld [vmem:[%s3 + $0x98] sm:$0xff]
        %v2599 = vld [vmem:[%s3 + $0xa0] sm:$0xff]
        %v2600 = vld [vmem:[%s3 + $0xa8] sm:$0xff]
        %v2601 = vld [vmem:[%s3 + $0xb0] sm:$0xff]
        %v2602 = vld [vmem:[%s3 + $0xb8] sm:$0xff]
        %v2603 = vld [vmem:[%s3 + $0xc0] sm:$0xff]
        %v2604 = vld [vmem:[%s3 + $0xc8] sm:$0xff]
        %v2605 = vld [vmem:[%s3 + $0xd0] sm:$0xff]
        %v2606 = vld [vmem:[%s3 + $0xd8] sm:$0xff]
        %v2607 = vld [vmem:[%s3 + $0xe0] sm:$0xff]
        %v2608 = vld [vmem:[%s3 + $0xe8] sm:$0xff]
        %v2609 = vld [vmem:[%s3 + $0xf0] sm:$0xff]
        %v2610 = vld [vmem:[%s3 + $0xf8] sm:$0xff]
        %s2611 = scalar_lea.vmem %s3, 256
        %v2612 = vld [vmem:[%s2611] sm:$0xff]
        %v2613 = vld [vmem:[%s2611 + $0x8] sm:$0xff]
        %v2614 = vld [vmem:[%s2611 + $0x10] sm:$0xff]
        %v2615 = vld [vmem:[%s2611 + $0x18] sm:$0xff]
        %v2616 = vld [vmem:[%s2611 + $0x20] sm:$0xff]
        %v2617 = vld [vmem:[%s2611 + $0x28] sm:$0xff]
        %v2618 = vld [vmem:[%s2611 + $0x30] sm:$0xff]
        %v2619 = vld [vmem:[%s2611 + $0x38] sm:$0xff]
        %v2620 = vld [vmem:[%s2611 + $0x40] sm:$0xff]
        %v2621 = vld [vmem:[%s2611 + $0x48] sm:$0xff]
        %v2622 = vld [vmem:[%s2611 + $0x50] sm:$0xff]
        %v2623 = vld [vmem:[%s2611 + $0x58] sm:$0xff]
        %v2624 = vld [vmem:[%s2611 + $0x60] sm:$0xff]
        %v2625 = vld [vmem:[%s2611 + $0x68] sm:$0xff]
        %v2626 = vld [vmem:[%s2611 + $0x70] sm:$0xff]
        %v2627 = vld [vmem:[%s2611 + $0x78] sm:$0xff]
        %v2628 = vld [vmem:[%s2611 + $0x80] sm:$0xff]
        %v2629 = vld [vmem:[%s2611 + $0x88] sm:$0xff]
        %v2630 = vld [vmem:[%s2611 + $0x90] sm:$0xff]
        %v2631 = vld [vmem:[%s2611 + $0x98] sm:$0xff]
        %v2632 = vld [vmem:[%s2611 + $0xa0] sm:$0xff]
        %v2633 = vld [vmem:[%s2611 + $0xa8] sm:$0xff]
        %v2634 = vld [vmem:[%s2611 + $0xb0] sm:$0xff]
        %v2635 = vld [vmem:[%s2611 + $0xb8] sm:$0xff]
        %v2636 = vld [vmem:[%s2611 + $0xc0] sm:$0xff]
        %v2637 = vld [vmem:[%s2611 + $0xc8] sm:$0xff]
        %v2638 = vld [vmem:[%s2611 + $0xd0] sm:$0xff]
        %v2639 = vld [vmem:[%s2611 + $0xd8] sm:$0xff]
        %v2640 = vld [vmem:[%s2611 + $0xe0] sm:$0xff]
        %v2641 = vld [vmem:[%s2611 + $0xe8] sm:$0xff]
        %v2642 = vld [vmem:[%s2611 + $0xf0] sm:$0xff]
        %v2643 = vld [vmem:[%s2611 + $0xf8] sm:$0xff]
        %vm2664 = vcmask 1046528
        %v2665 = vrot.slane %v2559, 1
        %v2666 = vrot.slane %v2560, 1
        %v2667 = vsel %vm2664, %v2665, %v2666
        %v2668 = vrot.slane %v2561, 1
        %v2669 = vsel %vm2664, %v2666, %v2668
        %v2670 = vrot.slane %v2562, 1
        %v2671 = vsel %vm2664, %v2668, %v2670
        %v2672 = vrot.slane %v2563, 1
        %v2673 = vsel %vm2664, %v2670, %v2672
        %v2674 = vrot.slane %v2564, 1
        %v2675 = vsel %vm2664, %v2672, %v2674
        %v2676 = vrot.slane %v2565, 1
        %v2677 = vsel %vm2664, %v2674, %v2676
        %v2678 = vrot.slane %v2566, 1
        %v2679 = vsel %vm2664, %v2676, %v2678
        %v2680 = vrot.slane %v2567, 1
        %v2681 = vsel %vm2664, %v2678, %v2680
        %v2682 = vrot.slane %v2568, 1
        %v2683 = vsel %vm2664, %v2680, %v2682
        %v2684 = vrot.slane %v2569, 1
        %v2685 = vsel %vm2664, %v2682, %v2684
        %v2686 = vrot.slane %v2570, 1
        %v2687 = vsel %vm2664, %v2684, %v2686
        %v2688 = vrot.slane %v2571, 1
        %v2689 = vsel %vm2664, %v2686, %v2688
        %v2690 = vrot.slane %v2572, 1
        %v2691 = vsel %vm2664, %v2688, %v2690
        %v2692 = vrot.slane %v2573, 1
        %v2693 = vsel %vm2664, %v2690, %v2692
        %v2694 = vrot.slane %v2574, 1
        %v2695 = vsel %vm2664, %v2692, %v2694
        %v2696 = vrot.slane %v2575, 1
        %v2697 = vsel %vm2664, %v2694, %v2696
        %v2698 = vrot.slane %v2576, 1
        %v2699 = vsel %vm2664, %v2696, %v2698
        %v2700 = vrot.slane %v2577, 1
        %v2701 = vsel %vm2664, %v2698, %v2700
        %v2702 = vrot.slane %v2578, 1
        %v2703 = vsel %vm2664, %v2700, %v2702
        %2723 = vmatpush.msra.mxu0 %v2642
        %2724 = vmatpush.msra.mxu0 %v2640
        %2725 = vmatpush.msra.mxu0 %v2638
        %2726 = vmatpush.msra.mxu0 %v2636
        %2727 = vmatpush.msra.mxu0 %v2634
        %2728 = vmatpush.msra.mxu0 %v2632
        %2729 = vmatpush.msra.mxu0 %v2630
        %2730 = vmatpush.msra.mxu0 %v2628
        %2731 = vmatpush.msra.mxu0 %v2626
        %2732 = vmatpush.msra.mxu0 %v2624
        %2733 = vmatpush.msra.mxu0 %v2622
        %2734 = vmatpush.msra.mxu0 %v2620
        %2735 = vmatpush.msra.mxu0 %v2618
        %2736 = vmatpush.msra.mxu0 %v2616
        %2737 = vmatpush.msra.mxu0 %v2614
        %2738 = vmatpush.msra.mxu0 %v2612
        %2739 = vmatmul.f32.gmra.mxu0 %v2667
        %v2740 = vpop.f32.mrf.mxu0
        %v2741 = vadd.f32 0.0, %v2740
        %2742 = vmatmul.f32.gmra.mxu0 %v2669
        %v2743 = vpop.f32.mrf.mxu0
        %v2744 = vadd.f32 0.0, %v2743
        %2745 = vmatmul.f32.gmra.mxu0 %v2671
        %v2746 = vpop.f32.mrf.mxu0
        %v2747 = vadd.f32 0.0, %v2746
        %2748 = vmatmul.f32.gmra.mxu0 %v2673
        %v2749 = vpop.f32.mrf.mxu0
        %v2750 = vadd.f32 0.0, %v2749
        %2751 = vmatmul.f32.gmra.mxu0 %v2675
        %v2752 = vpop.f32.mrf.mxu0
        %v2753 = vadd.f32 0.0, %v2752
        %2754 = vmatmul.f32.gmra.mxu0 %v2677
        %v2755 = vpop.f32.mrf.mxu0
        %v2756 = vadd.f32 0.0, %v2755
        %2757 = vmatmul.f32.gmra.mxu0 %v2679
        %v2758 = vpop.f32.mrf.mxu0
        %v2759 = vadd.f32 0.0, %v2758
        %2760 = vmatmul.f32.gmra.mxu0 %v2681
        %v2761 = vpop.f32.mrf.mxu0
        %v2762 = vadd.f32 0.0, %v2761
        %2763 = vmatmul.f32.gmra.mxu0 %v2683
        %v2764 = vpop.f32.mrf.mxu0
        %v2765 = vadd.f32 0.0, %v2764
        %2766 = vmatmul.f32.gmra.mxu0 %v2685
        %v2767 = vpop.f32.mrf.mxu0
        %v2768 = vadd.f32 0.0, %v2767
        %2769 = vmatmul.f32.gmra.mxu0 %v2687
        %v2770 = vpop.f32.mrf.mxu0
        %v2771 = vadd.f32 0.0, %v2770
        %2772 = vmatmul.f32.gmra.mxu0 %v2689
        %v2773 = vpop.f32.mrf.mxu0
        %v2774 = vadd.f32 0.0, %v2773
        %2775 = vmatmul.f32.gmra.mxu0 %v2691
        %v2776 = vpop.f32.mrf.mxu0
        %v2777 = vadd.f32 0.0, %v2776
        %2778 = vmatmul.f32.gmra.mxu0 %v2693
        %v2779 = vpop.f32.mrf.mxu0
        %v2780 = vadd.f32 0.0, %v2779
        %2781 = vmatmul.f32.gmra.mxu0 %v2695
        %v2782 = vpop.f32.mrf.mxu0
        %v2783 = vadd.f32 0.0, %v2782
        %2784 = vmatmul.f32.gmra.mxu0 %v2697
        %v2785 = vpop.f32.mrf.mxu0
        %v2786 = vadd.f32 0.0, %v2785
        %2787 = vmatmul.f32.gmra.mxu0 %v2699
        %v2788 = vpop.f32.mrf.mxu0
        %v2789 = vadd.f32 0.0, %v2788
        %2790 = vmatmul.f32.gmra.mxu0 %v2701
        %v2791 = vpop.f32.mrf.mxu0
        %v2792 = vadd.f32 0.0, %v2791
        %2793 = vmatmul.f32.gmra.mxu0 %v2703
        %v2794 = vpop.f32.mrf.mxu0
        %v2795 = vadd.f32 0.0, %v2794
        %2796 = vdwg.mxu0
        %2797 = vmatpush.msra.mxu0 %v2643
        %2798 = vmatpush.msra.mxu0 %v2641
        %2799 = vmatpush.msra.mxu0 %v2639
        %2800 = vmatpush.msra.mxu0 %v2637
        %2801 = vmatpush.msra.mxu0 %v2635
        %2802 = vmatpush.msra.mxu0 %v2633
        %2803 = vmatpush.msra.mxu0 %v2631
        %2804 = vmatpush.msra.mxu0 %v2629
        %2805 = vmatpush.msra.mxu0 %v2627
        %2806 = vmatpush.msra.mxu0 %v2625
        %2807 = vmatpush.msra.mxu0 %v2623
        %2808 = vmatpush.msra.mxu0 %v2621
        %2809 = vmatpush.msra.mxu0 %v2619
        %2810 = vmatpush.msra.mxu0 %v2617
        %2811 = vmatpush.msra.mxu0 %v2615
        %2812 = vmatpush.msra.mxu0 %v2613
        %2813 = vmatmul.f32.gmra.mxu0 %v2667
        %v2814 = vpop.f32.mrf.mxu0
        %v2815 = vadd.f32 0.0, %v2814
        %2816 = vmatmul.f32.gmra.mxu0 %v2669
        %v2817 = vpop.f32.mrf.mxu0
        %v2818 = vadd.f32 0.0, %v2817
        %2819 = vmatmul.f32.gmra.mxu0 %v2671
        %v2820 = vpop.f32.mrf.mxu0
        %v2821 = vadd.f32 0.0, %v2820
        %2822 = vmatmul.f32.gmra.mxu0 %v2673
        %v2823 = vpop.f32.mrf.mxu0
        %v2824 = vadd.f32 0.0, %v2823
        %2825 = vmatmul.f32.gmra.mxu0 %v2675
        %v2826 = vpop.f32.mrf.mxu0
        %v2827 = vadd.f32 0.0, %v2826
        %2828 = vmatmul.f32.gmra.mxu0 %v2677
        %v2829 = vpop.f32.mrf.mxu0
        %v2830 = vadd.f32 0.0, %v2829
        %2831 = vmatmul.f32.gmra.mxu0 %v2679
        %v2832 = vpop.f32.mrf.mxu0
        %v2833 = vadd.f32 0.0, %v2832
        %2834 = vmatmul.f32.gmra.mxu0 %v2681
        %v2835 = vpop.f32.mrf.mxu0
        %v2836 = vadd.f32 0.0, %v2835
        %2837 = vmatmul.f32.gmra.mxu0 %v2683
        %v2838 = vpop.f32.mrf.mxu0
        %v2839 = vadd.f32 0.0, %v2838
        %2840 = vmatmul.f32.gmra.mxu0 %v2685
        %v2841 = vpop.f32.mrf.mxu0
        %v2842 = vadd.f32 0.0, %v2841
        %2843 = vmatmul.f32.gmra.mxu0 %v2687
        %v2844 = vpop.f32.mrf.mxu0
        %v2845 = vadd.f32 0.0, %v2844
        %2846 = vmatmul.f32.gmra.mxu0 %v2689
        %v2847 = vpop.f32.mrf.mxu0
        %v2848 = vadd.f32 0.0, %v2847
        %2849 = vmatmul.f32.gmra.mxu0 %v2691
        %v2850 = vpop.f32.mrf.mxu0
        %v2851 = vadd.f32 0.0, %v2850
        %2852 = vmatmul.f32.gmra.mxu0 %v2693
        %v2853 = vpop.f32.mrf.mxu0
        %v2854 = vadd.f32 0.0, %v2853
        %2855 = vmatmul.f32.gmra.mxu0 %v2695
        %v2856 = vpop.f32.mrf.mxu0
        %v2857 = vadd.f32 0.0, %v2856
        %2858 = vmatmul.f32.gmra.mxu0 %v2697
        %v2859 = vpop.f32.mrf.mxu0
        %v2860 = vadd.f32 0.0, %v2859
        %2861 = vmatmul.f32.gmra.mxu0 %v2699
        %v2862 = vpop.f32.mrf.mxu0
        %v2863 = vadd.f32 0.0, %v2862
        %2864 = vmatmul.f32.gmra.mxu0 %v2701
        %v2865 = vpop.f32.mrf.mxu0
        %v2866 = vadd.f32 0.0, %v2865
        %2867 = vmatmul.f32.gmra.mxu0 %v2703
        %v2868 = vpop.f32.mrf.mxu0
        %v2869 = vadd.f32 0.0, %v2868
        %2870 = vdwg.mxu0
        %2871 = vmatpush.msra.mxu0 %v2609
        %2872 = vmatpush.msra.mxu0 %v2607
        %2873 = vmatpush.msra.mxu0 %v2605
        %2874 = vmatpush.msra.mxu0 %v2603
        %2875 = vmatpush.msra.mxu0 %v2601
        %2876 = vmatpush.msra.mxu0 %v2599
        %2877 = vmatpush.msra.mxu0 %v2597
        %2878 = vmatpush.msra.mxu0 %v2595
        %2879 = vmatpush.msra.mxu0 %v2593
        %2880 = vmatpush.msra.mxu0 %v2591
        %2881 = vmatpush.msra.mxu0 %v2589
        %2882 = vmatpush.msra.mxu0 %v2587
        %2883 = vmatpush.msra.mxu0 %v2585
        %2884 = vmatpush.msra.mxu0 %v2583
        %2885 = vmatpush.msra.mxu0 %v2581
        %2886 = vmatpush.msra.mxu0 %v2579
        %2887 = vmatmul.f32.gmra.mxu0 %v2559
        %v2888 = vpop.f32.mrf.mxu0
        %v2889 = vadd.f32 %v2741, %v2888
        %2890 = vmatmul.f32.gmra.mxu0 %v2560
        %v2891 = vpop.f32.mrf.mxu0
        %v2892 = vadd.f32 %v2744, %v2891
        %2893 = vmatmul.f32.gmra.mxu0 %v2561
        %v2894 = vpop.f32.mrf.mxu0
        %v2895 = vadd.f32 %v2747, %v2894
        %2896 = vmatmul.f32.gmra.mxu0 %v2562
        %v2897 = vpop.f32.mrf.mxu0
        %v2898 = vadd.f32 %v2750, %v2897
        %2899 = vmatmul.f32.gmra.mxu0 %v2563
        %v2900 = vpop.f32.mrf.mxu0
        %v2901 = vadd.f32 %v2753, %v2900
        %2902 = vmatmul.f32.gmra.mxu0 %v2564
        %v2903 = vpop.f32.mrf.mxu0
        %v2904 = vadd.f32 %v2756, %v2903
        %2905 = vmatmul.f32.gmra.mxu0 %v2565
        %v2906 = vpop.f32.mrf.mxu0
        %v2907 = vadd.f32 %v2759, %v2906
        %2908 = vmatmul.f32.gmra.mxu0 %v2566
        %v2909 = vpop.f32.mrf.mxu0
        %v2910 = vadd.f32 %v2762, %v2909
        %2911 = vmatmul.f32.gmra.mxu0 %v2567
        %v2912 = vpop.f32.mrf.mxu0
        %v2913 = vadd.f32 %v2765, %v2912
        %2914 = vmatmul.f32.gmra.mxu0 %v2568
        %v2915 = vpop.f32.mrf.mxu0
        %v2916 = vadd.f32 %v2768, %v2915
        %2917 = vmatmul.f32.gmra.mxu0 %v2569
        %v2918 = vpop.f32.mrf.mxu0
        %v2919 = vadd.f32 %v2771, %v2918
        %2920 = vmatmul.f32.gmra.mxu0 %v2570
        %v2921 = vpop.f32.mrf.mxu0
        %v2922 = vadd.f32 %v2774, %v2921
        %2923 = vmatmul.f32.gmra.mxu0 %v2571
        %v2924 = vpop.f32.mrf.mxu0
        %v2925 = vadd.f32 %v2777, %v2924
        %2926 = vmatmul.f32.gmra.mxu0 %v2572
        %v2927 = vpop.f32.mrf.mxu0
        %v2928 = vadd.f32 %v2780, %v2927
        %2929 = vmatmul.f32.gmra.mxu0 %v2573
        %v2930 = vpop.f32.mrf.mxu0
        %v2931 = vadd.f32 %v2783, %v2930
        %2932 = vmatmul.f32.gmra.mxu0 %v2574
        %v2933 = vpop.f32.mrf.mxu0
        %v2934 = vadd.f32 %v2786, %v2933
        %2935 = vmatmul.f32.gmra.mxu0 %v2575
        %v2936 = vpop.f32.mrf.mxu0
        %v2937 = vadd.f32 %v2789, %v2936
        %2938 = vmatmul.f32.gmra.mxu0 %v2576
        %v2939 = vpop.f32.mrf.mxu0
        %v2940 = vadd.f32 %v2792, %v2939
        %2941 = vmatmul.f32.gmra.mxu0 %v2577
        %v2942 = vpop.f32.mrf.mxu0
        %v2943 = vadd.f32 %v2795, %v2942
        %2944 = vdwg.mxu0
        %2945 = vmatpush.msra.mxu0 %v2610
        %2946 = vmatpush.msra.mxu0 %v2608
        %2947 = vmatpush.msra.mxu0 %v2606
        %2948 = vmatpush.msra.mxu0 %v2604
        %2949 = vmatpush.msra.mxu0 %v2602
        %2950 = vmatpush.msra.mxu0 %v2600
        %2951 = vmatpush.msra.mxu0 %v2598
        %2952 = vmatpush.msra.mxu0 %v2596
        %2953 = vmatpush.msra.mxu0 %v2594
        %2954 = vmatpush.msra.mxu0 %v2592
        %2955 = vmatpush.msra.mxu0 %v2590
        %2956 = vmatpush.msra.mxu0 %v2588
        %2957 = vmatpush.msra.mxu0 %v2586
        %2958 = vmatpush.msra.mxu0 %v2584
        %2959 = vmatpush.msra.mxu0 %v2582
        %2960 = vmatpush.msra.mxu0 %v2580
        %2961 = vmatmul.f32.gmra.mxu0 %v2559
        %v2962 = vpop.f32.mrf.mxu0
        %v2963 = vadd.f32 %v2815, %v2962
        %2964 = vmatmul.f32.gmra.mxu0 %v2560
        %v2965 = vpop.f32.mrf.mxu0
        %v2966 = vadd.f32 %v2818, %v2965
        %2967 = vmatmul.f32.gmra.mxu0 %v2561
        %v2968 = vpop.f32.mrf.mxu0
        %v2969 = vadd.f32 %v2821, %v2968
        %2970 = vmatmul.f32.gmra.mxu0 %v2562
        %v2971 = vpop.f32.mrf.mxu0
        %v2972 = vadd.f32 %v2824, %v2971
        %2973 = vmatmul.f32.gmra.mxu0 %v2563
        %v2974 = vpop.f32.mrf.mxu0
        %v2975 = vadd.f32 %v2827, %v2974
        %2976 = vmatmul.f32.gmra.mxu0 %v2564
        %v2977 = vpop.f32.mrf.mxu0
        %v2978 = vadd.f32 %v2830, %v2977
        %2979 = vmatmul.f32.gmra.mxu0 %v2565
        %v2980 = vpop.f32.mrf.mxu0
        %v2981 = vadd.f32 %v2833, %v2980
        %2982 = vmatmul.f32.gmra.mxu0 %v2566
        %v2983 = vpop.f32.mrf.mxu0
        %v2984 = vadd.f32 %v2836, %v2983
        %2985 = vmatmul.f32.gmra.mxu0 %v2567
        %v2986 = vpop.f32.mrf.mxu0
        %v2987 = vadd.f32 %v2839, %v2986
        %2988 = vmatmul.f32.gmra.mxu0 %v2568
        %v2989 = vpop.f32.mrf.mxu0
        %v2990 = vadd.f32 %v2842, %v2989
        %2991 = vmatmul.f32.gmra.mxu0 %v2569
        %v2992 = vpop.f32.mrf.mxu0
        %v2993 = vadd.f32 %v2845, %v2992
        %2994 = vmatmul.f32.gmra.mxu0 %v2570
        %v2995 = vpop.f32.mrf.mxu0
        %v2996 = vadd.f32 %v2848, %v2995
        %2997 = vmatmul.f32.gmra.mxu0 %v2571
        %v2998 = vpop.f32.mrf.mxu0
        %v2999 = vadd.f32 %v2851, %v2998
        %3000 = vmatmul.f32.gmra.mxu0 %v2572
        %v3001 = vpop.f32.mrf.mxu0
        %v3002 = vadd.f32 %v2854, %v3001
        %3003 = vmatmul.f32.gmra.mxu0 %v2573
        %v3004 = vpop.f32.mrf.mxu0
        %v3005 = vadd.f32 %v2857, %v3004
        %3006 = vmatmul.f32.gmra.mxu0 %v2574
        %v3007 = vpop.f32.mrf.mxu0
        %v3008 = vadd.f32 %v2860, %v3007
        %3009 = vmatmul.f32.gmra.mxu0 %v2575
        %v3010 = vpop.f32.mrf.mxu0
        %v3011 = vadd.f32 %v2863, %v3010
        %3012 = vmatmul.f32.gmra.mxu0 %v2576
        %v3013 = vpop.f32.mrf.mxu0
        %v3014 = vadd.f32 %v2866, %v3013
        %3015 = vmatmul.f32.gmra.mxu0 %v2577
        %v3016 = vpop.f32.mrf.mxu0
        %v3017 = vadd.f32 %v2869, %v3016
        %3018 = vdwg.mxu0
        %s3019 = scalar_lea.vmem %s3, 512
        %v3020 = vld [vmem:[%s3019] sm:$0xff]
        %v3021 = vld [vmem:[%s3019 + $0x8] sm:$0xff]
        %v3022 = vld [vmem:[%s3019 + $0x10] sm:$0xff]
        %v3023 = vld [vmem:[%s3019 + $0x18] sm:$0xff]
        %v3024 = vld [vmem:[%s3019 + $0x20] sm:$0xff]
        %v3025 = vld [vmem:[%s3019 + $0x28] sm:$0xff]
        %v3026 = vld [vmem:[%s3019 + $0x30] sm:$0xff]
        %v3027 = vld [vmem:[%s3019 + $0x38] sm:$0xff]
        %v3028 = vld [vmem:[%s3019 + $0x40] sm:$0xff]
        %v3029 = vld [vmem:[%s3019 + $0x48] sm:$0xff]
        %v3030 = vld [vmem:[%s3019 + $0x50] sm:$0xff]
        %v3031 = vld [vmem:[%s3019 + $0x58] sm:$0xff]
        %v3032 = vld [vmem:[%s3019 + $0x60] sm:$0xff]
        %v3033 = vld [vmem:[%s3019 + $0x68] sm:$0xff]
        %v3034 = vld [vmem:[%s3019 + $0x70] sm:$0xff]
        %v3035 = vld [vmem:[%s3019 + $0x78] sm:$0xff]
        %v3036 = vld [vmem:[%s3019 + $0x80] sm:$0xff]
        %v3037 = vld [vmem:[%s3019 + $0x88] sm:$0xff]
        %v3038 = vld [vmem:[%s3019 + $0x90] sm:$0xff]
        %v3039 = vld [vmem:[%s3019 + $0x98] sm:$0xff]
        %v3040 = vld [vmem:[%s3019 + $0xa0] sm:$0xff]
        %v3041 = vld [vmem:[%s3019 + $0xa8] sm:$0xff]
        %v3042 = vld [vmem:[%s3019 + $0xb0] sm:$0xff]
        %v3043 = vld [vmem:[%s3019 + $0xb8] sm:$0xff]
        %v3044 = vld [vmem:[%s3019 + $0xc0] sm:$0xff]
        %v3045 = vld [vmem:[%s3019 + $0xc8] sm:$0xff]
        %v3046 = vld [vmem:[%s3019 + $0xd0] sm:$0xff]
        %v3047 = vld [vmem:[%s3019 + $0xd8] sm:$0xff]
        %v3048 = vld [vmem:[%s3019 + $0xe0] sm:$0xff]
        %v3049 = vld [vmem:[%s3019 + $0xe8] sm:$0xff]
        %v3050 = vld [vmem:[%s3019 + $0xf0] sm:$0xff]
        %v3051 = vld [vmem:[%s3019 + $0xf8] sm:$0xff]
        %vm3052 = vcmask 1045504
        %v3053 = vrot.slane %v2559, 2
        %v3054 = vrot.slane %v2560, 2
        %v3055 = vsel %vm3052, %v3053, %v3054
        %v3056 = vrot.slane %v2561, 2
        %v3057 = vsel %vm3052, %v3054, %v3056
        %v3058 = vrot.slane %v2562, 2
        %v3059 = vsel %vm3052, %v3056, %v3058
        %v3060 = vrot.slane %v2563, 2
        %v3061 = vsel %vm3052, %v3058, %v3060
        %v3062 = vrot.slane %v2564, 2
        %v3063 = vsel %vm3052, %v3060, %v3062
        %v3064 = vrot.slane %v2565, 2
        %v3065 = vsel %vm3052, %v3062, %v3064
        %v3066 = vrot.slane %v2566, 2
        %v3067 = vsel %vm3052, %v3064, %v3066
        %v3068 = vrot.slane %v2567, 2
        %v3069 = vsel %vm3052, %v3066, %v3068
        %v3070 = vrot.slane %v2568, 2
        %v3071 = vsel %vm3052, %v3068, %v3070
        %v3072 = vrot.slane %v2569, 2
        %v3073 = vsel %vm3052, %v3070, %v3072
        %v3074 = vrot.slane %v2570, 2
        %v3075 = vsel %vm3052, %v3072, %v3074
        %v3076 = vrot.slane %v2571, 2
        %v3077 = vsel %vm3052, %v3074, %v3076
        %v3078 = vrot.slane %v2572, 2
        %v3079 = vsel %vm3052, %v3076, %v3078
        %v3080 = vrot.slane %v2573, 2
        %v3081 = vsel %vm3052, %v3078, %v3080
        %v3082 = vrot.slane %v2574, 2
        %v3083 = vsel %vm3052, %v3080, %v3082
        %v3084 = vrot.slane %v2575, 2
        %v3085 = vsel %vm3052, %v3082, %v3084
        %v3086 = vrot.slane %v2576, 2
        %v3087 = vsel %vm3052, %v3084, %v3086
        %v3088 = vrot.slane %v2577, 2
        %v3089 = vsel %vm3052, %v3086, %v3088
        %v3090 = vrot.slane %v2578, 2
        %v3091 = vsel %vm3052, %v3088, %v3090
        %3111 = vmatpush.msra.mxu0 %v3050
        %3112 = vmatpush.msra.mxu0 %v3048
        %3113 = vmatpush.msra.mxu0 %v3046
        %3114 = vmatpush.msra.mxu0 %v3044
        %3115 = vmatpush.msra.mxu0 %v3042
        %3116 = vmatpush.msra.mxu0 %v3040
        %3117 = vmatpush.msra.mxu0 %v3038
        %3118 = vmatpush.msra.mxu0 %v3036
        %3119 = vmatpush.msra.mxu0 %v3034
        %3120 = vmatpush.msra.mxu0 %v3032
        %3121 = vmatpush.msra.mxu0 %v3030
        %3122 = vmatpush.msra.mxu0 %v3028
        %3123 = vmatpush.msra.mxu0 %v3026
        %3124 = vmatpush.msra.mxu0 %v3024
        %3125 = vmatpush.msra.mxu0 %v3022
        %3126 = vmatpush.msra.mxu0 %v3020
        %3127 = vmatmul.f32.gmra.mxu0 %v3055
        %v3128 = vpop.f32.mrf.mxu0
        %v3129 = vadd.f32 0.0, %v3128
        %3130 = vmatmul.f32.gmra.mxu0 %v3057
        %v3131 = vpop.f32.mrf.mxu0
        %v3132 = vadd.f32 0.0, %v3131
        %3133 = vmatmul.f32.gmra.mxu0 %v3059
        %v3134 = vpop.f32.mrf.mxu0
        %v3135 = vadd.f32 0.0, %v3134
        %3136 = vmatmul.f32.gmra.mxu0 %v3061
        %v3137 = vpop.f32.mrf.mxu0
        %v3138 = vadd.f32 0.0, %v3137
        %3139 = vmatmul.f32.gmra.mxu0 %v3063
        %v3140 = vpop.f32.mrf.mxu0
        %v3141 = vadd.f32 0.0, %v3140
        %3142 = vmatmul.f32.gmra.mxu0 %v3065
        %v3143 = vpop.f32.mrf.mxu0
        %v3144 = vadd.f32 0.0, %v3143
        %3145 = vmatmul.f32.gmra.mxu0 %v3067
        %v3146 = vpop.f32.mrf.mxu0
        %v3147 = vadd.f32 0.0, %v3146
        %3148 = vmatmul.f32.gmra.mxu0 %v3069
        %v3149 = vpop.f32.mrf.mxu0
        %v3150 = vadd.f32 0.0, %v3149
        %3151 = vmatmul.f32.gmra.mxu0 %v3071
        %v3152 = vpop.f32.mrf.mxu0
        %v3153 = vadd.f32 0.0, %v3152
        %3154 = vmatmul.f32.gmra.mxu0 %v3073
        %v3155 = vpop.f32.mrf.mxu0
        %v3156 = vadd.f32 0.0, %v3155
        %3157 = vmatmul.f32.gmra.mxu0 %v3075
        %v3158 = vpop.f32.mrf.mxu0
        %v3159 = vadd.f32 0.0, %v3158
        %3160 = vmatmul.f32.gmra.mxu0 %v3077
        %v3161 = vpop.f32.mrf.mxu0
        %v3162 = vadd.f32 0.0, %v3161
        %3163 = vmatmul.f32.gmra.mxu0 %v3079
        %v3164 = vpop.f32.mrf.mxu0
        %v3165 = vadd.f32 0.0, %v3164
        %3166 = vmatmul.f32.gmra.mxu0 %v3081
        %v3167 = vpop.f32.mrf.mxu0
        %v3168 = vadd.f32 0.0, %v3167
        %3169 = vmatmul.f32.gmra.mxu0 %v3083
        %v3170 = vpop.f32.mrf.mxu0
        %v3171 = vadd.f32 0.0, %v3170
        %3172 = vmatmul.f32.gmra.mxu0 %v3085
        %v3173 = vpop.f32.mrf.mxu0
        %v3174 = vadd.f32 0.0, %v3173
        %3175 = vmatmul.f32.gmra.mxu0 %v3087
        %v3176 = vpop.f32.mrf.mxu0
        %v3177 = vadd.f32 0.0, %v3176
        %3178 = vmatmul.f32.gmra.mxu0 %v3089
        %v3179 = vpop.f32.mrf.mxu0
        %v3180 = vadd.f32 0.0, %v3179
        %3181 = vmatmul.f32.gmra.mxu0 %v3091
        %v3182 = vpop.f32.mrf.mxu0
        %v3183 = vadd.f32 0.0, %v3182
        %3184 = vdwg.mxu0
        %3185 = vmatpush.msra.mxu0 %v3051
        %3186 = vmatpush.msra.mxu0 %v3049
        %3187 = vmatpush.msra.mxu0 %v3047
        %3188 = vmatpush.msra.mxu0 %v3045
        %3189 = vmatpush.msra.mxu0 %v3043
        %3190 = vmatpush.msra.mxu0 %v3041
        %3191 = vmatpush.msra.mxu0 %v3039
        %3192 = vmatpush.msra.mxu0 %v3037
        %3193 = vmatpush.msra.mxu0 %v3035
        %3194 = vmatpush.msra.mxu0 %v3033
        %3195 = vmatpush.msra.mxu0 %v3031
        %3196 = vmatpush.msra.mxu0 %v3029
        %3197 = vmatpush.msra.mxu0 %v3027
        %3198 = vmatpush.msra.mxu0 %v3025
        %3199 = vmatpush.msra.mxu0 %v3023
        %3200 = vmatpush.msra.mxu0 %v3021
        %3201 = vmatmul.f32.gmra.mxu0 %v3055
        %v3202 = vpop.f32.mrf.mxu0
        %v3203 = vadd.f32 0.0, %v3202
        %3204 = vmatmul.f32.gmra.mxu0 %v3057
        %v3205 = vpop.f32.mrf.mxu0
        %v3206 = vadd.f32 0.0, %v3205
        %3207 = vmatmul.f32.gmra.mxu0 %v3059
        %v3208 = vpop.f32.mrf.mxu0
        %v3209 = vadd.f32 0.0, %v3208
        %3210 = vmatmul.f32.gmra.mxu0 %v3061
        %v3211 = vpop.f32.mrf.mxu0
        %v3212 = vadd.f32 0.0, %v3211
        %3213 = vmatmul.f32.gmra.mxu0 %v3063
        %v3214 = vpop.f32.mrf.mxu0
        %v3215 = vadd.f32 0.0, %v3214
        %3216 = vmatmul.f32.gmra.mxu0 %v3065
        %v3217 = vpop.f32.mrf.mxu0
        %v3218 = vadd.f32 0.0, %v3217
        %3219 = vmatmul.f32.gmra.mxu0 %v3067
        %v3220 = vpop.f32.mrf.mxu0
        %v3221 = vadd.f32 0.0, %v3220
        %3222 = vmatmul.f32.gmra.mxu0 %v3069
        %v3223 = vpop.f32.mrf.mxu0
        %v3224 = vadd.f32 0.0, %v3223
        %3225 = vmatmul.f32.gmra.mxu0 %v3071
        %v3226 = vpop.f32.mrf.mxu0
        %v3227 = vadd.f32 0.0, %v3226
        %3228 = vmatmul.f32.gmra.mxu0 %v3073
        %v3229 = vpop.f32.mrf.mxu0
        %v3230 = vadd.f32 0.0, %v3229
        %3231 = vmatmul.f32.gmra.mxu0 %v3075
        %v3232 = vpop.f32.mrf.mxu0
        %v3233 = vadd.f32 0.0, %v3232
        %3234 = vmatmul.f32.gmra.mxu0 %v3077
        %v3235 = vpop.f32.mrf.mxu0
        %v3236 = vadd.f32 0.0, %v3235
        %3237 = vmatmul.f32.gmra.mxu0 %v3079
        %v3238 = vpop.f32.mrf.mxu0
        %v3239 = vadd.f32 0.0, %v3238
        %3240 = vmatmul.f32.gmra.mxu0 %v3081
        %v3241 = vpop.f32.mrf.mxu0
        %v3242 = vadd.f32 0.0, %v3241
        %3243 = vmatmul.f32.gmra.mxu0 %v3083
        %v3244 = vpop.f32.mrf.mxu0
        %v3245 = vadd.f32 0.0, %v3244
        %3246 = vmatmul.f32.gmra.mxu0 %v3085
        %v3247 = vpop.f32.mrf.mxu0
        %v3248 = vadd.f32 0.0, %v3247
        %3249 = vmatmul.f32.gmra.mxu0 %v3087
        %v3250 = vpop.f32.mrf.mxu0
        %v3251 = vadd.f32 0.0, %v3250
        %3252 = vmatmul.f32.gmra.mxu0 %v3089
        %v3253 = vpop.f32.mrf.mxu0
        %v3254 = vadd.f32 0.0, %v3253
        %3255 = vmatmul.f32.gmra.mxu0 %v3091
        %v3256 = vpop.f32.mrf.mxu0
        %v3257 = vadd.f32 0.0, %v3256
        %3258 = vdwg.mxu0
        %v3259 = vadd.f32 %v2889, %v3129
        %v3260 = vadd.f32 %v2963, %v3203
        %v3261 = vadd.f32 %v2892, %v3132
        %v3262 = vadd.f32 %v2966, %v3206
        %v3263 = vadd.f32 %v2895, %v3135
        %v3264 = vadd.f32 %v2969, %v3209
        %v3265 = vadd.f32 %v2898, %v3138
        %v3266 = vadd.f32 %v2972, %v3212
        %v3267 = vadd.f32 %v2901, %v3141
        %v3268 = vadd.f32 %v2975, %v3215
        %v3269 = vadd.f32 %v2904, %v3144
        %v3270 = vadd.f32 %v2978, %v3218
        %v3271 = vadd.f32 %v2907, %v3147
        %v3272 = vadd.f32 %v2981, %v3221
        %v3273 = vadd.f32 %v2910, %v3150
        %v3274 = vadd.f32 %v2984, %v3224
        %v3275 = vadd.f32 %v2913, %v3153
        %v3276 = vadd.f32 %v2987, %v3227
        %v3277 = vadd.f32 %v2916, %v3156
        %v3278 = vadd.f32 %v2990, %v3230
        %v3279 = vadd.f32 %v2919, %v3159
        %v3280 = vadd.f32 %v2993, %v3233
        %v3281 = vadd.f32 %v2922, %v3162
        %v3282 = vadd.f32 %v2996, %v3236
        %v3283 = vadd.f32 %v2925, %v3165
        %v3284 = vadd.f32 %v2999, %v3239
        %v3285 = vadd.f32 %v2928, %v3168
        %v3286 = vadd.f32 %v3002, %v3242
        %v3287 = vadd.f32 %v2931, %v3171
        %v3288 = vadd.f32 %v3005, %v3245
        %v3289 = vadd.f32 %v2934, %v3174
        %v3290 = vadd.f32 %v3008, %v3248
        %v3291 = vadd.f32 %v2937, %v3177
        %v3292 = vadd.f32 %v3011, %v3251
        %v3293 = vadd.f32 %v2940, %v3180
        %v3294 = vadd.f32 %v3014, %v3254
        %v3295 = vadd.f32 %v2943, %v3183
        %v3296 = vadd.f32 %v3017, %v3257
        %s3297 = scalar_lea.vmem %s3, 768
        %v3298 = vld [vmem:[%s3297] sm:$0xff]
        %v3299 = vld [vmem:[%s3297 + $0x8] sm:$0xff]
        %v3300 = vld [vmem:[%s3297 + $0x10] sm:$0xff]
        %v3301 = vld [vmem:[%s3297 + $0x18] sm:$0xff]
        %v3302 = vld [vmem:[%s3297 + $0x20] sm:$0xff]
        %v3303 = vld [vmem:[%s3297 + $0x28] sm:$0xff]
        %v3304 = vld [vmem:[%s3297 + $0x30] sm:$0xff]
        %v3305 = vld [vmem:[%s3297 + $0x38] sm:$0xff]
        %v3306 = vld [vmem:[%s3297 + $0x40] sm:$0xff]
        %v3307 = vld [vmem:[%s3297 + $0x48] sm:$0xff]
        %v3308 = vld [vmem:[%s3297 + $0x50] sm:$0xff]
        %v3309 = vld [vmem:[%s3297 + $0x58] sm:$0xff]
        %v3310 = vld [vmem:[%s3297 + $0x60] sm:$0xff]
        %v3311 = vld [vmem:[%s3297 + $0x68] sm:$0xff]
        %v3312 = vld [vmem:[%s3297 + $0x70] sm:$0xff]
        %v3313 = vld [vmem:[%s3297 + $0x78] sm:$0xff]
        %v3314 = vld [vmem:[%s3297 + $0x80] sm:$0xff]
        %v3315 = vld [vmem:[%s3297 + $0x88] sm:$0xff]
        %v3316 = vld [vmem:[%s3297 + $0x90] sm:$0xff]
        %v3317 = vld [vmem:[%s3297 + $0x98] sm:$0xff]
        %v3318 = vld [vmem:[%s3297 + $0xa0] sm:$0xff]
        %v3319 = vld [vmem:[%s3297 + $0xa8] sm:$0xff]
        %v3320 = vld [vmem:[%s3297 + $0xb0] sm:$0xff]
        %v3321 = vld [vmem:[%s3297 + $0xb8] sm:$0xff]
        %v3322 = vld [vmem:[%s3297 + $0xc0] sm:$0xff]
        %v3323 = vld [vmem:[%s3297 + $0xc8] sm:$0xff]
        %v3324 = vld [vmem:[%s3297 + $0xd0] sm:$0xff]
        %v3325 = vld [vmem:[%s3297 + $0xd8] sm:$0xff]
        %v3326 = vld [vmem:[%s3297 + $0xe0] sm:$0xff]
        %v3327 = vld [vmem:[%s3297 + $0xe8] sm:$0xff]
        %v3328 = vld [vmem:[%s3297 + $0xf0] sm:$0xff]
        %v3329 = vld [vmem:[%s3297 + $0xf8] sm:$0xff]
        %vm3330 = vcmask 1044480
        %v3331 = vrot.slane %v2559, 3
        %v3332 = vrot.slane %v2560, 3
        %v3333 = vsel %vm3330, %v3331, %v3332
        %v3334 = vrot.slane %v2561, 3
        %v3335 = vsel %vm3330, %v3332, %v3334
        %v3336 = vrot.slane %v2562, 3
        %v3337 = vsel %vm3330, %v3334, %v3336
        %v3338 = vrot.slane %v2563, 3
        %v3339 = vsel %vm3330, %v3336, %v3338
        %v3340 = vrot.slane %v2564, 3
        %v3341 = vsel %vm3330, %v3338, %v3340
        %v3342 = vrot.slane %v2565, 3
        %v3343 = vsel %vm3330, %v3340, %v3342
        %v3344 = vrot.slane %v2566, 3
        %v3345 = vsel %vm3330, %v3342, %v3344
        %v3346 = vrot.slane %v2567, 3
        %v3347 = vsel %vm3330, %v3344, %v3346
        %v3348 = vrot.slane %v2568, 3
        %v3349 = vsel %vm3330, %v3346, %v3348
        %v3350 = vrot.slane %v2569, 3
        %v3351 = vsel %vm3330, %v3348, %v3350
        %v3352 = vrot.slane %v2570, 3
        %v3353 = vsel %vm3330, %v3350, %v3352
        %v3354 = vrot.slane %v2571, 3
        %v3355 = vsel %vm3330, %v3352, %v3354
        %v3356 = vrot.slane %v2572, 3
        %v3357 = vsel %vm3330, %v3354, %v3356
        %v3358 = vrot.slane %v2573, 3
        %v3359 = vsel %vm3330, %v3356, %v3358
        %v3360 = vrot.slane %v2574, 3
        %v3361 = vsel %vm3330, %v3358, %v3360
        %v3362 = vrot.slane %v2575, 3
        %v3363 = vsel %vm3330, %v3360, %v3362
        %v3364 = vrot.slane %v2576, 3
        %v3365 = vsel %vm3330, %v3362, %v3364
        %v3366 = vrot.slane %v2577, 3
        %v3367 = vsel %vm3330, %v3364, %v3366
        %v3368 = vrot.slane %v2578, 3
        %v3369 = vsel %vm3330, %v3366, %v3368
        %3389 = vmatpush.msra.mxu0 %v3328
        %3390 = vmatpush.msra.mxu0 %v3326
        %3391 = vmatpush.msra.mxu0 %v3324
        %3392 = vmatpush.msra.mxu0 %v3322
        %3393 = vmatpush.msra.mxu0 %v3320
        %3394 = vmatpush.msra.mxu0 %v3318
        %3395 = vmatpush.msra.mxu0 %v3316
        %3396 = vmatpush.msra.mxu0 %v3314
        %3397 = vmatpush.msra.mxu0 %v3312
        %3398 = vmatpush.msra.mxu0 %v3310
        %3399 = vmatpush.msra.mxu0 %v3308
        %3400 = vmatpush.msra.mxu0 %v3306
        %3401 = vmatpush.msra.mxu0 %v3304
        %3402 = vmatpush.msra.mxu0 %v3302
        %3403 = vmatpush.msra.mxu0 %v3300
        %3404 = vmatpush.msra.mxu0 %v3298
        %3405 = vmatmul.f32.gmra.mxu0 %v3333
        %v3406 = vpop.f32.mrf.mxu0
        %v3407 = vadd.f32 0.0, %v3406
        %3408 = vmatmul.f32.gmra.mxu0 %v3335
        %v3409 = vpop.f32.mrf.mxu0
        %v3410 = vadd.f32 0.0, %v3409
        %3411 = vmatmul.f32.gmra.mxu0 %v3337
        %v3412 = vpop.f32.mrf.mxu0
        %v3413 = vadd.f32 0.0, %v3412
        %3414 = vmatmul.f32.gmra.mxu0 %v3339
        %v3415 = vpop.f32.mrf.mxu0
        %v3416 = vadd.f32 0.0, %v3415
        %3417 = vmatmul.f32.gmra.mxu0 %v3341
        %v3418 = vpop.f32.mrf.mxu0
        %v3419 = vadd.f32 0.0, %v3418
        %3420 = vmatmul.f32.gmra.mxu0 %v3343
        %v3421 = vpop.f32.mrf.mxu0
        %v3422 = vadd.f32 0.0, %v3421
        %3423 = vmatmul.f32.gmra.mxu0 %v3345
        %v3424 = vpop.f32.mrf.mxu0
        %v3425 = vadd.f32 0.0, %v3424
        %3426 = vmatmul.f32.gmra.mxu0 %v3347
        %v3427 = vpop.f32.mrf.mxu0
        %v3428 = vadd.f32 0.0, %v3427
        %3429 = vmatmul.f32.gmra.mxu0 %v3349
        %v3430 = vpop.f32.mrf.mxu0
        %v3431 = vadd.f32 0.0, %v3430
        %3432 = vmatmul.f32.gmra.mxu0 %v3351
        %v3433 = vpop.f32.mrf.mxu0
        %v3434 = vadd.f32 0.0, %v3433
        %3435 = vmatmul.f32.gmra.mxu0 %v3353
        %v3436 = vpop.f32.mrf.mxu0
        %v3437 = vadd.f32 0.0, %v3436
        %3438 = vmatmul.f32.gmra.mxu0 %v3355
        %v3439 = vpop.f32.mrf.mxu0
        %v3440 = vadd.f32 0.0, %v3439
        %3441 = vmatmul.f32.gmra.mxu0 %v3357
        %v3442 = vpop.f32.mrf.mxu0
        %v3443 = vadd.f32 0.0, %v3442
        %3444 = vmatmul.f32.gmra.mxu0 %v3359
        %v3445 = vpop.f32.mrf.mxu0
        %v3446 = vadd.f32 0.0, %v3445
        %3447 = vmatmul.f32.gmra.mxu0 %v3361
        %v3448 = vpop.f32.mrf.mxu0
        %v3449 = vadd.f32 0.0, %v3448
        %3450 = vmatmul.f32.gmra.mxu0 %v3363
        %v3451 = vpop.f32.mrf.mxu0
        %v3452 = vadd.f32 0.0, %v3451
        %3453 = vmatmul.f32.gmra.mxu0 %v3365
        %v3454 = vpop.f32.mrf.mxu0
        %v3455 = vadd.f32 0.0, %v3454
        %3456 = vmatmul.f32.gmra.mxu0 %v3367
        %v3457 = vpop.f32.mrf.mxu0
        %v3458 = vadd.f32 0.0, %v3457
        %3459 = vmatmul.f32.gmra.mxu0 %v3369
        %v3460 = vpop.f32.mrf.mxu0
        %v3461 = vadd.f32 0.0, %v3460
        %3462 = vdwg.mxu0
        %3463 = vmatpush.msra.mxu0 %v3329
        %3464 = vmatpush.msra.mxu0 %v3327
        %3465 = vmatpush.msra.mxu0 %v3325
        %3466 = vmatpush.msra.mxu0 %v3323
        %3467 = vmatpush.msra.mxu0 %v3321
        %3468 = vmatpush.msra.mxu0 %v3319
        %3469 = vmatpush.msra.mxu0 %v3317
        %3470 = vmatpush.msra.mxu0 %v3315
        %3471 = vmatpush.msra.mxu0 %v3313
        %3472 = vmatpush.msra.mxu0 %v3311
        %3473 = vmatpush.msra.mxu0 %v3309
        %3474 = vmatpush.msra.mxu0 %v3307
        %3475 = vmatpush.msra.mxu0 %v3305
        %3476 = vmatpush.msra.mxu0 %v3303
        %3477 = vmatpush.msra.mxu0 %v3301
        %3478 = vmatpush.msra.mxu0 %v3299
        %3479 = vmatmul.f32.gmra.mxu0 %v3333
        %v3480 = vpop.f32.mrf.mxu0
        %v3481 = vadd.f32 0.0, %v3480
        %3482 = vmatmul.f32.gmra.mxu0 %v3335
        %v3483 = vpop.f32.mrf.mxu0
        %v3484 = vadd.f32 0.0, %v3483
        %3485 = vmatmul.f32.gmra.mxu0 %v3337
        %v3486 = vpop.f32.mrf.mxu0
        %v3487 = vadd.f32 0.0, %v3486
        %3488 = vmatmul.f32.gmra.mxu0 %v3339
        %v3489 = vpop.f32.mrf.mxu0
        %v3490 = vadd.f32 0.0, %v3489
        %3491 = vmatmul.f32.gmra.mxu0 %v3341
        %v3492 = vpop.f32.mrf.mxu0
        %v3493 = vadd.f32 0.0, %v3492
        %3494 = vmatmul.f32.gmra.mxu0 %v3343
        %v3495 = vpop.f32.mrf.mxu0
        %v3496 = vadd.f32 0.0, %v3495
        %3497 = vmatmul.f32.gmra.mxu0 %v3345
        %v3498 = vpop.f32.mrf.mxu0
        %v3499 = vadd.f32 0.0, %v3498
        %3500 = vmatmul.f32.gmra.mxu0 %v3347
        %v3501 = vpop.f32.mrf.mxu0
        %v3502 = vadd.f32 0.0, %v3501
        %3503 = vmatmul.f32.gmra.mxu0 %v3349
        %v3504 = vpop.f32.mrf.mxu0
        %v3505 = vadd.f32 0.0, %v3504
        %3506 = vmatmul.f32.gmra.mxu0 %v3351
        %v3507 = vpop.f32.mrf.mxu0
        %v3508 = vadd.f32 0.0, %v3507
        %3509 = vmatmul.f32.gmra.mxu0 %v3353
        %v3510 = vpop.f32.mrf.mxu0
        %v3511 = vadd.f32 0.0, %v3510
        %3512 = vmatmul.f32.gmra.mxu0 %v3355
        %v3513 = vpop.f32.mrf.mxu0
        %v3514 = vadd.f32 0.0, %v3513
        %3515 = vmatmul.f32.gmra.mxu0 %v3357
        %v3516 = vpop.f32.mrf.mxu0
        %v3517 = vadd.f32 0.0, %v3516
        %3518 = vmatmul.f32.gmra.mxu0 %v3359
        %v3519 = vpop.f32.mrf.mxu0
        %v3520 = vadd.f32 0.0, %v3519
        %3521 = vmatmul.f32.gmra.mxu0 %v3361
        %v3522 = vpop.f32.mrf.mxu0
        %v3523 = vadd.f32 0.0, %v3522
        %3524 = vmatmul.f32.gmra.mxu0 %v3363
        %v3525 = vpop.f32.mrf.mxu0
        %v3526 = vadd.f32 0.0, %v3525
        %3527 = vmatmul.f32.gmra.mxu0 %v3365
        %v3528 = vpop.f32.mrf.mxu0
        %v3529 = vadd.f32 0.0, %v3528
        %3530 = vmatmul.f32.gmra.mxu0 %v3367
        %v3531 = vpop.f32.mrf.mxu0
        %v3532 = vadd.f32 0.0, %v3531
        %3533 = vmatmul.f32.gmra.mxu0 %v3369
        %v3534 = vpop.f32.mrf.mxu0
        %v3535 = vadd.f32 0.0, %v3534
        %3536 = vdwg.mxu0
        %v3537 = vadd.f32 %v3259, %v3407
        %v3538 = vadd.f32 %v3260, %v3481
        %v3539 = vadd.f32 %v3261, %v3410
        %v3540 = vadd.f32 %v3262, %v3484
        %v3541 = vadd.f32 %v3263, %v3413
        %v3542 = vadd.f32 %v3264, %v3487
        %v3543 = vadd.f32 %v3265, %v3416
        %v3544 = vadd.f32 %v3266, %v3490
        %v3545 = vadd.f32 %v3267, %v3419
        %v3546 = vadd.f32 %v3268, %v3493
        %v3547 = vadd.f32 %v3269, %v3422
        %v3548 = vadd.f32 %v3270, %v3496
        %v3549 = vadd.f32 %v3271, %v3425
        %v3550 = vadd.f32 %v3272, %v3499
        %v3551 = vadd.f32 %v3273, %v3428
        %v3552 = vadd.f32 %v3274, %v3502
        %v3553 = vadd.f32 %v3275, %v3431
        %v3554 = vadd.f32 %v3276, %v3505
        %v3555 = vadd.f32 %v3277, %v3434
        %v3556 = vadd.f32 %v3278, %v3508
        %v3557 = vadd.f32 %v3279, %v3437
        %v3558 = vadd.f32 %v3280, %v3511
        %v3559 = vadd.f32 %v3281, %v3440
        %v3560 = vadd.f32 %v3282, %v3514
        %v3561 = vadd.f32 %v3283, %v3443
        %v3562 = vadd.f32 %v3284, %v3517
        %v3563 = vadd.f32 %v3285, %v3446
        %v3564 = vadd.f32 %v3286, %v3520
        %v3565 = vadd.f32 %v3287, %v3449
        %v3566 = vadd.f32 %v3288, %v3523
        %v3567 = vadd.f32 %v3289, %v3452
        %v3568 = vadd.f32 %v3290, %v3526
        %v3569 = vadd.f32 %v3291, %v3455
        %v3570 = vadd.f32 %v3292, %v3529
        %v3571 = vadd.f32 %v3293, %v3458
        %v3572 = vadd.f32 %v3294, %v3532
        %v3573 = vadd.f32 %v3295, %v3461
        %v3574 = vadd.f32 %v3296, %v3535
        %s3575 = scalar_lea.vmem %s3, 1024
        %v3576 = vld [vmem:[%s3575] sm:$0xff]
        %v3577 = vld [vmem:[%s3575 + $0x8] sm:$0xff]
        %v3578 = vld [vmem:[%s3575 + $0x10] sm:$0xff]
        %v3579 = vld [vmem:[%s3575 + $0x18] sm:$0xff]
        %v3580 = vld [vmem:[%s3575 + $0x20] sm:$0xff]
        %v3581 = vld [vmem:[%s3575 + $0x28] sm:$0xff]
        %v3582 = vld [vmem:[%s3575 + $0x30] sm:$0xff]
        %v3583 = vld [vmem:[%s3575 + $0x38] sm:$0xff]
        %v3584 = vld [vmem:[%s3575 + $0x40] sm:$0xff]
        %v3585 = vld [vmem:[%s3575 + $0x48] sm:$0xff]
        %v3586 = vld [vmem:[%s3575 + $0x50] sm:$0xff]
        %v3587 = vld [vmem:[%s3575 + $0x58] sm:$0xff]
        %v3588 = vld [vmem:[%s3575 + $0x60] sm:$0xff]
        %v3589 = vld [vmem:[%s3575 + $0x68] sm:$0xff]
        %v3590 = vld [vmem:[%s3575 + $0x70] sm:$0xff]
        %v3591 = vld [vmem:[%s3575 + $0x78] sm:$0xff]
        %v3592 = vld [vmem:[%s3575 + $0x80] sm:$0xff]
        %v3593 = vld [vmem:[%s3575 + $0x88] sm:$0xff]
        %v3594 = vld [vmem:[%s3575 + $0x90] sm:$0xff]
        %v3595 = vld [vmem:[%s3575 + $0x98] sm:$0xff]
        %v3596 = vld [vmem:[%s3575 + $0xa0] sm:$0xff]
        %v3597 = vld [vmem:[%s3575 + $0xa8] sm:$0xff]
        %v3598 = vld [vmem:[%s3575 + $0xb0] sm:$0xff]
        %v3599 = vld [vmem:[%s3575 + $0xb8] sm:$0xff]
        %v3600 = vld [vmem:[%s3575 + $0xc0] sm:$0xff]
        %v3601 = vld [vmem:[%s3575 + $0xc8] sm:$0xff]
        %v3602 = vld [vmem:[%s3575 + $0xd0] sm:$0xff]
        %v3603 = vld [vmem:[%s3575 + $0xd8] sm:$0xff]
        %v3604 = vld [vmem:[%s3575 + $0xe0] sm:$0xff]
        %v3605 = vld [vmem:[%s3575 + $0xe8] sm:$0xff]
        %v3606 = vld [vmem:[%s3575 + $0xf0] sm:$0xff]
        %v3607 = vld [vmem:[%s3575 + $0xf8] sm:$0xff]
        %vm3608 = vcmask 1043456
        %v3609 = vrot.slane %v2559, 4
        %v3610 = vrot.slane %v2560, 4
        %v3611 = vsel %vm3608, %v3609, %v3610
        %v3612 = vrot.slane %v2561, 4
        %v3613 = vsel %vm3608, %v3610, %v3612
        %v3614 = vrot.slane %v2562, 4
        %v3615 = vsel %vm3608, %v3612, %v3614
        %v3616 = vrot.slane %v2563, 4
        %v3617 = vsel %vm3608, %v3614, %v3616
        %v3618 = vrot.slane %v2564, 4
        %v3619 = vsel %vm3608, %v3616, %v3618
        %v3620 = vrot.slane %v2565, 4
        %v3621 = vsel %vm3608, %v3618, %v3620
        %v3622 = vrot.slane %v2566, 4
        %v3623 = vsel %vm3608, %v3620, %v3622
        %v3624 = vrot.slane %v2567, 4
        %v3625 = vsel %vm3608, %v3622, %v3624
        %v3626 = vrot.slane %v2568, 4
        %v3627 = vsel %vm3608, %v3624, %v3626
        %v3628 = vrot.slane %v2569, 4
        %v3629 = vsel %vm3608, %v3626, %v3628
        %v3630 = vrot.slane %v2570, 4
        %v3631 = vsel %vm3608, %v3628, %v3630
        %v3632 = vrot.slane %v2571, 4
        %v3633 = vsel %vm3608, %v3630, %v3632
        %v3634 = vrot.slane %v2572, 4
        %v3635 = vsel %vm3608, %v3632, %v3634
        %v3636 = vrot.slane %v2573, 4
        %v3637 = vsel %vm3608, %v3634, %v3636
        %v3638 = vrot.slane %v2574, 4
        %v3639 = vsel %vm3608, %v3636, %v3638
        %v3640 = vrot.slane %v2575, 4
        %v3641 = vsel %vm3608, %v3638, %v3640
        %v3642 = vrot.slane %v2576, 4
        %v3643 = vsel %vm3608, %v3640, %v3642
        %v3644 = vrot.slane %v2577, 4
        %v3645 = vsel %vm3608, %v3642, %v3644
        %v3646 = vrot.slane %v2578, 4
        %v3647 = vsel %vm3608, %v3644, %v3646
        %3667 = vmatpush.msra.mxu0 %v3606
        %3668 = vmatpush.msra.mxu0 %v3604
        %3669 = vmatpush.msra.mxu0 %v3602
        %3670 = vmatpush.msra.mxu0 %v3600
        %3671 = vmatpush.msra.mxu0 %v3598
        %3672 = vmatpush.msra.mxu0 %v3596
        %3673 = vmatpush.msra.mxu0 %v3594
        %3674 = vmatpush.msra.mxu0 %v3592
        %3675 = vmatpush.msra.mxu0 %v3590
        %3676 = vmatpush.msra.mxu0 %v3588
        %3677 = vmatpush.msra.mxu0 %v3586
        %3678 = vmatpush.msra.mxu0 %v3584
        %3679 = vmatpush.msra.mxu0 %v3582
        %3680 = vmatpush.msra.mxu0 %v3580
        %3681 = vmatpush.msra.mxu0 %v3578
        %3682 = vmatpush.msra.mxu0 %v3576
        %3683 = vmatmul.f32.gmra.mxu0 %v3611
        %v3684 = vpop.f32.mrf.mxu0
        %v3685 = vadd.f32 0.0, %v3684
        %3686 = vmatmul.f32.gmra.mxu0 %v3613
        %v3687 = vpop.f32.mrf.mxu0
        %v3688 = vadd.f32 0.0, %v3687
        %3689 = vmatmul.f32.gmra.mxu0 %v3615
        %v3690 = vpop.f32.mrf.mxu0
        %v3691 = vadd.f32 0.0, %v3690
        %3692 = vmatmul.f32.gmra.mxu0 %v3617
        %v3693 = vpop.f32.mrf.mxu0
        %v3694 = vadd.f32 0.0, %v3693
        %3695 = vmatmul.f32.gmra.mxu0 %v3619
        %v3696 = vpop.f32.mrf.mxu0
        %v3697 = vadd.f32 0.0, %v3696
        %3698 = vmatmul.f32.gmra.mxu0 %v3621
        %v3699 = vpop.f32.mrf.mxu0
        %v3700 = vadd.f32 0.0, %v3699
        %3701 = vmatmul.f32.gmra.mxu0 %v3623
        %v3702 = vpop.f32.mrf.mxu0
        %v3703 = vadd.f32 0.0, %v3702
        %3704 = vmatmul.f32.gmra.mxu0 %v3625
        %v3705 = vpop.f32.mrf.mxu0
        %v3706 = vadd.f32 0.0, %v3705
        %3707 = vmatmul.f32.gmra.mxu0 %v3627
        %v3708 = vpop.f32.mrf.mxu0
        %v3709 = vadd.f32 0.0, %v3708
        %3710 = vmatmul.f32.gmra.mxu0 %v3629
        %v3711 = vpop.f32.mrf.mxu0
        %v3712 = vadd.f32 0.0, %v3711
        %3713 = vmatmul.f32.gmra.mxu0 %v3631
        %v3714 = vpop.f32.mrf.mxu0
        %v3715 = vadd.f32 0.0, %v3714
        %3716 = vmatmul.f32.gmra.mxu0 %v3633
        %v3717 = vpop.f32.mrf.mxu0
        %v3718 = vadd.f32 0.0, %v3717
        %3719 = vmatmul.f32.gmra.mxu0 %v3635
        %v3720 = vpop.f32.mrf.mxu0
        %v3721 = vadd.f32 0.0, %v3720
        %3722 = vmatmul.f32.gmra.mxu0 %v3637
        %v3723 = vpop.f32.mrf.mxu0
        %v3724 = vadd.f32 0.0, %v3723
        %3725 = vmatmul.f32.gmra.mxu0 %v3639
        %v3726 = vpop.f32.mrf.mxu0
        %v3727 = vadd.f32 0.0, %v3726
        %3728 = vmatmul.f32.gmra.mxu0 %v3641
        %v3729 = vpop.f32.mrf.mxu0
        %v3730 = vadd.f32 0.0, %v3729
        %3731 = vmatmul.f32.gmra.mxu0 %v3643
        %v3732 = vpop.f32.mrf.mxu0
        %v3733 = vadd.f32 0.0, %v3732
        %3734 = vmatmul.f32.gmra.mxu0 %v3645
        %v3735 = vpop.f32.mrf.mxu0
        %v3736 = vadd.f32 0.0, %v3735
        %3737 = vmatmul.f32.gmra.mxu0 %v3647
        %v3738 = vpop.f32.mrf.mxu0
        %v3739 = vadd.f32 0.0, %v3738
        %3740 = vdwg.mxu0
        %3741 = vmatpush.msra.mxu0 %v3607
        %3742 = vmatpush.msra.mxu0 %v3605
        %3743 = vmatpush.msra.mxu0 %v3603
        %3744 = vmatpush.msra.mxu0 %v3601
        %3745 = vmatpush.msra.mxu0 %v3599
        %3746 = vmatpush.msra.mxu0 %v3597
        %3747 = vmatpush.msra.mxu0 %v3595
        %3748 = vmatpush.msra.mxu0 %v3593
        %3749 = vmatpush.msra.mxu0 %v3591
        %3750 = vmatpush.msra.mxu0 %v3589
        %3751 = vmatpush.msra.mxu0 %v3587
        %3752 = vmatpush.msra.mxu0 %v3585
        %3753 = vmatpush.msra.mxu0 %v3583
        %3754 = vmatpush.msra.mxu0 %v3581
        %3755 = vmatpush.msra.mxu0 %v3579
        %3756 = vmatpush.msra.mxu0 %v3577
        %3757 = vmatmul.f32.gmra.mxu0 %v3611
        %v3758 = vpop.f32.mrf.mxu0
        %v3759 = vadd.f32 0.0, %v3758
        %3760 = vmatmul.f32.gmra.mxu0 %v3613
        %v3761 = vpop.f32.mrf.mxu0
        %v3762 = vadd.f32 0.0, %v3761
        %3763 = vmatmul.f32.gmra.mxu0 %v3615
        %v3764 = vpop.f32.mrf.mxu0
        %v3765 = vadd.f32 0.0, %v3764
        %3766 = vmatmul.f32.gmra.mxu0 %v3617
        %v3767 = vpop.f32.mrf.mxu0
        %v3768 = vadd.f32 0.0, %v3767
        %3769 = vmatmul.f32.gmra.mxu0 %v3619
        %v3770 = vpop.f32.mrf.mxu0
        %v3771 = vadd.f32 0.0, %v3770
        %3772 = vmatmul.f32.gmra.mxu0 %v3621
        %v3773 = vpop.f32.mrf.mxu0
        %v3774 = vadd.f32 0.0, %v3773
        %3775 = vmatmul.f32.gmra.mxu0 %v3623
        %v3776 = vpop.f32.mrf.mxu0
        %v3777 = vadd.f32 0.0, %v3776
        %3778 = vmatmul.f32.gmra.mxu0 %v3625
        %v3779 = vpop.f32.mrf.mxu0
        %v3780 = vadd.f32 0.0, %v3779
        %3781 = vmatmul.f32.gmra.mxu0 %v3627
        %v3782 = vpop.f32.mrf.mxu0
        %v3783 = vadd.f32 0.0, %v3782
        %3784 = vmatmul.f32.gmra.mxu0 %v3629
        %v3785 = vpop.f32.mrf.mxu0
        %v3786 = vadd.f32 0.0, %v3785
        %3787 = vmatmul.f32.gmra.mxu0 %v3631
        %v3788 = vpop.f32.mrf.mxu0
        %v3789 = vadd.f32 0.0, %v3788
        %3790 = vmatmul.f32.gmra.mxu0 %v3633
        %v3791 = vpop.f32.mrf.mxu0
        %v3792 = vadd.f32 0.0, %v3791
        %3793 = vmatmul.f32.gmra.mxu0 %v3635
        %v3794 = vpop.f32.mrf.mxu0
        %v3795 = vadd.f32 0.0, %v3794
        %3796 = vmatmul.f32.gmra.mxu0 %v3637
        %v3797 = vpop.f32.mrf.mxu0
        %v3798 = vadd.f32 0.0, %v3797
        %3799 = vmatmul.f32.gmra.mxu0 %v3639
        %v3800 = vpop.f32.mrf.mxu0
        %v3801 = vadd.f32 0.0, %v3800
        %3802 = vmatmul.f32.gmra.mxu0 %v3641
        %v3803 = vpop.f32.mrf.mxu0
        %v3804 = vadd.f32 0.0, %v3803
        %3805 = vmatmul.f32.gmra.mxu0 %v3643
        %v3806 = vpop.f32.mrf.mxu0
        %v3807 = vadd.f32 0.0, %v3806
        %3808 = vmatmul.f32.gmra.mxu0 %v3645
        %v3809 = vpop.f32.mrf.mxu0
        %v3810 = vadd.f32 0.0, %v3809
        %3811 = vmatmul.f32.gmra.mxu0 %v3647
        %v3812 = vpop.f32.mrf.mxu0
        %v3813 = vadd.f32 0.0, %v3812
        %3814 = vdwg.mxu0
        %v3815 = vadd.f32 %v3537, %v3685
        %v3816 = vadd.f32 %v3538, %v3759
        %v3817 = vadd.f32 %v3539, %v3688
        %v3818 = vadd.f32 %v3540, %v3762
        %v3819 = vadd.f32 %v3541, %v3691
        %v3820 = vadd.f32 %v3542, %v3765
        %v3821 = vadd.f32 %v3543, %v3694
        %v3822 = vadd.f32 %v3544, %v3768
        %v3823 = vadd.f32 %v3545, %v3697
        %v3824 = vadd.f32 %v3546, %v3771
        %v3825 = vadd.f32 %v3547, %v3700
        %v3826 = vadd.f32 %v3548, %v3774
        %v3827 = vadd.f32 %v3549, %v3703
        %v3828 = vadd.f32 %v3550, %v3777
        %v3829 = vadd.f32 %v3551, %v3706
        %v3830 = vadd.f32 %v3552, %v3780
        %v3831 = vadd.f32 %v3553, %v3709
        %v3832 = vadd.f32 %v3554, %v3783
        %v3833 = vadd.f32 %v3555, %v3712
        %v3834 = vadd.f32 %v3556, %v3786
        %v3835 = vadd.f32 %v3557, %v3715
        %v3836 = vadd.f32 %v3558, %v3789
        %v3837 = vadd.f32 %v3559, %v3718
        %v3838 = vadd.f32 %v3560, %v3792
        %v3839 = vadd.f32 %v3561, %v3721
        %v3840 = vadd.f32 %v3562, %v3795
        %v3841 = vadd.f32 %v3563, %v3724
        %v3842 = vadd.f32 %v3564, %v3798
        %v3843 = vadd.f32 %v3565, %v3727
        %v3844 = vadd.f32 %v3566, %v3801
        %v3845 = vadd.f32 %v3567, %v3730
        %v3846 = vadd.f32 %v3568, %v3804
        %v3847 = vadd.f32 %v3569, %v3733
        %v3848 = vadd.f32 %v3570, %v3807
        %v3849 = vadd.f32 %v3571, %v3736
        %v3850 = vadd.f32 %v3572, %v3810
        %v3851 = vadd.f32 %v3573, %v3739
        %v3852 = vadd.f32 %v3574, %v3813
        %v3853 = vmax.f32 %v3815, %v3816
        %v3854 = vmax.f32 %v3817, %v3818
        %v3855 = vmax.f32 %v3819, %v3820
        %v3856 = vmax.f32 %v3821, %v3822
        %v3857 = vmax.f32 %v3823, %v3824
        %v3858 = vmax.f32 %v3825, %v3826
        %v3859 = vmax.f32 %v3827, %v3828
        %v3860 = vmax.f32 %v3829, %v3830
        %v3861 = vmax.f32 %v3831, %v3832
        %v3862 = vmax.f32 %v3833, %v3834
        %v3863 = vmax.f32 %v3835, %v3836
        %v3864 = vmax.f32 %v3837, %v3838
        %v3865 = vmax.f32 %v3839, %v3840
        %v3866 = vmax.f32 %v3841, %v3842
        %v3867 = vmax.f32 %v3843, %v3844
        %v3868 = vmax.f32 %v3845, %v3846
        %v3869 = vmax.f32 %v3847, %v3848
        %v3870 = vmax.f32 %v3849, %v3850
        %v3871 = vmax.f32 %v3851, %v3852
        %v3872 = vld [vmem:[%s4] sm:$0x1]
        %v3874 = vperm.slane %v3872, 0
        %v3876 = vadd.f32 %v3853, %v3874
        %v3877 = vadd.f32 %v3854, %v3874
        %v3878 = vadd.f32 %v3855, %v3874
        %v3879 = vadd.f32 %v3856, %v3874
        %v3880 = vadd.f32 %v3857, %v3874
        %v3881 = vadd.f32 %v3858, %v3874
        %v3882 = vadd.f32 %v3859, %v3874
        %v3883 = vadd.f32 %v3860, %v3874
        %v3884 = vadd.f32 %v3861, %v3874
        %v3885 = vadd.f32 %v3862, %v3874
        %v3886 = vadd.f32 %v3863, %v3874
        %v3887 = vadd.f32 %v3864, %v3874
        %v3888 = vadd.f32 %v3865, %v3874
        %v3889 = vadd.f32 %v3866, %v3874
        %v3890 = vadd.f32 %v3867, %v3874
        %v3891 = vadd.f32 %v3868, %v3874
        %v3892 = vadd.f32 %v3869, %v3874
        %v3893 = vadd.f32 %v3870, %v3874
        %v3894 = vadd.f32 %v3871, %v3874
        %v3895 = vmax.f32 %v3876, 0.0
        %v3896 = vmax.f32 %v3877, 0.0
        %v3897 = vmax.f32 %v3878, 0.0
        %v3898 = vmax.f32 %v3879, 0.0
        %v3899 = vmax.f32 %v3880, 0.0
        %v3900 = vmax.f32 %v3881, 0.0
        %v3901 = vmax.f32 %v3882, 0.0
        %v3902 = vmax.f32 %v3883, 0.0
        %v3903 = vmax.f32 %v3884, 0.0
        %v3904 = vmax.f32 %v3885, 0.0
        %v3905 = vmax.f32 %v3886, 0.0
        %v3906 = vmax.f32 %v3887, 0.0
        %v3907 = vmax.f32 %v3888, 0.0
        %v3908 = vmax.f32 %v3889, 0.0
        %v3909 = vmax.f32 %v3890, 0.0
        %v3910 = vmax.f32 %v3891, 0.0
        %v3911 = vmax.f32 %v3892, 0.0
        %v3912 = vmax.f32 %v3893, 0.0
        %v3913 = vmax.f32 %v3894, 0.0
        %3914 = vst [vmem:[#allocation3] sm:$0xff] %v3895
        %3915 = vst [vmem:[#allocation3 + $0x8] sm:$0xff] %v3896
        %3916 = vst [vmem:[#allocation3 + $0x10] sm:$0xff] %v3897
        %3917 = vst [vmem:[#allocation3 + $0x18] sm:$0xff] %v3898
        %3918 = vst [vmem:[#allocation3 + $0x20] sm:$0xff] %v3899
        %3919 = vst [vmem:[#allocation3 + $0x28] sm:$0xff] %v3900
        %3920 = vst [vmem:[#allocation3 + $0x30] sm:$0xff] %v3901
        %3921 = vst [vmem:[#allocation3 + $0x38] sm:$0xff] %v3902
        %3922 = vst [vmem:[#allocation3 + $0x40] sm:$0xff] %v3903
        %3923 = vst [vmem:[#allocation3 + $0x48] sm:$0xff] %v3904
        %3924 = vst [vmem:[#allocation3 + $0x50] sm:$0xff] %v3905
        %3925 = vst [vmem:[#allocation3 + $0x58] sm:$0xff] %v3906
        %3926 = vst [vmem:[#allocation3 + $0x60] sm:$0xff] %v3907
        %3927 = vst [vmem:[#allocation3 + $0x68] sm:$0xff] %v3908
        %3928 = vst [vmem:[#allocation3 + $0x70] sm:$0xff] %v3909
        %3929 = vst [vmem:[#allocation3 + $0x78] sm:$0xff] %v3910
        %3930 = vst [vmem:[#allocation3 + $0x80] sm:$0xff] %v3911
        %3931 = vst [vmem:[#allocation3 + $0x88] sm:$0xff] %v3912
        %3932 = vst [vmem:[#allocation3 + $0x90] sm:$0xff] %v3913
        %v3933 = vld [vmem:[#allocation3] ss:$2 sm:$0xff]
        %s3934 = scalar_lea.vmem [#allocation3], 16
        %v3935 = vld [vmem:[%s3934] ss:$2 sm:$0xff]
        %s3936 = scalar_lea.vmem [#allocation3], 32
        %v3937 = vld [vmem:[%s3936] ss:$2 sm:$0xff]
        %s3938 = scalar_lea.vmem [#allocation3], 48
        %v3939 = vld [vmem:[%s3938] ss:$2 sm:$0xff]
        %s3940 = scalar_lea.vmem [#allocation3], 64
        %v3941 = vld [vmem:[%s3940] ss:$2 sm:$0xff]
        %s3942 = scalar_lea.vmem [#allocation3], 80
        %v3943 = vld [vmem:[%s3942] ss:$2 sm:$0xff]
        %s3944 = scalar_lea.vmem [#allocation3], 96
        %v3945 = vld [vmem:[%s3944] ss:$2 sm:$0xff]
        %s3946 = scalar_lea.vmem [#allocation3], 112
        %v3947 = vld [vmem:[%s3946] ss:$2 sm:$0xff]
        %s3948 = scalar_lea.vmem [#allocation3], 128
        %v3949 = vld [vmem:[%s3948] ss:$2 sm:$0xff]
        %s3950 = scalar_lea.vmem [#allocation3], 144
        %v3951 = vld [vmem:[%s3950] ss:$2 sm:$0xf]
        %s3952 = scalar_lea.vmem [#allocation3], 1
        %v3953 = vld [vmem:[%s3952] ss:$2 sm:$0xff]
        %s3954 = scalar_lea.vmem [#allocation3], 17
        %v3955 = vld [vmem:[%s3954] ss:$2 sm:$0xff]
        %s3956 = scalar_lea.vmem [#allocation3], 33
        %v3957 = vld [vmem:[%s3956] ss:$2 sm:$0xff]
        %s3958 = scalar_lea.vmem [#allocation3], 49
        %v3959 = vld [vmem:[%s3958] ss:$2 sm:$0xff]
        %s3960 = scalar_lea.vmem [#allocation3], 65
        %v3961 = vld [vmem:[%s3960] ss:$2 sm:$0xff]
        %s3962 = scalar_lea.vmem [#allocation3], 81
        %v3963 = vld [vmem:[%s3962] ss:$2 sm:$0xff]
        %s3964 = scalar_lea.vmem [#allocation3], 97
        %v3965 = vld [vmem:[%s3964] ss:$2 sm:$0xff]
        %s3966 = scalar_lea.vmem [#allocation3], 113
        %v3967 = vld [vmem:[%s3966] ss:$2 sm:$0xff]
        %s3968 = scalar_lea.vmem [#allocation3], 129
        %v3969 = vld [vmem:[%s3968] ss:$2 sm:$0xff]
        %s3970 = scalar_lea.vmem [#allocation3], 145
        %v3971 = vld [vmem:[%s3970] ss:$2 sm:$0xf]
        %v3972 = vmax.f32 %v3933, %v3953
        %v3973 = vmax.f32 %v3935, %v3955
        %v3974 = vmax.f32 %v3937, %v3957
        %v3975 = vmax.f32 %v3939, %v3959
        %v3976 = vmax.f32 %v3941, %v3961
        %v3977 = vmax.f32 %v3943, %v3963
        %v3978 = vmax.f32 %v3945, %v3965
        %v3979 = vmax.f32 %v3947, %v3967
        %v3980 = vmax.f32 %v3949, %v3969
        %v3981 = vmax.f32 %v3951, %v3971
        %3982 = vst [vmem:[#allocation4] sm:$0xff] %v3972
        %3983 = vst [vmem:[#allocation4 + $0x8] sm:$0xff] %v3973
        %3984 = vst [vmem:[#allocation4 + $0x10] sm:$0xff] %v3974
        %3985 = vst [vmem:[#allocation4 + $0x18] sm:$0xff] %v3975
        %3986 = vst [vmem:[#allocation4 + $0x20] sm:$0xff] %v3976
        %3987 = vst [vmem:[#allocation4 + $0x28] sm:$0xff] %v3977
        %3988 = vst [vmem:[#allocation4 + $0x30] sm:$0xff] %v3978
        %3989 = vst [vmem:[#allocation4 + $0x38] sm:$0xff] %v3979
        %3990 = vst [vmem:[#allocation4 + $0x40] sm:$0xff] %v3980
        %3991 = vst [vmem:[#allocation4 + $0x48] sm:$0xf] %v3981
        %v3992 = vld [vmem:[#allocation4] ss:$10 sm:$0xff]
        %v3993 = vld [vmem:[%s5] sm:$0xff]
        %v3994 = vld [vmem:[%s5 + $0x8] sm:$0xff]
        %v3995 = vld [vmem:[%s5 + $0x10] sm:$0xff]
        %v3996 = vld [vmem:[%s5 + $0x18] sm:$0xff]
        %v3997 = vld [vmem:[%s5 + $0x20] sm:$0xff]
        %v3998 = vld [vmem:[%s5 + $0x28] sm:$0xff]
        %v3999 = vld [vmem:[%s5 + $0x30] sm:$0xff]
        %v4000 = vld [vmem:[%s5 + $0x38] sm:$0xff]
        %v4001 = vld [vmem:[%s5 + $0x40] sm:$0xff]
        %v4002 = vld [vmem:[%s5 + $0x48] sm:$0xff]
        %v4003 = vld [vmem:[%s5 + $0x50] sm:$0xff]
        %v4004 = vld [vmem:[%s5 + $0x58] sm:$0xff]
        %v4005 = vld [vmem:[%s5 + $0x60] sm:$0xff]
        %v4006 = vld [vmem:[%s5 + $0x68] sm:$0xff]
        %v4007 = vld [vmem:[%s5 + $0x70] sm:$0xff]
        %v4008 = vld [vmem:[%s5 + $0x78] sm:$0xff]
        %s4009 = scalar_lea.vmem [#allocation4], 1
        %v4010 = vld [vmem:[%s4009] ss:$10 sm:$0xff]
        %s4011 = scalar_lea.vmem %s5, 128
        %v4012 = vld [vmem:[%s4011] sm:$0xff]
        %v4013 = vld [vmem:[%s4011 + $0x8] sm:$0xff]
        %v4014 = vld [vmem:[%s4011 + $0x10] sm:$0xff]
        %v4015 = vld [vmem:[%s4011 + $0x18] sm:$0xff]
        %v4016 = vld [vmem:[%s4011 + $0x20] sm:$0xff]
        %v4017 = vld [vmem:[%s4011 + $0x28] sm:$0xff]
        %v4018 = vld [vmem:[%s4011 + $0x30] sm:$0xff]
        %v4019 = vld [vmem:[%s4011 + $0x38] sm:$0xff]
        %v4020 = vld [vmem:[%s4011 + $0x40] sm:$0xff]
        %v4021 = vld [vmem:[%s4011 + $0x48] sm:$0xff]
        %v4022 = vld [vmem:[%s4011 + $0x50] sm:$0xff]
        %v4023 = vld [vmem:[%s4011 + $0x58] sm:$0xff]
        %v4024 = vld [vmem:[%s4011 + $0x60] sm:$0xff]
        %v4025 = vld [vmem:[%s4011 + $0x68] sm:$0xff]
        %v4026 = vld [vmem:[%s4011 + $0x70] sm:$0xff]
        %v4027 = vld [vmem:[%s4011 + $0x78] sm:$0xff]
        %4028 = vmatpush.msra.mxu0 %v4027
        %4029 = vmatpush.msra.mxu0 %v4026
        %4030 = vmatpush.msra.mxu0 %v4025
        %4031 = vmatpush.msra.mxu0 %v4024
        %4032 = vmatpush.msra.mxu0 %v4023
        %4033 = vmatpush.msra.mxu0 %v4022
        %4034 = vmatpush.msra.mxu0 %v4021
        %4035 = vmatpush.msra.mxu0 %v4020
        %4036 = vmatpush.msra.mxu0 %v4019
        %4037 = vmatpush.msra.mxu0 %v4018
        %4038 = vmatpush.msra.mxu0 %v4017
        %4039 = vmatpush.msra.mxu0 %v4016
        %4040 = vmatpush.msra.mxu0 %v4015
        %4041 = vmatpush.msra.mxu0 %v4014
        %4042 = vmatpush.msra.mxu0 %v4013
        %4043 = vmatpush.msra.mxu0 %v4012
        %4044 = vmatmul.f32.gmra.mxu0 %v4010
        %v4045 = vpop.f32.mrf.mxu0
        %v4046 = vadd.f32 0.0, %v4045
        %4047 = vdwg.mxu0
        %4048 = vmatpush.msra.mxu0 %v4008
        %4049 = vmatpush.msra.mxu0 %v4007
        %4050 = vmatpush.msra.mxu0 %v4006
        %4051 = vmatpush.msra.mxu0 %v4005
        %4052 = vmatpush.msra.mxu0 %v4004
        %4053 = vmatpush.msra.mxu0 %v4003
        %4054 = vmatpush.msra.mxu0 %v4002
        %4055 = vmatpush.msra.mxu0 %v4001
        %4056 = vmatpush.msra.mxu0 %v4000
        %4057 = vmatpush.msra.mxu0 %v3999
        %4058 = vmatpush.msra.mxu0 %v3998
        %4059 = vmatpush.msra.mxu0 %v3997
        %4060 = vmatpush.msra.mxu0 %v3996
        %4061 = vmatpush.msra.mxu0 %v3995
        %4062 = vmatpush.msra.mxu0 %v3994
        %4063 = vmatpush.msra.mxu0 %v3993
        %4064 = vmatmul.f32.gmra.mxu0 %v3992
        %v4065 = vpop.f32.mrf.mxu0
        %v4066 = vadd.f32 %v4046, %v4065
        %4067 = vdwg.mxu0
        %s4068 = scalar_lea.vmem [#allocation4], 2
        %v4069 = vld [vmem:[%s4068] ss:$10 sm:$0xff]
        %s4070 = scalar_lea.vmem %s5, 256
        %v4071 = vld [vmem:[%s4070] sm:$0xff]
        %v4072 = vld [vmem:[%s4070 + $0x8] sm:$0xff]
        %v4073 = vld [vmem:[%s4070 + $0x10] sm:$0xff]
        %v4074 = vld [vmem:[%s4070 + $0x18] sm:$0xff]
        %v4075 = vld [vmem:[%s4070 + $0x20] sm:$0xff]
        %v4076 = vld [vmem:[%s4070 + $0x28] sm:$0xff]
        %v4077 = vld [vmem:[%s4070 + $0x30] sm:$0xff]
        %v4078 = vld [vmem:[%s4070 + $0x38] sm:$0xff]
        %v4079 = vld [vmem:[%s4070 + $0x40] sm:$0xff]
        %v4080 = vld [vmem:[%s4070 + $0x48] sm:$0xff]
        %v4081 = vld [vmem:[%s4070 + $0x50] sm:$0xff]
        %v4082 = vld [vmem:[%s4070 + $0x58] sm:$0xff]
        %v4083 = vld [vmem:[%s4070 + $0x60] sm:$0xff]
        %v4084 = vld [vmem:[%s4070 + $0x68] sm:$0xff]
        %v4085 = vld [vmem:[%s4070 + $0x70] sm:$0xff]
        %v4086 = vld [vmem:[%s4070 + $0x78] sm:$0xff]
        %4087 = vmatpush.msra.mxu0 %v4086
        %4088 = vmatpush.msra.mxu0 %v4085
        %4089 = vmatpush.msra.mxu0 %v4084
        %4090 = vmatpush.msra.mxu0 %v4083
        %4091 = vmatpush.msra.mxu0 %v4082
        %4092 = vmatpush.msra.mxu0 %v4081
        %4093 = vmatpush.msra.mxu0 %v4080
        %4094 = vmatpush.msra.mxu0 %v4079
        %4095 = vmatpush.msra.mxu0 %v4078
        %4096 = vmatpush.msra.mxu0 %v4077
        %4097 = vmatpush.msra.mxu0 %v4076
        %4098 = vmatpush.msra.mxu0 %v4075
        %4099 = vmatpush.msra.mxu0 %v4074
        %4100 = vmatpush.msra.mxu0 %v4073
        %4101 = vmatpush.msra.mxu0 %v4072
        %4102 = vmatpush.msra.mxu0 %v4071
        %4103 = vmatmul.f32.gmra.mxu0 %v4069
        %v4104 = vpop.f32.mrf.mxu0
        %v4105 = vadd.f32 0.0, %v4104
        %4106 = vdwg.mxu0
        %v4107 = vadd.f32 %v4066, %v4105
        %s4108 = scalar_lea.vmem [#allocation4], 3
        %v4109 = vld [vmem:[%s4108] ss:$10 sm:$0xff]
        %s4110 = scalar_lea.vmem %s5, 384
        %v4111 = vld [vmem:[%s4110] sm:$0xff]
        %v4112 = vld [vmem:[%s4110 + $0x8] sm:$0xff]
        %v4113 = vld [vmem:[%s4110 + $0x10] sm:$0xff]
        %v4114 = vld [vmem:[%s4110 + $0x18] sm:$0xff]
        %v4115 = vld [vmem:[%s4110 + $0x20] sm:$0xff]
        %v4116 = vld [vmem:[%s4110 + $0x28] sm:$0xff]
        %v4117 = vld [vmem:[%s4110 + $0x30] sm:$0xff]
        %v4118 = vld [vmem:[%s4110 + $0x38] sm:$0xff]
        %v4119 = vld [vmem:[%s4110 + $0x40] sm:$0xff]
        %v4120 = vld [vmem:[%s4110 + $0x48] sm:$0xff]
        %v4121 = vld [vmem:[%s4110 + $0x50] sm:$0xff]
        %v4122 = vld [vmem:[%s4110 + $0x58] sm:$0xff]
        %v4123 = vld [vmem:[%s4110 + $0x60] sm:$0xff]
        %v4124 = vld [vmem:[%s4110 + $0x68] sm:$0xff]
        %v4125 = vld [vmem:[%s4110 + $0x70] sm:$0xff]
        %v4126 = vld [vmem:[%s4110 + $0x78] sm:$0xff]
        %4127 = vmatpush.msra.mxu0 %v4126
        %4128 = vmatpush.msra.mxu0 %v4125
        %4129 = vmatpush.msra.mxu0 %v4124
        %4130 = vmatpush.msra.mxu0 %v4123
        %4131 = vmatpush.msra.mxu0 %v4122
        %4132 = vmatpush.msra.mxu0 %v4121
        %4133 = vmatpush.msra.mxu0 %v4120
        %4134 = vmatpush.msra.mxu0 %v4119
        %4135 = vmatpush.msra.mxu0 %v4118
        %4136 = vmatpush.msra.mxu0 %v4117
        %4137 = vmatpush.msra.mxu0 %v4116
        %4138 = vmatpush.msra.mxu0 %v4115
        %4139 = vmatpush.msra.mxu0 %v4114
        %4140 = vmatpush.msra.mxu0 %v4113
        %4141 = vmatpush.msra.mxu0 %v4112
        %4142 = vmatpush.msra.mxu0 %v4111
        %4143 = vmatmul.f32.gmra.mxu0 %v4109
        %v4144 = vpop.f32.mrf.mxu0
        %v4145 = vadd.f32 0.0, %v4144
        %4146 = vdwg.mxu0
        %v4147 = vadd.f32 %v4107, %v4145
        %s4148 = scalar_lea.vmem [#allocation4], 4
        %v4149 = vld [vmem:[%s4148] ss:$10 sm:$0xff]
        %s4150 = scalar_lea.vmem %s5, 512
        %v4151 = vld [vmem:[%s4150] sm:$0xff]
        %v4152 = vld [vmem:[%s4150 + $0x8] sm:$0xff]
        %v4153 = vld [vmem:[%s4150 + $0x10] sm:$0xff]
        %v4154 = vld [vmem:[%s4150 + $0x18] sm:$0xff]
        %v4155 = vld [vmem:[%s4150 + $0x20] sm:$0xff]
        %v4156 = vld [vmem:[%s4150 + $0x28] sm:$0xff]
        %v4157 = vld [vmem:[%s4150 + $0x30] sm:$0xff]
        %v4158 = vld [vmem:[%s4150 + $0x38] sm:$0xff]
        %v4159 = vld [vmem:[%s4150 + $0x40] sm:$0xff]
        %v4160 = vld [vmem:[%s4150 + $0x48] sm:$0xff]
        %v4161 = vld [vmem:[%s4150 + $0x50] sm:$0xff]
        %v4162 = vld [vmem:[%s4150 + $0x58] sm:$0xff]
        %v4163 = vld [vmem:[%s4150 + $0x60] sm:$0xff]
        %v4164 = vld [vmem:[%s4150 + $0x68] sm:$0xff]
        %v4165 = vld [vmem:[%s4150 + $0x70] sm:$0xff]
        %v4166 = vld [vmem:[%s4150 + $0x78] sm:$0xff]
        %4167 = vmatpush.msra.mxu0 %v4166
        %4168 = vmatpush.msra.mxu0 %v4165
        %4169 = vmatpush.msra.mxu0 %v4164
        %4170 = vmatpush.msra.mxu0 %v4163
        %4171 = vmatpush.msra.mxu0 %v4162
        %4172 = vmatpush.msra.mxu0 %v4161
        %4173 = vmatpush.msra.mxu0 %v4160
        %4174 = vmatpush.msra.mxu0 %v4159
        %4175 = vmatpush.msra.mxu0 %v4158
        %4176 = vmatpush.msra.mxu0 %v4157
        %4177 = vmatpush.msra.mxu0 %v4156
        %4178 = vmatpush.msra.mxu0 %v4155
        %4179 = vmatpush.msra.mxu0 %v4154
        %4180 = vmatpush.msra.mxu0 %v4153
        %4181 = vmatpush.msra.mxu0 %v4152
        %4182 = vmatpush.msra.mxu0 %v4151
        %4183 = vmatmul.f32.gmra.mxu0 %v4149
        %v4184 = vpop.f32.mrf.mxu0
        %v4185 = vadd.f32 0.0, %v4184
        %4186 = vdwg.mxu0
        %v4187 = vadd.f32 %v4147, %v4185
        %v4188 = vld [vmem:[%s6] sm:$0x1]
        %v4190 = vperm.slane %v4188, 0
        %v4192 = vadd.f32 %v4187, %v4190
        %v4193 = vmax.f32 %v4192, 0.0
        %v4194 = vld [vmem:[%s7] sm:$0xff]
        %v4195 = vld [vmem:[%s7 + $0x8] sm:$0xff]
        %v4196 = vld [vmem:[%s7 + $0x10] sm:$0xff]
        %v4197 = vld [vmem:[%s7 + $0x18] sm:$0xff]
        %v4198 = vld [vmem:[%s7 + $0x20] sm:$0xff]
        %v4199 = vld [vmem:[%s7 + $0x28] sm:$0xff]
        %v4200 = vld [vmem:[%s7 + $0x30] sm:$0xff]
        %v4201 = vld [vmem:[%s7 + $0x38] sm:$0xff]
        %v4202 = vld [vmem:[%s7 + $0x40] sm:$0xff]
        %v4203 = vld [vmem:[%s7 + $0x48] sm:$0xff]
        %v4204 = vld [vmem:[%s7 + $0x50] sm:$0xff]
        %v4205 = vld [vmem:[%s7 + $0x58] sm:$0xff]
        %v4206 = vld [vmem:[%s7 + $0x60] sm:$0xff]
        %v4207 = vld [vmem:[%s7 + $0x68] sm:$0xff]
        %v4208 = vld [vmem:[%s7 + $0x70] sm:$0xff]
        %v4209 = vld [vmem:[%s7 + $0x78] sm:$0xff]
        %v4210 = vld [vmem:[%s8] sm:$0x1]
        %v4212 = vperm.slane %v4210, 0
        %4214 = vmatpush.msra.mxu0 %v4209
        %4215 = vmatpush.msra.mxu0 %v4208
        %4216 = vmatpush.msra.mxu0 %v4207
        %4217 = vmatpush.msra.mxu0 %v4206
        %4218 = vmatpush.msra.mxu0 %v4205
        %4219 = vmatpush.msra.mxu0 %v4204
        %4220 = vmatpush.msra.mxu0 %v4203
        %4221 = vmatpush.msra.mxu0 %v4202
        %4222 = vmatpush.msra.mxu0 %v4201
        %4223 = vmatpush.msra.mxu0 %v4200
        %4224 = vmatpush.msra.mxu0 %v4199
        %4225 = vmatpush.msra.mxu0 %v4198
        %4226 = vmatpush.msra.mxu0 %v4197
        %4227 = vmatpush.msra.mxu0 %v4196
        %4228 = vmatpush.msra.mxu0 %v4195
        %4229 = vmatpush.msra.mxu0 %v4194
        %4230 = vmatmul.f32.gmra.mxu0 %v4193
        %v4231 = vpop.f32.mrf.mxu0
        %v4232 = vadd.f32 %v4212, %v4231
        %4233 = vdwg.mxu0
        %v4234 = vmax.f32 %v4232, 0.0
        %v4235 = vld [vmem:[%s9] sm:$0xff]
        %v4236 = vld [vmem:[%s9 + $0x8] sm:$0xff]
        %v4237 = vld [vmem:[%s9 + $0x10] sm:$0xff]
        %v4238 = vld [vmem:[%s9 + $0x18] sm:$0xff]
        %v4239 = vld [vmem:[%s9 + $0x20] sm:$0xff]
        %v4240 = vld [vmem:[%s9 + $0x28] sm:$0xff]
        %v4241 = vld [vmem:[%s9 + $0x30] sm:$0xff]
        %v4242 = vld [vmem:[%s9 + $0x38] sm:$0xff]
        %v4243 = vld [vmem:[%s9 + $0x40] sm:$0xff]
        %v4244 = vld [vmem:[%s9 + $0x48] sm:$0xff]
        %v4245 = vld [vmem:[%s9 + $0x50] sm:$0xff]
        %v4246 = vld [vmem:[%s9 + $0x58] sm:$0xff]
        %v4247 = vld [vmem:[%s9 + $0x60] sm:$0xff]
        %v4248 = vld [vmem:[%s9 + $0x68] sm:$0xff]
        %v4249 = vld [vmem:[%s9 + $0x70] sm:$0xff]
        %v4250 = vld [vmem:[%s9 + $0x78] sm:$0xff]
        %v4251 = vld [vmem:[%s10] sm:$0x1]
        %v4253 = vperm.slane %v4251, 0
        %4255 = vmatpush.msra.mxu0 %v4250
        %4256 = vmatpush.msra.mxu0 %v4249
        %4257 = vmatpush.msra.mxu0 %v4248
        %4258 = vmatpush.msra.mxu0 %v4247
        %4259 = vmatpush.msra.mxu0 %v4246
        %4260 = vmatpush.msra.mxu0 %v4245
        %4261 = vmatpush.msra.mxu0 %v4244
        %4262 = vmatpush.msra.mxu0 %v4243
        %4263 = vmatpush.msra.mxu0 %v4242
        %4264 = vmatpush.msra.mxu0 %v4241
        %4265 = vmatpush.msra.mxu0 %v4240
        %4266 = vmatpush.msra.mxu0 %v4239
        %4267 = vmatpush.msra.mxu0 %v4238
        %4268 = vmatpush.msra.mxu0 %v4237
        %4269 = vmatpush.msra.mxu0 %v4236
        %4270 = vmatpush.msra.mxu0 %v4235
        %4271 = vmatmul.f32.gmra.mxu0 %v4234
        %v4272 = vpop.f32.mrf.mxu0
        %v4273 = vadd.f32 %v4253, %v4272
        %4274 = vdwg.mxu0
        %4275 = vst [vmem:[%s380] sm:$0xff] %v4273
        %s4276 = sand.u32 %s269, 1
        %s4277 = scalar_lea.sflag [#allocation6], %s4276
        %s4278 = sand.u32 %s269, 1
        %s4279 = smul.addr %s4278, 8
        %s4280 = scalar_lea.vmem [#allocation5], %s4279
        // Predicated region
        $region65: #{net_forward.1} parent=63 // pred_check
          %p4281 = pneg %p279
        $region66: #{net_forward.1} parent=63 // pred_check_branch
          %4283 = sbr.rel (%p4281) target = $region68
        $region67: #{net_forward.1} parent=63 // pred_region
          %4285 = vsyncadd %s4277, 0
          %s4286 = smul.addr %s25, 8
          %s4287 = scalar_lea.hbm %s11, %s4286
          %s4289 = sshll.u32 %s4280, 4
          %s4290 = int_to_ptr.vmem [resolvable:$true] %s4289
          %s4291 = sshll.u32 %s4287, 4
          %s4292 = int_to_ptr.hbm [resolvable:$true] %s4291
          %4294 = dma.vmem_to_hbm [thread:$0]  %s4290, 128, %s4292, %s4277
        $region68: #{net_forward.1} parent=63 // pred_fallthru
          _
      $region64: #{net_forward.1} parent=5 // pred_fallthru
        _
      %p4295 = scmp.le.s32.totalorder 2, %s20
      // Predicated region
      $region69: #{net_forward.1} parent=5 // pred_check
        %p4296 = pneg %p4295
      $region70: #{net_forward.1} parent=5 // pred_check_branch
        %4298 = sbr.rel (%p4296) target = $region72
      $region71: #{net_forward.1} parent=5 // pred_region
        %s4299 = ssub.s32 %s20, 2
        // Predicated region
        $region73: #{net_forward.1} parent=71 // pred_check
          %p4300 = pneg %p285
        $region74: #{net_forward.1} parent=71 // pred_check_branch
          %4302 = sbr.rel (%p4300) target = $region76
        $region75: #{net_forward.1} parent=71 // pred_region
          %s4303 = sand.u32 %s270, 1
          %s4304 = scalar_lea.sflag [#allocation6], %s4303
          %s4305 = sand.u32 %s270, 1
          %s4306 = smul.addr %s4305, 8
          %s4307 = scalar_lea.vmem [#allocation5], %s4306
          %4309 = dma.done %s4304, 128
        $region76: #{net_forward.1} parent=71 // pred_fallthru
          _
      $region72: #{net_forward.1} parent=5 // pred_fallthru
        _
    $region6: #{net_forward.1} parent=1 // loop_footer
      %s24 = sadd.s32 1, %s20
    $region7: #{net_forward.1} parent=1 // loop_footer_branch
      %19 = sbr.rel target = $region3
    $region8: #{net_forward.1} parent=1 // loop_exit
      _
    %4310 = vsyncpa [#allocation6], 1
    %s4311 = scalar_lea.sflag [#allocation6], 1
    %4312 = vsyncpa %s4311, 1

</llo_original>
